<compile_context>
chip_gen: v7x
topology: tpu7x:2x2x1
jax: 0.10.0
libtpu: 0.0.40
codegen_flags: <defaults>
</compile_context>

<pallas_src>
import functools
import math

import jax
import jax.numpy as jnp
from jax import lax
from jax.experimental import pallas as pl
from jax.experimental.pallas import tpu as pltpu

C_PAD = 128          # channel padding -> lane-dense blocks everywhere
_GRAN = 256          # node-axis padding granularity for multi-block graphs
_CONV_TILE = 512     # max node tile for the N^2*C kernels
_ADJ_TILE = 1024     # max node tile for the N^3 kernel (fits v7x 64 MiB VMEM)


@functools.lru_cache(maxsize=None)
def _vmem_limit_bytes():
    """Generation-aware scoped-VMEM budget (96 MiB on 128-MiB chips, 48 MiB on v7x)."""
    try:
        cap = int(pltpu.get_tpu_info().vmem_capacity_bytes)
    except Exception:          # no TPU attached / interpret mode
        cap = 64 * 1024 * 1024
    return int(min(cap * 3 // 4, 96 * 1024 * 1024))


def _node_tiling(n, max_tile):
    """(padded_n, tile): one full block for small graphs, else the largest
    power-of-two tile <= max_tile that divides the 256-padded node count."""
    if n <= max_tile:
        return n, n
    n_pad = pl.cdiv(n, _GRAN) * _GRAN
    t = max_tile
    while n_pad % t:
        t //= 2
    return n_pad, t


def _pad_to(x, rows, cols):
    r, c = x.shape
    if r == rows and c == cols:
        return x
    return jnp.pad(x, ((0, rows - r), (0, cols - c)))


# ----------------------------------------------------------------------------
# Pallas kernels
# ----------------------------------------------------------------------------
def _deg_rsqrt_kernel(a_ref, d_ref):
    """d = (deg + 2)^-1/2 with deg = row sums of A (== col sums, A symmetric).

    +2 is the GCNConv(improved=True) self-loop weight, so deg > 0 always.
    """
    j = pl.program_id(1)

    @pl.when(j == 0)
    def _():
        d_ref[...] = jnp.zeros_like(d_ref)

    d_ref[...] += jnp.sum(a_ref[...], axis=1, keepdims=True)

    @pl.when(j == pl.num_programs(1) - 1)
    def _():
        d_ref[...] = lax.rsqrt(d_ref[...] + 2.0)


def _gcn_conv_kernel(*refs, apply_relu, with_score):
    """Fused GCNConv(improved=True) + optional TopKPooling score.

    out[dst] = ( d[dst] * ( sum_src A[dst,src]*z[src] + 2*d[dst]*x[dst] ) ) @ W + b
    with z = d_src * x_src precomputed (bf16) in the wrapper.
    score    = tanh( out @ w_pool^T / ||w_pool|| ) emitted as a lane-dense (1, N) row.
    Accumulation happens in the resident f32 output block (reduction axis = last
    grid axis); the A @ z matmul runs on the MXU with bf16 inputs / f32 acc.
    """
    if with_score:
        (dd_ref, a_ref, z_ref, xd_ref, w_ref, b_ref, pw_ref,
         o_ref, s_ref) = refs
    else:
        dd_ref, a_ref, z_ref, xd_ref, w_ref, b_ref, o_ref = refs

    k = pl.program_id(1)

    @pl.when(k == 0)
    def _():
        o_ref[...] = jnp.zeros_like(o_ref)

    o_ref[...] += jnp.dot(a_ref[...], z_ref[...],
                          preferred_element_type=jnp.float32)

    @pl.when(k == pl.num_programs(1) - 1)
    def _():
        dd = dd_ref[...]                                      # (tm, 1)
        h = dd * (o_ref[...] + 2.0 * dd * xd_ref[...])        # (tm, C)
        out = jnp.dot(h, w_ref[...],
                      preferred_element_type=jnp.float32) + b_ref[...]
        if apply_relu:
            out = jnp.maximum(out, 0.0)
        o_ref[...] = out
        if with_score:
            pw = pw_ref[...]                                  # (1, C)
            inv_norm = lax.rsqrt(jnp.sum(pw * pw))
            # (1, C) x (tm, C) contracted on C -> (1, tm): lane-dense score row.
            s = lax.dot_general(pw, out, (((1,), (1,)), ((), ())),
                                preferred_element_type=jnp.float32)
            s_ref[...] = jnp.tanh(s * inv_norm)


def _adj_square_kernel(a_ik_ref, a_kj_ref, a_ij_ref, o_ref):
    """GraphUNet.augment_adj:  offdiag((A+I)^2) == A @ A + 2A with diag zeroed
    (input adjacency has zero diagonal). a_ik/a_kj are bf16, a_ij/output f32."""
    i = pl.program_id(0)
    j = pl.program_id(1)
    kk = pl.program_id(2)
    last = pl.num_programs(2) - 1

    @pl.when(kk == 0)
    def _():
        o_ref[...] = 2.0 * a_ij_ref[...]

    o_ref[...] += jnp.dot(a_ik_ref[...], a_kj_ref[...],
                          preferred_element_type=jnp.float32)

    # Only diagonal blocks pay for the diagonal-zeroing select.
    @pl.when((kk == last) & (i == j))
    def _():
        rows = lax.broadcasted_iota(jnp.int32, o_ref.shape, 0)
        cols = lax.broadcasted_iota(jnp.int32, o_ref.shape, 1)
        o_ref[...] = jnp.where(rows == cols, 0.0, o_ref[...])


# ----------------------------------------------------------------------------
# pallas_call wrappers
# ----------------------------------------------------------------------------
def degree_rsqrt(a):
    n = a.shape[0]
    n_pad, t = _node_tiling(n, _CONV_TILE)
    a_p = _pad_to(a, n_pad, n_pad)
    d = pl.pallas_call(
        _deg_rsqrt_kernel,
        grid=(n_pad // t, n_pad // t),
        in_specs=[pl.BlockSpec((t, t), lambda i, j: (i, j))],
        out_specs=pl.BlockSpec((t, 1), lambda i, j: (i, 0)),
        out_shape=jax.ShapeDtypeStruct((n_pad, 1), jnp.float32),
        compiler_params=pltpu.CompilerParams(
            dimension_semantics=("parallel", "arbitrary"),
            vmem_limit_bytes=_vmem_limit_bytes()),
        cost_estimate=pl.CostEstimate(
            flops=n_pad * n_pad, transcendentals=n_pad,
            bytes_accessed=4 * n_pad * n_pad + 4 * n_pad),
    )(a_p)
    return d[:n]


def gcn_conv(a_bf, d, x, w, b, *, apply_relu, pool_w=None):
    """Fused GCNConv(improved=True) (+ optional TopK score row).

    a_bf is the shared bf16 adjacency (MXU operand); d, x stay f32.
    """
    n = a_bf.shape[0]
    c = x.shape[1]                       # == C_PAD
    n_pad, t = _node_tiling(n, _CONV_TILE)
    a_p = _pad_to(a_bf, n_pad, n_pad)
    x_p = _pad_to(x, n_pad, c)
    d_p = _pad_to(d, n_pad, 1)
    z_p = (x_p * d_p).astype(jnp.bfloat16)     # source scaling hoisted (reused per i)
    with_score = pool_w is not None

    in_specs = [
        pl.BlockSpec((t, 1), lambda i, k: (i, 0)),   # d_dst  (f32)
        pl.BlockSpec((t, t), lambda i, k: (i, k)),   # A      (bf16)
        pl.BlockSpec((t, c), lambda i, k: (k, 0)),   # z_src  (bf16)
        pl.BlockSpec((t, c), lambda i, k: (i, 0)),   # x_dst  (f32)
        pl.BlockSpec((c, c), lambda i, k: (0, 0)),   # W
        pl.BlockSpec((1, c), lambda i, k: (0, 0)),   # bias
    ]
    args = [d_p, a_p, z_p, x_p, w, b]
    out_shape = [jax.ShapeDtypeStruct((n_pad, c), jnp.float32)]
    out_specs = [pl.BlockSpec((t, c), lambda i, k: (i, 0))]
    if with_score:
        in_specs.append(pl.BlockSpec((1, c), lambda i, k: (0, 0)))
        args.append(pool_w)
        out_shape.append(jax.ShapeDtypeStruct((1, n_pad), jnp.float32))
        out_specs.append(pl.BlockSpec((1, t), lambda i, k: (0, i)))

    kernel = functools.partial(_gcn_conv_kernel, apply_relu=apply_relu,
                               with_score=with_score)
    res = pl.pallas_call(
        kernel,
        grid=(n_pad // t, n_pad // t),
        in_specs=in_specs,
        out_specs=tuple(out_specs),
        out_shape=tuple(out_shape),
        compiler_params=pltpu.CompilerParams(
            dimension_semantics=("parallel", "arbitrary"),
            vmem_limit_bytes=_vmem_limit_bytes()),
        cost_estimate=pl.CostEstimate(
            flops=2 * n_pad * n_pad * c + 2 * n_pad * c * c,
            transcendentals=n_pad if with_score else 0,
            bytes_accessed=(2 * n_pad * n_pad                       # bf16 A
                            + 2 * (n_pad // t) * n_pad * c          # bf16 z re-reads
                            + 4 * 2 * n_pad * c                     # x_dst + out
                            + 4 * c * c)),
    )(*args)

    if with_score:
        out, score = res
        return out[:n], score[:, :n]
    (out,) = res
    return out[:n]


def adj_square(a_bf, a):
    """augment_adj: offdiag(A@A + 2A). a_bf (bf16) feeds the MXU, a (f32) the +2A init."""
    n = a.shape[0]
    n_pad, t = _node_tiling(n, _ADJ_TILE)
    a_bf_p = _pad_to(a_bf, n_pad, n_pad)
    a_p = _pad_to(a, n_pad, n_pad)
    nb = n_pad // t
    out = pl.pallas_call(
        _adj_square_kernel,
        grid=(nb, nb, nb),
        in_specs=[pl.BlockSpec((t, t), lambda i, j, k: (i, k)),   # bf16
                  pl.BlockSpec((t, t), lambda i, j, k: (k, j)),   # bf16
                  pl.BlockSpec((t, t), lambda i, j, k: (i, j))],  # f32 (+2A init)
        out_specs=pl.BlockSpec((t, t), lambda i, j, k: (i, j)),
        out_shape=jax.ShapeDtypeStruct((n_pad, n_pad), jnp.float32),
        compiler_params=pltpu.CompilerParams(
            dimension_semantics=("parallel", "parallel", "arbitrary"),
            vmem_limit_bytes=_vmem_limit_bytes()),
        cost_estimate=pl.CostEstimate(
            flops=2 * n_pad ** 3 + 2 * n_pad * n_pad,
            transcendentals=0,
            bytes_accessed=4 * n_pad ** 3 // t + 8 * n_pad * n_pad),
    )(a_bf_p, a_bf_p, a_p)
    return out[:n, :n]


# ----------------------------------------------------------------------------
# JAX glue: TopK pooling (data-dependent selection), GraphUNet orchestration
# ----------------------------------------------------------------------------
def topk_pool(x, a, score_row, ratio):
    n = x.shape[0]
    k = int(math.ceil(ratio * n))
    score = score_row[0]                              # (n,) — already tanh'd in-kernel
    top_scores, perm = lax.top_k(score, k)            # replaces full argsort
    x_p = x[perm] * top_scores[:, None]               # gate kept nodes by their score
    a_p = a[perm[:, None], perm[None, :]]             # single combined gather
    return x_p, a_p, perm


@functools.partial(jax.jit, static_argnames=("depth", "ratio", "out_channels"))
def gcn_unet2_forward(params, x, a, depth, ratio, out_channels):
    x = _pad_to(x, x.shape[0], C_PAD)

    # ---- down path ----
    d = degree_rsqrt(a)
    a_bf = a.astype(jnp.bfloat16)                      # shared MXU operand per level
    x, score = gcn_conv(a_bf, d, x, params["down_w"][0], params["down_b"][0],
                        apply_relu=True, pool_w=params["pool_w"][0])
    xs, adjs_bf, degs, perms = [x], [a_bf], [d], []
    for i in range(1, depth + 1):
        a = adj_square(a_bf, a)                        # augment_adj: offdiag((A+I)^2)
        x, a, perm = topk_pool(x, a, score, ratio)
        a_bf = a.astype(jnp.bfloat16)
        d = degree_rsqrt(a)
        if i < depth:
            x, score = gcn_conv(a_bf, d, x, params["down_w"][i], params["down_b"][i],
                                apply_relu=True, pool_w=params["pool_w"][i])
            xs.append(x)
            adjs_bf.append(a_bf)
            degs.append(d)
        else:
            x = gcn_conv(a_bf, d, x, params["down_w"][i], params["down_b"][i],
                         apply_relu=True)
        perms.append(perm)

    # ---- up path (sum_res=True) ----
    for i in range(depth):
        j = depth - 1 - i
        res, a_bf_j, d_j, perm = xs[j], adjs_bf[j], degs[j], perms[j]
        up = jnp.zeros_like(res).at[perm].set(x)
        x = res + up
        x = gcn_conv(a_bf_j, d_j, x, params["up_w"][i], params["up_b"][i],
                     apply_relu=(i < depth - 1))

    # dropout(p=0.2) in eval mode => identity; strip channel padding.
    return x[:, :out_channels]


# ----------------------------------------------------------------------------
# deterministic parameter init (shapes mirror GraphUNet.__init__, padded to 128)
# ----------------------------------------------------------------------------
def _glorot(key, c_in, c_out):
    lim = math.sqrt(6.0 / (c_in + c_out))
    return jax.random.uniform(key, (c_in, c_out), jnp.float32, -lim, lim)


def init_params(key, in_ch, hidden, out_ch, depth):
    n_keys = (depth + 1) + depth + depth
    keys = list(jax.random.split(key, n_keys))

    down_w, down_b = [], []
    down_w.append(_pad_to(_glorot(keys.pop(), in_ch, hidden), C_PAD, C_PAD))
    down_b.append(jnp.zeros((1, C_PAD), jnp.float32))
    for _ in range(depth):
        down_w.append(_pad_to(_glorot(keys.pop(), hidden, hidden), C_PAD, C_PAD))
        down_b.append(jnp.zeros((1, C_PAD), jnp.float32))

    pool_w = []
    for _ in range(depth):
        lim = 1.0 / math.sqrt(hidden)
        pw = jax.random.uniform(keys.pop(), (1, hidden), jnp.float32, -lim, lim)
        pool_w.append(_pad_to(pw, 1, C_PAD))

    up_w, up_b = [], []
    for _ in range(depth - 1):
        up_w.append(_pad_to(_glorot(keys.pop(), hidden, hidden), C_PAD, C_PAD))
        up_b.append(jnp.zeros((1, C_PAD), jnp.float32))
    up_w.append(_pad_to(_glorot(keys.pop(), hidden, out_ch), C_PAD, C_PAD))
    up_b.append(jnp.zeros((1, C_PAD), jnp.float32))

    return {"down_w": down_w, "down_b": down_b, "pool_w": pool_w,
            "up_w": up_w, "up_b": up_b}


# ----------------------------------------------------------------------------
if __name__ == "__main__":
    N, IN_CH, HIDDEN, OUT_CH, DEPTH, RATIO = 16, 4, 32, 4, 3, 0.5

    key = jax.random.PRNGKey(0)
    k_x, k_a, k_p = jax.random.split(key, 3)

    # node features
    x = jax.random.normal(k_x, (N, IN_CH), jnp.float32)
    # undirected 0/1 adjacency, no self-loops (edge_weight = ones)
    upper = jnp.triu((jax.random.uniform(k_a, (N, N)) < 0.3).astype(jnp.float32), k=1)
    a = upper + upper.T

    params = init_params(k_p, IN_CH, HIDDEN, OUT_CH, DEPTH)

    out = gcn_unet2_forward(params, x, a, depth=DEPTH, ratio=RATIO,
                            out_channels=OUT_CH)
    out = jax.block_until_ready(out)

    assert out.shape == (N, OUT_CH), out.shape
    assert jnp.all(jnp.isfinite(out))
    print("KERNEL_OK")
</pallas_src>

<mosaic_0001>
module attributes {stable_mosaic.version = 11 : i64} {
  func.func @_deg_rsqrt_kernel(%arg0: i32, %arg1: i32, %arg2: memref<16x16xf32, #tpu.memory_space<vmem>>, %arg3: memref<16x1xf32, #tpu.memory_space<vmem>>) attributes {dimension_semantics = [#tpu.dimension_semantics<parallel>, #tpu.dimension_semantics<arbitrary>], iteration_bounds = array<i64: 1, 1>, scalar_prefetch = 0 : i64, scratch_operands = 0 : i64, tpu.core_type = #tpu.core_type<tc>, window_params = [{transform_indices = @transform_0, window_bounds = array<i64: 16, 16>}, {transform_indices = @transform_1, window_bounds = array<i64: 16, 1>}]} {
    %c0_i32 = arith.constant 0 : i32
    %0 = arith.cmpi eq, %arg1, %c0_i32 : i32
    %1 = arith.extui %0 : i1 to i32
    %c0_i32_0 = arith.constant 0 : i32
    %2 = arith.cmpi ne, %1, %c0_i32_0 : i32
    scf.if %2 {
      %cst_8 = arith.constant 0.000000e+00 : f32
      %12 = vector.broadcast %cst_8 : f32 to vector<16x1xf32>
      %c0_9 = arith.constant 0 : index
      %c0_10 = arith.constant 0 : index
      %13 = vector.load %arg3[%c0_9, %c0_10] : memref<16x1xf32, #tpu.memory_space<vmem>>, vector<16x1xf32>
      tpu.vector_store %arg3[%c0_9, %c0_10], %12 {strides = array<i32>} : memref<16x1xf32, #tpu.memory_space<vmem>>, vector<16x1xf32>,
    } else {
    }
    %c0 = arith.constant 0 : index
    %c0_1 = arith.constant 0 : index
    %3 = vector.load %arg3[%c0, %c0_1] : memref<16x1xf32, #tpu.memory_space<vmem>>, vector<16x1xf32>
    %c0_2 = arith.constant 0 : index
    %c0_3 = arith.constant 0 : index
    %4 = vector.load %arg2[%c0_2, %c0_3] : memref<16x16xf32, #tpu.memory_space<vmem>>, vector<16x16xf32>
    %cst = arith.constant dense<0.000000e+00> : vector<16xf32>
    %5 = vector.multi_reduction <add>, %4, %cst [1] : vector<16x16xf32> to vector<16xf32>
    %6 = vector.shape_cast %5 : vector<16xf32> to vector<16x1xf32>
    %7 = arith.addf %3, %6 : vector<16x1xf32>
    %c0_4 = arith.constant 0 : index
    %c0_5 = arith.constant 0 : index
    %8 = vector.load %arg3[%c0_4, %c0_5] : memref<16x1xf32, #tpu.memory_space<vmem>>, vector<16x1xf32>
    tpu.vector_store %arg3[%c0_4, %c0_5], %7 {strides = array<i32>} : memref<16x1xf32, #tpu.memory_space<vmem>>, vector<16x1xf32>,
    %c0_i32_6 = arith.constant 0 : i32
    %9 = arith.cmpi eq, %arg1, %c0_i32_6 : i32
    %10 = arith.extui %9 : i1 to i32
    %c0_i32_7 = arith.constant 0 : i32
    %11 = arith.cmpi ne, %10, %c0_i32_7 : i32
    scf.if %11 {
      %c0_8 = arith.constant 0 : index
      %c0_9 = arith.constant 0 : index
      %12 = vector.load %arg3[%c0_8, %c0_9] : memref<16x1xf32, #tpu.memory_space<vmem>>, vector<16x1xf32>
      %cst_10 = arith.constant 2.000000e+00 : f32
      %13 = vector.broadcast %cst_10 : f32 to vector<16x1xf32>
      %14 = arith.addf %12, %13 : vector<16x1xf32>
      %15 = math.rsqrt %14 : vector<16x1xf32>
      %c0_11 = arith.constant 0 : index
      %c0_12 = arith.constant 0 : index
      %16 = vector.load %arg3[%c0_11, %c0_12] : memref<16x1xf32, #tpu.memory_space<vmem>>, vector<16x1xf32>
      tpu.vector_store %arg3[%c0_11, %c0_12], %15 {strides = array<i32>} : memref<16x1xf32, #tpu.memory_space<vmem>>, vector<16x1xf32>,
    } else {
    }
    return
  }
  func.func @transform_0(%arg0: i32, %arg1: i32) -> (i32, i32) {
    %c0_i32 = arith.constant 0 : i32
    return %arg0, %arg1 : i32, i32
  }
  func.func @transform_1(%arg0: i32, %arg1: i32) -> (i32, i32) {
    %c0_i32 = arith.constant 0 : i32
    %c0_i32_0 = arith.constant 0 : i32
    return %arg0, %c0_i32 : i32, i32
  }
}

module attributes {stable_mosaic.version = 11 : i64} {
  func.func @_adj_square_kernel(%arg0: i32, %arg1: i32, %arg2: i32, %arg3: memref<16x16xbf16, #tpu.memory_space<vmem>>, %arg4: memref<16x16xbf16, #tpu.memory_space<vmem>>, %arg5: memref<16x16xf32, #tpu.memory_space<vmem>>, %arg6: memref<16x16xf32, #tpu.memory_space<vmem>>) attributes {dimension_semantics = [#tpu.dimension_semantics<parallel>, #tpu.dimension_semantics<parallel>, #tpu.dimension_semantics<arbitrary>], iteration_bounds = array<i64: 1, 1, 1>, scalar_prefetch = 0 : i64, scratch_operands = 0 : i64, tpu.core_type = #tpu.core_type<tc>, window_params = [{transform_indices = @transform_0, window_bounds = array<i64: 16, 16>}, {transform_indices = @transform_1, window_bounds = array<i64: 16, 16>}, {transform_indices = @transform_2, window_bounds = array<i64: 16, 16>}, {transform_indices = @transform_3, window_bounds = array<i64: 16, 16>}]} {
    %c0_i32 = arith.constant 0 : i32
    %0 = arith.cmpi eq, %arg2, %c0_i32 : i32
    %1 = arith.extui %0 : i1 to i32
    %c0_i32_0 = arith.constant 0 : i32
    %2 = arith.cmpi ne, %1, %c0_i32_0 : i32
    scf.if %2 {
      %c0_10 = arith.constant 0 : index
      %c0_11 = arith.constant 0 : index
      %14 = vector.load %arg5[%c0_10, %c0_11] : memref<16x16xf32, #tpu.memory_space<vmem>>, vector<16x16xf32>
      %cst_12 = arith.constant 2.000000e+00 : f32
      %15 = vector.broadcast %cst_12 : f32 to vector<16x16xf32>
      %16 = arith.mulf %15, %14 : vector<16x16xf32>
      %c0_13 = arith.constant 0 : index
      %c0_14 = arith.constant 0 : index
      %17 = vector.load %arg6[%c0_13, %c0_14] : memref<16x16xf32, #tpu.memory_space<vmem>>, vector<16x16xf32>
      tpu.vector_store %arg6[%c0_13, %c0_14], %16 {strides = array<i32>} : memref<16x16xf32, #tpu.memory_space<vmem>>, vector<16x16xf32>,
    } else {
    }
    %c0 = arith.constant 0 : index
    %c0_1 = arith.constant 0 : index
    %3 = vector.load %arg6[%c0, %c0_1] : memref<16x16xf32, #tpu.memory_space<vmem>>, vector<16x16xf32>
    %c0_2 = arith.constant 0 : index
    %c0_3 = arith.constant 0 : index
    %4 = vector.load %arg3[%c0_2, %c0_3] : memref<16x16xbf16, #tpu.memory_space<vmem>>, vector<16x16xbf16>
    %c0_4 = arith.constant 0 : index
    %c0_5 = arith.constant 0 : index
    %5 = vector.load %arg4[%c0_4, %c0_5] : memref<16x16xbf16, #tpu.memory_space<vmem>>, vector<16x16xbf16>
    %cst = arith.constant dense<0.000000e+00> : vector<16x16xf32>
    %6 = tpu.matmul %4, %5, %cst {dimension_numbers = #tpu.dot_dimension_numbers<[1], [0], [0], [1], [0, 0, 1, 1], [], []>} : vector<16x16xbf16>, vector<16x16xbf16>, vector<16x16xf32> -> vector<16x16xf32>
    %7 = arith.addf %3, %6 : vector<16x16xf32>
    %c0_6 = arith.constant 0 : index
    %c0_7 = arith.constant 0 : index
    %8 = vector.load %arg6[%c0_6, %c0_7] : memref<16x16xf32, #tpu.memory_space<vmem>>, vector<16x16xf32>
    tpu.vector_store %arg6[%c0_6, %c0_7], %7 {strides = array<i32>} : memref<16x16xf32, #tpu.memory_space<vmem>>, vector<16x16xf32>,
    %c0_i32_8 = arith.constant 0 : i32
    %9 = arith.cmpi eq, %arg2, %c0_i32_8 : i32
    %10 = arith.cmpi eq, %arg0, %arg1 : i32
    %11 = arith.andi %9, %10 : i1
    %12 = arith.extui %11 : i1 to i32
    %c0_i32_9 = arith.constant 0 : i32
    %13 = arith.cmpi ne, %12, %c0_i32_9 : i32
    scf.if %13 {
      %14 = tpu.iota {dimensions = array<i32: 0>} : vector<16x16xi32>
      %15 = tpu.iota {dimensions = array<i32: 1>} : vector<16x16xi32>
      %16 = arith.cmpi eq, %14, %15 : vector<16x16xi32>
      %c0_10 = arith.constant 0 : index
      %c0_11 = arith.constant 0 : index
      %17 = vector.load %arg6[%c0_10, %c0_11] : memref<16x16xf32, #tpu.memory_space<vmem>>, vector<16x16xf32>
      %cst_12 = arith.constant 0.000000e+00 : f32
      %18 = vector.broadcast %cst_12 : f32 to vector<16x16xf32>
      %19 = arith.select %16, %18, %17 : vector<16x16xi1>, vector<16x16xf32>
      %c0_13 = arith.constant 0 : index
      %c0_14 = arith.constant 0 : index
      %20 = vector.load %arg6[%c0_13, %c0_14] : memref<16x16xf32, #tpu.memory_space<vmem>>, vector<16x16xf32>
      tpu.vector_store %arg6[%c0_13, %c0_14], %19 {strides = array<i32>} : memref<16x16xf32, #tpu.memory_space<vmem>>, vector<16x16xf32>,
    } else {
    }
    return
  }
  func.func @transform_0(%arg0: i32, %arg1: i32, %arg2: i32) -> (i32, i32) {
    %c0_i32 = arith.constant 0 : i32
    return %arg0, %arg2 : i32, i32
  }
  func.func @transform_1(%arg0: i32, %arg1: i32, %arg2: i32) -> (i32, i32) {
    %c0_i32 = arith.constant 0 : i32
    return %arg2, %arg1 : i32, i32
  }
  func.func @transform_2(%arg0: i32, %arg1: i32, %arg2: i32) -> (i32, i32) {
    %c0_i32 = arith.constant 0 : i32
    return %arg0, %arg1 : i32, i32
  }
  func.func @transform_3(%arg0: i32, %arg1: i32, %arg2: i32) -> (i32, i32) {
    %c0_i32 = arith.constant 0 : i32
    return %arg0, %arg1 : i32, i32
  }
}

module attributes {stable_mosaic.version = 11 : i64} {
  func.func @_gcn_conv_kernel(%arg0: i32, %arg1: i32, %arg2: memref<16x1xf32, #tpu.memory_space<vmem>>, %arg3: memref<16x16xbf16, #tpu.memory_space<vmem>>, %arg4: memref<16x128xbf16, #tpu.memory_space<vmem>>, %arg5: memref<16x128xf32, #tpu.memory_space<vmem>>, %arg6: memref<128x128xf32, #tpu.memory_space<vmem>>, %arg7: memref<1x128xf32, #tpu.memory_space<vmem>>, %arg8: memref<1x128xf32, #tpu.memory_space<vmem>>, %arg9: memref<16x128xf32, #tpu.memory_space<vmem>>, %arg10: memref<1x16xf32, #tpu.memory_space<vmem>>) attributes {dimension_semantics = [#tpu.dimension_semantics<parallel>, #tpu.dimension_semantics<arbitrary>], iteration_bounds = array<i64: 1, 1>, scalar_prefetch = 0 : i64, scratch_operands = 0 : i64, tpu.core_type = #tpu.core_type<tc>, window_params = [{transform_indices = @transform_0, window_bounds = array<i64: 16, 1>}, {transform_indices = @transform_1, window_bounds = array<i64: 16, 16>}, {transform_indices = @transform_2, window_bounds = array<i64: 16, 128>}, {transform_indices = @transform_3, window_bounds = array<i64: 16, 128>}, {pipeline_mode = #tpu.pipeline_mode<synchronous>, transform_indices = @transform_4, window_bounds = array<i64: 128, 128>}, {pipeline_mode = #tpu.pipeline_mode<synchronous>, transform_indices = @transform_5, window_bounds = array<i64: 1, 128>}, {pipeline_mode = #tpu.pipeline_mode<synchronous>, transform_indices = @transform_6, window_bounds = array<i64: 1, 128>}, {transform_indices = @transform_7, window_bounds = array<i64: 16, 128>}, {transform_indices = @transform_8, window_bounds = array<i64: 1, 16>}]} {
    %c0_i32 = arith.constant 0 : i32
    %0 = arith.cmpi eq, %arg1, %c0_i32 : i32
    %1 = arith.extui %0 : i1 to i32
    %c0_i32_0 = arith.constant 0 : i32
    %2 = arith.cmpi ne, %1, %c0_i32_0 : i32
    scf.if %2 {
      %cst_10 = arith.constant 0.000000e+00 : f32
      %12 = vector.broadcast %cst_10 : f32 to vector<16x128xf32>
      %c0_11 = arith.constant 0 : index
      %c0_12 = arith.constant 0 : index
      %13 = vector.load %arg9[%c0_11, %c0_12] : memref<16x128xf32, #tpu.memory_space<vmem>>, vector<16x128xf32>
      tpu.vector_store %arg9[%c0_11, %c0_12], %12 {strides = array<i32>} : memref<16x128xf32, #tpu.memory_space<vmem>>, vector<16x128xf32>,
    } else {
    }
    %c0 = arith.constant 0 : index
    %c0_1 = arith.constant 0 : index
    %3 = vector.load %arg9[%c0, %c0_1] : memref<16x128xf32, #tpu.memory_space<vmem>>, vector<16x128xf32>
    %c0_2 = arith.constant 0 : index
    %c0_3 = arith.constant 0 : index
    %4 = vector.load %arg3[%c0_2, %c0_3] : memref<16x16xbf16, #tpu.memory_space<vmem>>, vector<16x16xbf16>
    %c0_4 = arith.constant 0 : index
    %c0_5 = arith.constant 0 : index
    %5 = vector.load %arg4[%c0_4, %c0_5] : memref<16x128xbf16, #tpu.memory_space<vmem>>, vector<16x128xbf16>
    %cst = arith.constant dense<0.000000e+00> : vector<16x128xf32>
    %6 = tpu.matmul %4, %5, %cst {dimension_numbers = #tpu.dot_dimension_numbers<[1], [0], [0], [1], [0, 0, 1, 1], [], []>} : vector<16x16xbf16>, vector<16x128xbf16>, vector<16x128xf32> -> vector<16x128xf32>
    %7 = arith.addf %3, %6 : vector<16x128xf32>
    %c0_6 = arith.constant 0 : index
    %c0_7 = arith.constant 0 : index
    %8 = vector.load %arg9[%c0_6, %c0_7] : memref<16x128xf32, #tpu.memory_space<vmem>>, vector<16x128xf32>
    tpu.vector_store %arg9[%c0_6, %c0_7], %7 {strides = array<i32>} : memref<16x128xf32, #tpu.memory_space<vmem>>, vector<16x128xf32>,
    %c0_i32_8 = arith.constant 0 : i32
    %9 = arith.cmpi eq, %arg1, %c0_i32_8 : i32
    %10 = arith.extui %9 : i1 to i32
    %c0_i32_9 = arith.constant 0 : i32
    %11 = arith.cmpi ne, %10, %c0_i32_9 : i32
    scf.if %11 {
      %c0_10 = arith.constant 0 : index
      %c0_11 = arith.constant 0 : index
      %12 = vector.load %arg2[%c0_10, %c0_11] : memref<16x1xf32, #tpu.memory_space<vmem>>, vector<16x1xf32>
      %c0_12 = arith.constant 0 : index
      %c0_13 = arith.constant 0 : index
      %13 = vector.load %arg9[%c0_12, %c0_13] : memref<16x128xf32, #tpu.memory_space<vmem>>, vector<16x128xf32>
      %cst_14 = arith.constant 2.000000e+00 : f32
      %14 = vector.broadcast %cst_14 : f32 to vector<16x1xf32>
      %15 = arith.mulf %14, %12 : vector<16x1xf32>
      %c0_15 = arith.constant 0 : index
      %c0_16 = arith.constant 0 : index
      %16 = vector.load %arg5[%c0_15, %c0_16] : memref<16x128xf32, #tpu.memory_space<vmem>>, vector<16x128xf32>
      %17 = vector.broadcast %15 : vector<16x1xf32> to vector<16x128xf32>
      %18 = arith.mulf %17, %16 : vector<16x128xf32>
      %19 = arith.addf %13, %18 : vector<16x128xf32>
      %20 = vector.broadcast %12 : vector<16x1xf32> to vector<16x128xf32>
      %21 = arith.mulf %20, %19 : vector<16x128xf32>
      %c0_17 = arith.constant 0 : index
      %c0_18 = arith.constant 0 : index
      %22 = vector.load %arg6[%c0_17, %c0_18] : memref<128x128xf32, #tpu.memory_space<vmem>>, vector<128x128xf32>
      %cst_19 = arith.constant dense<0.000000e+00> : vector<16x128xf32>
      %23 = tpu.matmul %21, %22, %cst_19 {dimension_numbers = #tpu.dot_dimension_numbers<[1], [0], [0], [1], [0, 0, 1, 1], [], []>} : vector<16x128xf32>, vector<128x128xf32>, vector<16x128xf32> -> vector<16x128xf32>
      %c0_20 = arith.constant 0 : index
      %c0_21 = arith.constant 0 : index
      %24 = vector.load %arg7[%c0_20, %c0_21] : memref<1x128xf32, #tpu.memory_space<vmem>>, vector<1x128xf32>
      %25 = vector.broadcast %24 : vector<1x128xf32> to vector<16x128xf32>
      %26 = arith.addf %23, %25 : vector<16x128xf32>
      %cst_22 = arith.constant 0.000000e+00 : f32
      %27 = vector.broadcast %cst_22 : f32 to vector<16x128xf32>
      %28 = arith.maximumf %26, %27 : vector<16x128xf32>
      %c0_23 = arith.constant 0 : index
      %c0_24 = arith.constant 0 : index
      %29 = vector.load %arg9[%c0_23, %c0_24] : memref<16x128xf32, #tpu.memory_space<vmem>>, vector<16x128xf32>
      tpu.vector_store %arg9[%c0_23, %c0_24], %28 {strides = array<i32>} : memref<16x128xf32, #tpu.memory_space<vmem>>, vector<16x128xf32>,
      %c0_25 = arith.constant 0 : index
      %c0_26 = arith.constant 0 : index
      %30 = vector.load %arg8[%c0_25, %c0_26] : memref<1x128xf32, #tpu.memory_space<vmem>>, vector<1x128xf32>
      %31 = arith.mulf %30, %30 : vector<1x128xf32>
      %32 = vector.shape_cast %31 : vector<1x128xf32> to vector<1x1x128xf32>
      %cst_27 = arith.constant dense<0.000000e+00> : vector<1xf32>
      %33 = vector.multi_reduction <add>, %32, %cst_27 [1, 2] : vector<1x1x128xf32> to vector<1xf32>
      %34 = vector.shape_cast %33 : vector<1xf32> to vector<1x1x1xf32>
      %35 = vector.extract %34[0, 0, 0] : f32 from vector<1x1x1xf32>
      %36 = math.rsqrt %35 : f32
      %cst_28 = arith.constant dense<0.000000e+00> : vector<1x16xf32>
      %37 = tpu.matmul %30, %28, %cst_28 {dimension_numbers = #tpu.dot_dimension_numbers<[1], [1], [0], [0], [0, 0, 1, 0], [], []>} : vector<1x128xf32>, vector<16x128xf32>, vector<1x16xf32> -> vector<1x16xf32>
      %38 = vector.broadcast %36 : f32 to vector<1x16xf32>
      %39 = arith.mulf %37, %38 : vector<1x16xf32>
      %40 = math.tanh %39 : vector<1x16xf32>
      %c0_29 = arith.constant 0 : index
      %c0_30 = arith.constant 0 : index
      %41 = vector.load %arg10[%c0_29, %c0_30] : memref<1x16xf32, #tpu.memory_space<vmem>>, vector<1x16xf32>
      tpu.vector_store %arg10[%c0_29, %c0_30], %40 {strides = array<i32>} : memref<1x16xf32, #tpu.memory_space<vmem>>, vector<1x16xf32>,
    } else {
    }
    return
  }
  func.func @transform_0(%arg0: i32, %arg1: i32) -> (i32, i32) {
    %c0_i32 = arith.constant 0 : i32
    %c0_i32_0 = arith.constant 0 : i32
    return %arg0, %c0_i32 : i32, i32
  }
  func.func @transform_1(%arg0: i32, %arg1: i32) -> (i32, i32) {
    %c0_i32 = arith.constant 0 : i32
    return %arg0, %arg1 : i32, i32
  }
  func.func @transform_2(%arg0: i32, %arg1: i32) -> (i32, i32) {
    %c0_i32 = arith.constant 0 : i32
    %c0_i32_0 = arith.constant 0 : i32
    return %arg1, %c0_i32 : i32, i32
  }
  func.func @transform_3(%arg0: i32, %arg1: i32) -> (i32, i32) {
    %c0_i32 = arith.constant 0 : i32
    %c0_i32_0 = arith.constant 0 : i32
    return %arg0, %c0_i32 : i32, i32
  }
  func.func @transform_4(%arg0: i32, %arg1: i32) -> (i32, i32) {
    %c0_i32 = arith.constant 0 : i32
    %c0_i32_0 = arith.constant 0 : i32
    %c0_i32_1 = arith.constant 0 : i32
    return %c0_i32, %c0_i32_0 : i32, i32
  }
  func.func @transform_5(%arg0: i32, %arg1: i32) -> (i32, i32) {
    %c0_i32 = arith.constant 0 : i32
    %c0_i32_0 = arith.constant 0 : i32
    %c0_i32_1 = arith.constant 0 : i32
    return %c0_i32, %c0_i32_0 : i32, i32
  }
  func.func @transform_6(%arg0: i32, %arg1: i32) -> (i32, i32) {
    %c0_i32 = arith.constant 0 : i32
    %c0_i32_0 = arith.constant 0 : i32
    %c0_i32_1 = arith.constant 0 : i32
    return %c0_i32, %c0_i32_0 : i32, i32
  }
  func.func @transform_7(%arg0: i32, %arg1: i32) -> (i32, i32) {
    %c0_i32 = arith.constant 0 : i32
    %c0_i32_0 = arith.constant 0 : i32
    return %arg0, %c0_i32 : i32, i32
  }
  func.func @transform_8(%arg0: i32, %arg1: i32) -> (i32, i32) {
    %c0_i32 = arith.constant 0 : i32
    %c0_i32_0 = arith.constant 0 : i32
    return %c0_i32, %arg0 : i32, i32
  }
}

module attributes {stable_mosaic.version = 11 : i64} {
  func.func @_adj_square_kernel(%arg0: i32, %arg1: i32, %arg2: i32, %arg3: memref<8x8xbf16, #tpu.memory_space<vmem>>, %arg4: memref<8x8xbf16, #tpu.memory_space<vmem>>, %arg5: memref<8x8xf32, #tpu.memory_space<vmem>>, %arg6: memref<8x8xf32, #tpu.memory_space<vmem>>) attributes {dimension_semantics = [#tpu.dimension_semantics<parallel>, #tpu.dimension_semantics<parallel>, #tpu.dimension_semantics<arbitrary>], iteration_bounds = array<i64: 1, 1, 1>, scalar_prefetch = 0 : i64, scratch_operands = 0 : i64, tpu.core_type = #tpu.core_type<tc>, window_params = [{transform_indices = @transform_0, window_bounds = array<i64: 8, 8>}, {transform_indices = @transform_1, window_bounds = array<i64: 8, 8>}, {transform_indices = @transform_2, window_bounds = array<i64: 8, 8>}, {transform_indices = @transform_3, window_bounds = array<i64: 8, 8>}]} {
    %c0_i32 = arith.constant 0 : i32
    %0 = arith.cmpi eq, %arg2, %c0_i32 : i32
    %1 = arith.extui %0 : i1 to i32
    %c0_i32_0 = arith.constant 0 : i32
    %2 = arith.cmpi ne, %1, %c0_i32_0 : i32
    scf.if %2 {
      %c0_10 = arith.constant 0 : index
      %c0_11 = arith.constant 0 : index
      %14 = vector.load %arg5[%c0_10, %c0_11] : memref<8x8xf32, #tpu.memory_space<vmem>>, vector<8x8xf32>
      %cst_12 = arith.constant 2.000000e+00 : f32
      %15 = vector.broadcast %cst_12 : f32 to vector<8x8xf32>
      %16 = arith.mulf %15, %14 : vector<8x8xf32>
      %c0_13 = arith.constant 0 : index
      %c0_14 = arith.constant 0 : index
      %17 = vector.load %arg6[%c0_13, %c0_14] : memref<8x8xf32, #tpu.memory_space<vmem>>, vector<8x8xf32>
      tpu.vector_store %arg6[%c0_13, %c0_14], %16 {strides = array<i32>} : memref<8x8xf32, #tpu.memory_space<vmem>>, vector<8x8xf32>,
    } else {
    }
    %c0 = arith.constant 0 : index
    %c0_1 = arith.constant 0 : index
    %3 = vector.load %arg6[%c0, %c0_1] : memref<8x8xf32, #tpu.memory_space<vmem>>, vector<8x8xf32>
    %c0_2 = arith.constant 0 : index
    %c0_3 = arith.constant 0 : index
    %4 = vector.load %arg3[%c0_2, %c0_3] : memref<8x8xbf16, #tpu.memory_space<vmem>>, vector<8x8xbf16>
    %c0_4 = arith.constant 0 : index
    %c0_5 = arith.constant 0 : index
    %5 = vector.load %arg4[%c0_4, %c0_5] : memref<8x8xbf16, #tpu.memory_space<vmem>>, vector<8x8xbf16>
    %cst = arith.constant dense<0.000000e+00> : vector<8x8xf32>
    %6 = tpu.matmul %4, %5, %cst {dimension_numbers = #tpu.dot_dimension_numbers<[1], [0], [0], [1], [0, 0, 1, 1], [], []>} : vector<8x8xbf16>, vector<8x8xbf16>, vector<8x8xf32> -> vector<8x8xf32>
    %7 = arith.addf %3, %6 : vector<8x8xf32>
    %c0_6 = arith.constant 0 : index
    %c0_7 = arith.constant 0 : index
    %8 = vector.load %arg6[%c0_6, %c0_7] : memref<8x8xf32, #tpu.memory_space<vmem>>, vector<8x8xf32>
    tpu.vector_store %arg6[%c0_6, %c0_7], %7 {strides = array<i32>} : memref<8x8xf32, #tpu.memory_space<vmem>>, vector<8x8xf32>,
    %c0_i32_8 = arith.constant 0 : i32
    %9 = arith.cmpi eq, %arg2, %c0_i32_8 : i32
    %10 = arith.cmpi eq, %arg0, %arg1 : i32
    %11 = arith.andi %9, %10 : i1
    %12 = arith.extui %11 : i1 to i32
    %c0_i32_9 = arith.constant 0 : i32
    %13 = arith.cmpi ne, %12, %c0_i32_9 : i32
    scf.if %13 {
      %14 = tpu.iota {dimensions = array<i32: 0>} : vector<8x8xi32>
      %15 = tpu.iota {dimensions = array<i32: 1>} : vector<8x8xi32>
      %16 = arith.cmpi eq, %14, %15 : vector<8x8xi32>
      %c0_10 = arith.constant 0 : index
      %c0_11 = arith.constant 0 : index
      %17 = vector.load %arg6[%c0_10, %c0_11] : memref<8x8xf32, #tpu.memory_space<vmem>>, vector<8x8xf32>
      %cst_12 = arith.constant 0.000000e+00 : f32
      %18 = vector.broadcast %cst_12 : f32 to vector<8x8xf32>
      %19 = arith.select %16, %18, %17 : vector<8x8xi1>, vector<8x8xf32>
      %c0_13 = arith.constant 0 : index
      %c0_14 = arith.constant 0 : index
      %20 = vector.load %arg6[%c0_13, %c0_14] : memref<8x8xf32, #tpu.memory_space<vmem>>, vector<8x8xf32>
      tpu.vector_store %arg6[%c0_13, %c0_14], %19 {strides = array<i32>} : memref<8x8xf32, #tpu.memory_space<vmem>>, vector<8x8xf32>,
    } else {
    }
    return
  }
  func.func @transform_0(%arg0: i32, %arg1: i32, %arg2: i32) -> (i32, i32) {
    %c0_i32 = arith.constant 0 : i32
    return %arg0, %arg2 : i32, i32
  }
  func.func @transform_1(%arg0: i32, %arg1: i32, %arg2: i32) -> (i32, i32) {
    %c0_i32 = arith.constant 0 : i32
    return %arg2, %arg1 : i32, i32
  }
  func.func @transform_2(%arg0: i32, %arg1: i32, %arg2: i32) -> (i32, i32) {
    %c0_i32 = arith.constant 0 : i32
    return %arg0, %arg1 : i32, i32
  }
  func.func @transform_3(%arg0: i32, %arg1: i32, %arg2: i32) -> (i32, i32) {
    %c0_i32 = arith.constant 0 : i32
    return %arg0, %arg1 : i32, i32
  }
}

module attributes {stable_mosaic.version = 11 : i64} {
  func.func @_deg_rsqrt_kernel(%arg0: i32, %arg1: i32, %arg2: memref<8x8xf32, #tpu.memory_space<vmem>>, %arg3: memref<8x1xf32, #tpu.memory_space<vmem>>) attributes {dimension_semantics = [#tpu.dimension_semantics<parallel>, #tpu.dimension_semantics<arbitrary>], iteration_bounds = array<i64: 1, 1>, scalar_prefetch = 0 : i64, scratch_operands = 0 : i64, tpu.core_type = #tpu.core_type<tc>, window_params = [{transform_indices = @transform_0, window_bounds = array<i64: 8, 8>}, {transform_indices = @transform_1, window_bounds = array<i64: 8, 1>}]} {
    %c0_i32 = arith.constant 0 : i32
    %0 = arith.cmpi eq, %arg1, %c0_i32 : i32
    %1 = arith.extui %0 : i1 to i32
    %c0_i32_0 = arith.constant 0 : i32
    %2 = arith.cmpi ne, %1, %c0_i32_0 : i32
    scf.if %2 {
      %cst_8 = arith.constant 0.000000e+00 : f32
      %12 = vector.broadcast %cst_8 : f32 to vector<8x1xf32>
      %c0_9 = arith.constant 0 : index
      %c0_10 = arith.constant 0 : index
      %13 = vector.load %arg3[%c0_9, %c0_10] : memref<8x1xf32, #tpu.memory_space<vmem>>, vector<8x1xf32>
      tpu.vector_store %arg3[%c0_9, %c0_10], %12 {strides = array<i32>} : memref<8x1xf32, #tpu.memory_space<vmem>>, vector<8x1xf32>,
    } else {
    }
    %c0 = arith.constant 0 : index
    %c0_1 = arith.constant 0 : index
    %3 = vector.load %arg3[%c0, %c0_1] : memref<8x1xf32, #tpu.memory_space<vmem>>, vector<8x1xf32>
    %c0_2 = arith.constant 0 : index
    %c0_3 = arith.constant 0 : index
    %4 = vector.load %arg2[%c0_2, %c0_3] : memref<8x8xf32, #tpu.memory_space<vmem>>, vector<8x8xf32>
    %cst = arith.constant dense<0.000000e+00> : vector<8xf32>
    %5 = vector.multi_reduction <add>, %4, %cst [1] : vector<8x8xf32> to vector<8xf32>
    %6 = vector.shape_cast %5 : vector<8xf32> to vector<8x1xf32>
    %7 = arith.addf %3, %6 : vector<8x1xf32>
    %c0_4 = arith.constant 0 : index
    %c0_5 = arith.constant 0 : index
    %8 = vector.load %arg3[%c0_4, %c0_5] : memref<8x1xf32, #tpu.memory_space<vmem>>, vector<8x1xf32>
    tpu.vector_store %arg3[%c0_4, %c0_5], %7 {strides = array<i32>} : memref<8x1xf32, #tpu.memory_space<vmem>>, vector<8x1xf32>,
    %c0_i32_6 = arith.constant 0 : i32
    %9 = arith.cmpi eq, %arg1, %c0_i32_6 : i32
    %10 = arith.extui %9 : i1 to i32
    %c0_i32_7 = arith.constant 0 : i32
    %11 = arith.cmpi ne, %10, %c0_i32_7 : i32
    scf.if %11 {
      %c0_8 = arith.constant 0 : index
      %c0_9 = arith.constant 0 : index
      %12 = vector.load %arg3[%c0_8, %c0_9] : memref<8x1xf32, #tpu.memory_space<vmem>>, vector<8x1xf32>
      %cst_10 = arith.constant 2.000000e+00 : f32
      %13 = vector.broadcast %cst_10 : f32 to vector<8x1xf32>
      %14 = arith.addf %12, %13 : vector<8x1xf32>
      %15 = math.rsqrt %14 : vector<8x1xf32>
      %c0_11 = arith.constant 0 : index
      %c0_12 = arith.constant 0 : index
      %16 = vector.load %arg3[%c0_11, %c0_12] : memref<8x1xf32, #tpu.memory_space<vmem>>, vector<8x1xf32>
      tpu.vector_store %arg3[%c0_11, %c0_12], %15 {strides = array<i32>} : memref<8x1xf32, #tpu.memory_space<vmem>>, vector<8x1xf32>,
    } else {
    }
    return
  }
  func.func @transform_0(%arg0: i32, %arg1: i32) -> (i32, i32) {
    %c0_i32 = arith.constant 0 : i32
    return %arg0, %arg1 : i32, i32
  }
  func.func @transform_1(%arg0: i32, %arg1: i32) -> (i32, i32) {
    %c0_i32 = arith.constant 0 : i32
    %c0_i32_0 = arith.constant 0 : i32
    return %arg0, %c0_i32 : i32, i32
  }
}

module attributes {stable_mosaic.version = 11 : i64} {
  func.func @_gcn_conv_kernel(%arg0: i32, %arg1: i32, %arg2: memref<8x1xf32, #tpu.memory_space<vmem>>, %arg3: memref<8x8xbf16, #tpu.memory_space<vmem>>, %arg4: memref<8x128xbf16, #tpu.memory_space<vmem>>, %arg5: memref<8x128xf32, #tpu.memory_space<vmem>>, %arg6: memref<128x128xf32, #tpu.memory_space<vmem>>, %arg7: memref<1x128xf32, #tpu.memory_space<vmem>>, %arg8: memref<1x128xf32, #tpu.memory_space<vmem>>, %arg9: memref<8x128xf32, #tpu.memory_space<vmem>>, %arg10: memref<1x8xf32, #tpu.memory_space<vmem>>) attributes {dimension_semantics = [#tpu.dimension_semantics<parallel>, #tpu.dimension_semantics<arbitrary>], iteration_bounds = array<i64: 1, 1>, scalar_prefetch = 0 : i64, scratch_operands = 0 : i64, tpu.core_type = #tpu.core_type<tc>, window_params = [{transform_indices = @transform_0, window_bounds = array<i64: 8, 1>}, {transform_indices = @transform_1, window_bounds = array<i64: 8, 8>}, {transform_indices = @transform_2, window_bounds = array<i64: 8, 128>}, {transform_indices = @transform_3, window_bounds = array<i64: 8, 128>}, {pipeline_mode = #tpu.pipeline_mode<synchronous>, transform_indices = @transform_4, window_bounds = array<i64: 128, 128>}, {pipeline_mode = #tpu.pipeline_mode<synchronous>, transform_indices = @transform_5, window_bounds = array<i64: 1, 128>}, {pipeline_mode = #tpu.pipeline_mode<synchronous>, transform_indices = @transform_6, window_bounds = array<i64: 1, 128>}, {transform_indices = @transform_7, window_bounds = array<i64: 8, 128>}, {transform_indices = @transform_8, window_bounds = array<i64: 1, 8>}]} {
    %c0_i32 = arith.constant 0 : i32
    %0 = arith.cmpi eq, %arg1, %c0_i32 : i32
    %1 = arith.extui %0 : i1 to i32
    %c0_i32_0 = arith.constant 0 : i32
    %2 = arith.cmpi ne, %1, %c0_i32_0 : i32
    scf.if %2 {
      %cst_10 = arith.constant 0.000000e+00 : f32
      %12 = vector.broadcast %cst_10 : f32 to vector<8x128xf32>
      %c0_11 = arith.constant 0 : index
      %c0_12 = arith.constant 0 : index
      %13 = vector.load %arg9[%c0_11, %c0_12] : memref<8x128xf32, #tpu.memory_space<vmem>>, vector<8x128xf32>
      tpu.vector_store %arg9[%c0_11, %c0_12], %12 {strides = array<i32>} : memref<8x128xf32, #tpu.memory_space<vmem>>, vector<8x128xf32>,
    } else {
    }
    %c0 = arith.constant 0 : index
    %c0_1 = arith.constant 0 : index
    %3 = vector.load %arg9[%c0, %c0_1] : memref<8x128xf32, #tpu.memory_space<vmem>>, vector<8x128xf32>
    %c0_2 = arith.constant 0 : index
    %c0_3 = arith.constant 0 : index
    %4 = vector.load %arg3[%c0_2, %c0_3] : memref<8x8xbf16, #tpu.memory_space<vmem>>, vector<8x8xbf16>
    %c0_4 = arith.constant 0 : index
    %c0_5 = arith.constant 0 : index
    %5 = vector.load %arg4[%c0_4, %c0_5] : memref<8x128xbf16, #tpu.memory_space<vmem>>, vector<8x128xbf16>
    %cst = arith.constant dense<0.000000e+00> : vector<8x128xf32>
    %6 = tpu.matmul %4, %5, %cst {dimension_numbers = #tpu.dot_dimension_numbers<[1], [0], [0], [1], [0, 0, 1, 1], [], []>} : vector<8x8xbf16>, vector<8x128xbf16>, vector<8x128xf32> -> vector<8x128xf32>
    %7 = arith.addf %3, %6 : vector<8x128xf32>
    %c0_6 = arith.constant 0 : index
    %c0_7 = arith.constant 0 : index
    %8 = vector.load %arg9[%c0_6, %c0_7] : memref<8x128xf32, #tpu.memory_space<vmem>>, vector<8x128xf32>
    tpu.vector_store %arg9[%c0_6, %c0_7], %7 {strides = array<i32>} : memref<8x128xf32, #tpu.memory_space<vmem>>, vector<8x128xf32>,
    %c0_i32_8 = arith.constant 0 : i32
    %9 = arith.cmpi eq, %arg1, %c0_i32_8 : i32
    %10 = arith.extui %9 : i1 to i32
    %c0_i32_9 = arith.constant 0 : i32
    %11 = arith.cmpi ne, %10, %c0_i32_9 : i32
    scf.if %11 {
      %c0_10 = arith.constant 0 : index
      %c0_11 = arith.constant 0 : index
      %12 = vector.load %arg2[%c0_10, %c0_11] : memref<8x1xf32, #tpu.memory_space<vmem>>, vector<8x1xf32>
      %c0_12 = arith.constant 0 : index
      %c0_13 = arith.constant 0 : index
      %13 = vector.load %arg9[%c0_12, %c0_13] : memref<8x128xf32, #tpu.memory_space<vmem>>, vector<8x128xf32>
      %cst_14 = arith.constant 2.000000e+00 : f32
      %14 = vector.broadcast %cst_14 : f32 to vector<8x1xf32>
      %15 = arith.mulf %14, %12 : vector<8x1xf32>
      %c0_15 = arith.constant 0 : index
      %c0_16 = arith.constant 0 : index
      %16 = vector.load %arg5[%c0_15, %c0_16] : memref<8x128xf32, #tpu.memory_space<vmem>>, vector<8x128xf32>
      %17 = vector.broadcast %15 : vector<8x1xf32> to vector<8x128xf32>
      %18 = arith.mulf %17, %16 : vector<8x128xf32>
      %19 = arith.addf %13, %18 : vector<8x128xf32>
      %20 = vector.broadcast %12 : vector<8x1xf32> to vector<8x128xf32>
      %21 = arith.mulf %20, %19 : vector<8x128xf32>
      %c0_17 = arith.constant 0 : index
      %c0_18 = arith.constant 0 : index
      %22 = vector.load %arg6[%c0_17, %c0_18] : memref<128x128xf32, #tpu.memory_space<vmem>>, vector<128x128xf32>
      %cst_19 = arith.constant dense<0.000000e+00> : vector<8x128xf32>
      %23 = tpu.matmul %21, %22, %cst_19 {dimension_numbers = #tpu.dot_dimension_numbers<[1], [0], [0], [1], [0, 0, 1, 1], [], []>} : vector<8x128xf32>, vector<128x128xf32>, vector<8x128xf32> -> vector<8x128xf32>
      %c0_20 = arith.constant 0 : index
      %c0_21 = arith.constant 0 : index
      %24 = vector.load %arg7[%c0_20, %c0_21] : memref<1x128xf32, #tpu.memory_space<vmem>>, vector<1x128xf32>
      %25 = vector.broadcast %24 : vector<1x128xf32> to vector<8x128xf32>
      %26 = arith.addf %23, %25 : vector<8x128xf32>
      %cst_22 = arith.constant 0.000000e+00 : f32
      %27 = vector.broadcast %cst_22 : f32 to vector<8x128xf32>
      %28 = arith.maximumf %26, %27 : vector<8x128xf32>
      %c0_23 = arith.constant 0 : index
      %c0_24 = arith.constant 0 : index
      %29 = vector.load %arg9[%c0_23, %c0_24] : memref<8x128xf32, #tpu.memory_space<vmem>>, vector<8x128xf32>
      tpu.vector_store %arg9[%c0_23, %c0_24], %28 {strides = array<i32>} : memref<8x128xf32, #tpu.memory_space<vmem>>, vector<8x128xf32>,
      %c0_25 = arith.constant 0 : index
      %c0_26 = arith.constant 0 : index
      %30 = vector.load %arg8[%c0_25, %c0_26] : memref<1x128xf32, #tpu.memory_space<vmem>>, vector<1x128xf32>
      %31 = arith.mulf %30, %30 : vector<1x128xf32>
      %32 = vector.shape_cast %31 : vector<1x128xf32> to vector<1x1x128xf32>
      %cst_27 = arith.constant dense<0.000000e+00> : vector<1xf32>
      %33 = vector.multi_reduction <add>, %32, %cst_27 [1, 2] : vector<1x1x128xf32> to vector<1xf32>
      %34 = vector.shape_cast %33 : vector<1xf32> to vector<1x1x1xf32>
      %35 = vector.extract %34[0, 0, 0] : f32 from vector<1x1x1xf32>
      %36 = math.rsqrt %35 : f32
      %cst_28 = arith.constant dense<0.000000e+00> : vector<1x8xf32>
      %37 = tpu.matmul %30, %28, %cst_28 {dimension_numbers = #tpu.dot_dimension_numbers<[1], [1], [0], [0], [0, 0, 1, 0], [], []>} : vector<1x128xf32>, vector<8x128xf32>, vector<1x8xf32> -> vector<1x8xf32>
      %38 = vector.broadcast %36 : f32 to vector<1x8xf32>
      %39 = arith.mulf %37, %38 : vector<1x8xf32>
      %40 = math.tanh %39 : vector<1x8xf32>
      %c0_29 = arith.constant 0 : index
      %c0_30 = arith.constant 0 : index
      %41 = vector.load %arg10[%c0_29, %c0_30] : memref<1x8xf32, #tpu.memory_space<vmem>>, vector<1x8xf32>
      tpu.vector_store %arg10[%c0_29, %c0_30], %40 {strides = array<i32>} : memref<1x8xf32, #tpu.memory_space<vmem>>, vector<1x8xf32>,
    } else {
    }
    return
  }
  func.func @transform_0(%arg0: i32, %arg1: i32) -> (i32, i32) {
    %c0_i32 = arith.constant 0 : i32
    %c0_i32_0 = arith.constant 0 : i32
    return %arg0, %c0_i32 : i32, i32
  }
  func.func @transform_1(%arg0: i32, %arg1: i32) -> (i32, i32) {
    %c0_i32 = arith.constant 0 : i32
    return %arg0, %arg1 : i32, i32
  }
  func.func @transform_2(%arg0: i32, %arg1: i32) -> (i32, i32) {
    %c0_i32 = arith.constant 0 : i32
    %c0_i32_0 = arith.constant 0 : i32
    return %arg1, %c0_i32 : i32, i32
  }
  func.func @transform_3(%arg0: i32, %arg1: i32) -> (i32, i32) {
    %c0_i32 = arith.constant 0 : i32
    %c0_i32_0 = arith.constant 0 : i32
    return %arg0, %c0_i32 : i32, i32
  }
  func.func @transform_4(%arg0: i32, %arg1: i32) -> (i32, i32) {
    %c0_i32 = arith.constant 0 : i32
    %c0_i32_0 = arith.constant 0 : i32
    %c0_i32_1 = arith.constant 0 : i32
    return %c0_i32, %c0_i32_0 : i32, i32
  }
  func.func @transform_5(%arg0: i32, %arg1: i32) -> (i32, i32) {
    %c0_i32 = arith.constant 0 : i32
    %c0_i32_0 = arith.constant 0 : i32
    %c0_i32_1 = arith.constant 0 : i32
    return %c0_i32, %c0_i32_0 : i32, i32
  }
  func.func @transform_6(%arg0: i32, %arg1: i32) -> (i32, i32) {
    %c0_i32 = arith.constant 0 : i32
    %c0_i32_0 = arith.constant 0 : i32
    %c0_i32_1 = arith.constant 0 : i32
    return %c0_i32, %c0_i32_0 : i32, i32
  }
  func.func @transform_7(%arg0: i32, %arg1: i32) -> (i32, i32) {
    %c0_i32 = arith.constant 0 : i32
    %c0_i32_0 = arith.constant 0 : i32
    return %arg0, %c0_i32 : i32, i32
  }
  func.func @transform_8(%arg0: i32, %arg1: i32) -> (i32, i32) {
    %c0_i32 = arith.constant 0 : i32
    %c0_i32_0 = arith.constant 0 : i32
    return %c0_i32, %arg0 : i32, i32
  }
}

module attributes {stable_mosaic.version = 11 : i64} {
  func.func @_deg_rsqrt_kernel(%arg0: i32, %arg1: i32, %arg2: memref<4x4xf32, #tpu.memory_space<vmem>>, %arg3: memref<4x1xf32, #tpu.memory_space<vmem>>) attributes {dimension_semantics = [#tpu.dimension_semantics<parallel>, #tpu.dimension_semantics<arbitrary>], iteration_bounds = array<i64: 1, 1>, scalar_prefetch = 0 : i64, scratch_operands = 0 : i64, tpu.core_type = #tpu.core_type<tc>, window_params = [{transform_indices = @transform_0, window_bounds = array<i64: 4, 4>}, {transform_indices = @transform_1, window_bounds = array<i64: 4, 1>}]} {
    %c0_i32 = arith.constant 0 : i32
    %0 = arith.cmpi eq, %arg1, %c0_i32 : i32
    %1 = arith.extui %0 : i1 to i32
    %c0_i32_0 = arith.constant 0 : i32
    %2 = arith.cmpi ne, %1, %c0_i32_0 : i32
    scf.if %2 {
      %cst_8 = arith.constant 0.000000e+00 : f32
      %12 = vector.broadcast %cst_8 : f32 to vector<4x1xf32>
      %c0_9 = arith.constant 0 : index
      %c0_10 = arith.constant 0 : index
      %13 = vector.load %arg3[%c0_9, %c0_10] : memref<4x1xf32, #tpu.memory_space<vmem>>, vector<4x1xf32>
      tpu.vector_store %arg3[%c0_9, %c0_10], %12 {strides = array<i32>} : memref<4x1xf32, #tpu.memory_space<vmem>>, vector<4x1xf32>,
    } else {
    }
    %c0 = arith.constant 0 : index
    %c0_1 = arith.constant 0 : index
    %3 = vector.load %arg3[%c0, %c0_1] : memref<4x1xf32, #tpu.memory_space<vmem>>, vector<4x1xf32>
    %c0_2 = arith.constant 0 : index
    %c0_3 = arith.constant 0 : index
    %4 = vector.load %arg2[%c0_2, %c0_3] : memref<4x4xf32, #tpu.memory_space<vmem>>, vector<4x4xf32>
    %cst = arith.constant dense<0.000000e+00> : vector<4xf32>
    %5 = vector.multi_reduction <add>, %4, %cst [1] : vector<4x4xf32> to vector<4xf32>
    %6 = vector.shape_cast %5 : vector<4xf32> to vector<4x1xf32>
    %7 = arith.addf %3, %6 : vector<4x1xf32>
    %c0_4 = arith.constant 0 : index
    %c0_5 = arith.constant 0 : index
    %8 = vector.load %arg3[%c0_4, %c0_5] : memref<4x1xf32, #tpu.memory_space<vmem>>, vector<4x1xf32>
    tpu.vector_store %arg3[%c0_4, %c0_5], %7 {strides = array<i32>} : memref<4x1xf32, #tpu.memory_space<vmem>>, vector<4x1xf32>,
    %c0_i32_6 = arith.constant 0 : i32
    %9 = arith.cmpi eq, %arg1, %c0_i32_6 : i32
    %10 = arith.extui %9 : i1 to i32
    %c0_i32_7 = arith.constant 0 : i32
    %11 = arith.cmpi ne, %10, %c0_i32_7 : i32
    scf.if %11 {
      %c0_8 = arith.constant 0 : index
      %c0_9 = arith.constant 0 : index
      %12 = vector.load %arg3[%c0_8, %c0_9] : memref<4x1xf32, #tpu.memory_space<vmem>>, vector<4x1xf32>
      %cst_10 = arith.constant 2.000000e+00 : f32
      %13 = vector.broadcast %cst_10 : f32 to vector<4x1xf32>
      %14 = arith.addf %12, %13 : vector<4x1xf32>
      %15 = math.rsqrt %14 : vector<4x1xf32>
      %c0_11 = arith.constant 0 : index
      %c0_12 = arith.constant 0 : index
      %16 = vector.load %arg3[%c0_11, %c0_12] : memref<4x1xf32, #tpu.memory_space<vmem>>, vector<4x1xf32>
      tpu.vector_store %arg3[%c0_11, %c0_12], %15 {strides = array<i32>} : memref<4x1xf32, #tpu.memory_space<vmem>>, vector<4x1xf32>,
    } else {
    }
    return
  }
  func.func @transform_0(%arg0: i32, %arg1: i32) -> (i32, i32) {
    %c0_i32 = arith.constant 0 : i32
    return %arg0, %arg1 : i32, i32
  }
  func.func @transform_1(%arg0: i32, %arg1: i32) -> (i32, i32) {
    %c0_i32 = arith.constant 0 : i32
    %c0_i32_0 = arith.constant 0 : i32
    return %arg0, %c0_i32 : i32, i32
  }
}

module attributes {stable_mosaic.version = 11 : i64} {
  func.func @_adj_square_kernel(%arg0: i32, %arg1: i32, %arg2: i32, %arg3: memref<4x4xbf16, #tpu.memory_space<vmem>>, %arg4: memref<4x4xbf16, #tpu.memory_space<vmem>>, %arg5: memref<4x4xf32, #tpu.memory_space<vmem>>, %arg6: memref<4x4xf32, #tpu.memory_space<vmem>>) attributes {dimension_semantics = [#tpu.dimension_semantics<parallel>, #tpu.dimension_semantics<parallel>, #tpu.dimension_semantics<arbitrary>], iteration_bounds = array<i64: 1, 1, 1>, scalar_prefetch = 0 : i64, scratch_operands = 0 : i64, tpu.core_type = #tpu.core_type<tc>, window_params = [{transform_indices = @transform_0, window_bounds = array<i64: 4, 4>}, {transform_indices = @transform_1, window_bounds = array<i64: 4, 4>}, {transform_indices = @transform_2, window_bounds = array<i64: 4, 4>}, {transform_indices = @transform_3, window_bounds = array<i64: 4, 4>}]} {
    %c0_i32 = arith.constant 0 : i32
    %0 = arith.cmpi eq, %arg2, %c0_i32 : i32
    %1 = arith.extui %0 : i1 to i32
    %c0_i32_0 = arith.constant 0 : i32
    %2 = arith.cmpi ne, %1, %c0_i32_0 : i32
    scf.if %2 {
      %c0_10 = arith.constant 0 : index
      %c0_11 = arith.constant 0 : index
      %14 = vector.load %arg5[%c0_10, %c0_11] : memref<4x4xf32, #tpu.memory_space<vmem>>, vector<4x4xf32>
      %cst_12 = arith.constant 2.000000e+00 : f32
      %15 = vector.broadcast %cst_12 : f32 to vector<4x4xf32>
      %16 = arith.mulf %15, %14 : vector<4x4xf32>
      %c0_13 = arith.constant 0 : index
      %c0_14 = arith.constant 0 : index
      %17 = vector.load %arg6[%c0_13, %c0_14] : memref<4x4xf32, #tpu.memory_space<vmem>>, vector<4x4xf32>
      tpu.vector_store %arg6[%c0_13, %c0_14], %16 {strides = array<i32>} : memref<4x4xf32, #tpu.memory_space<vmem>>, vector<4x4xf32>,
    } else {
    }
    %c0 = arith.constant 0 : index
    %c0_1 = arith.constant 0 : index
    %3 = vector.load %arg6[%c0, %c0_1] : memref<4x4xf32, #tpu.memory_space<vmem>>, vector<4x4xf32>
    %c0_2 = arith.constant 0 : index
    %c0_3 = arith.constant 0 : index
    %4 = vector.load %arg3[%c0_2, %c0_3] : memref<4x4xbf16, #tpu.memory_space<vmem>>, vector<4x4xbf16>
    %c0_4 = arith.constant 0 : index
    %c0_5 = arith.constant 0 : index
    %5 = vector.load %arg4[%c0_4, %c0_5] : memref<4x4xbf16, #tpu.memory_space<vmem>>, vector<4x4xbf16>
    %cst = arith.constant dense<0.000000e+00> : vector<4x4xf32>
    %6 = tpu.matmul %4, %5, %cst {dimension_numbers = #tpu.dot_dimension_numbers<[1], [0], [0], [1], [0, 0, 1, 1], [], []>} : vector<4x4xbf16>, vector<4x4xbf16>, vector<4x4xf32> -> vector<4x4xf32>
    %7 = arith.addf %3, %6 : vector<4x4xf32>
    %c0_6 = arith.constant 0 : index
    %c0_7 = arith.constant 0 : index
    %8 = vector.load %arg6[%c0_6, %c0_7] : memref<4x4xf32, #tpu.memory_space<vmem>>, vector<4x4xf32>
    tpu.vector_store %arg6[%c0_6, %c0_7], %7 {strides = array<i32>} : memref<4x4xf32, #tpu.memory_space<vmem>>, vector<4x4xf32>,
    %c0_i32_8 = arith.constant 0 : i32
    %9 = arith.cmpi eq, %arg2, %c0_i32_8 : i32
    %10 = arith.cmpi eq, %arg0, %arg1 : i32
    %11 = arith.andi %9, %10 : i1
    %12 = arith.extui %11 : i1 to i32
    %c0_i32_9 = arith.constant 0 : i32
    %13 = arith.cmpi ne, %12, %c0_i32_9 : i32
    scf.if %13 {
      %14 = tpu.iota {dimensions = array<i32: 0>} : vector<4x4xi32>
      %15 = tpu.iota {dimensions = array<i32: 1>} : vector<4x4xi32>
      %16 = arith.cmpi eq, %14, %15 : vector<4x4xi32>
      %c0_10 = arith.constant 0 : index
      %c0_11 = arith.constant 0 : index
      %17 = vector.load %arg6[%c0_10, %c0_11] : memref<4x4xf32, #tpu.memory_space<vmem>>, vector<4x4xf32>
      %cst_12 = arith.constant 0.000000e+00 : f32
      %18 = vector.broadcast %cst_12 : f32 to vector<4x4xf32>
      %19 = arith.select %16, %18, %17 : vector<4x4xi1>, vector<4x4xf32>
      %c0_13 = arith.constant 0 : index
      %c0_14 = arith.constant 0 : index
      %20 = vector.load %arg6[%c0_13, %c0_14] : memref<4x4xf32, #tpu.memory_space<vmem>>, vector<4x4xf32>
      tpu.vector_store %arg6[%c0_13, %c0_14], %19 {strides = array<i32>} : memref<4x4xf32, #tpu.memory_space<vmem>>, vector<4x4xf32>,
    } else {
    }
    return
  }
  func.func @transform_0(%arg0: i32, %arg1: i32, %arg2: i32) -> (i32, i32) {
    %c0_i32 = arith.constant 0 : i32
    return %arg0, %arg2 : i32, i32
  }
  func.func @transform_1(%arg0: i32, %arg1: i32, %arg2: i32) -> (i32, i32) {
    %c0_i32 = arith.constant 0 : i32
    return %arg2, %arg1 : i32, i32
  }
  func.func @transform_2(%arg0: i32, %arg1: i32, %arg2: i32) -> (i32, i32) {
    %c0_i32 = arith.constant 0 : i32
    return %arg0, %arg1 : i32, i32
  }
  func.func @transform_3(%arg0: i32, %arg1: i32, %arg2: i32) -> (i32, i32) {
    %c0_i32 = arith.constant 0 : i32
    return %arg0, %arg1 : i32, i32
  }
}

module attributes {stable_mosaic.version = 11 : i64} {
  func.func @_gcn_conv_kernel(%arg0: i32, %arg1: i32, %arg2: memref<4x1xf32, #tpu.memory_space<vmem>>, %arg3: memref<4x4xbf16, #tpu.memory_space<vmem>>, %arg4: memref<4x128xbf16, #tpu.memory_space<vmem>>, %arg5: memref<4x128xf32, #tpu.memory_space<vmem>>, %arg6: memref<128x128xf32, #tpu.memory_space<vmem>>, %arg7: memref<1x128xf32, #tpu.memory_space<vmem>>, %arg8: memref<1x128xf32, #tpu.memory_space<vmem>>, %arg9: memref<4x128xf32, #tpu.memory_space<vmem>>, %arg10: memref<1x4xf32, #tpu.memory_space<vmem>>) attributes {dimension_semantics = [#tpu.dimension_semantics<parallel>, #tpu.dimension_semantics<arbitrary>], iteration_bounds = array<i64: 1, 1>, scalar_prefetch = 0 : i64, scratch_operands = 0 : i64, tpu.core_type = #tpu.core_type<tc>, window_params = [{transform_indices = @transform_0, window_bounds = array<i64: 4, 1>}, {transform_indices = @transform_1, window_bounds = array<i64: 4, 4>}, {transform_indices = @transform_2, window_bounds = array<i64: 4, 128>}, {transform_indices = @transform_3, window_bounds = array<i64: 4, 128>}, {pipeline_mode = #tpu.pipeline_mode<synchronous>, transform_indices = @transform_4, window_bounds = array<i64: 128, 128>}, {pipeline_mode = #tpu.pipeline_mode<synchronous>, transform_indices = @transform_5, window_bounds = array<i64: 1, 128>}, {pipeline_mode = #tpu.pipeline_mode<synchronous>, transform_indices = @transform_6, window_bounds = array<i64: 1, 128>}, {transform_indices = @transform_7, window_bounds = array<i64: 4, 128>}, {transform_indices = @transform_8, window_bounds = array<i64: 1, 4>}]} {
    %c0_i32 = arith.constant 0 : i32
    %0 = arith.cmpi eq, %arg1, %c0_i32 : i32
    %1 = arith.extui %0 : i1 to i32
    %c0_i32_0 = arith.constant 0 : i32
    %2 = arith.cmpi ne, %1, %c0_i32_0 : i32
    scf.if %2 {
      %cst_10 = arith.constant 0.000000e+00 : f32
      %12 = vector.broadcast %cst_10 : f32 to vector<4x128xf32>
      %c0_11 = arith.constant 0 : index
      %c0_12 = arith.constant 0 : index
      %13 = vector.load %arg9[%c0_11, %c0_12] : memref<4x128xf32, #tpu.memory_space<vmem>>, vector<4x128xf32>
      tpu.vector_store %arg9[%c0_11, %c0_12], %12 {strides = array<i32>} : memref<4x128xf32, #tpu.memory_space<vmem>>, vector<4x128xf32>,
    } else {
    }
    %c0 = arith.constant 0 : index
    %c0_1 = arith.constant 0 : index
    %3 = vector.load %arg9[%c0, %c0_1] : memref<4x128xf32, #tpu.memory_space<vmem>>, vector<4x128xf32>
    %c0_2 = arith.constant 0 : index
    %c0_3 = arith.constant 0 : index
    %4 = vector.load %arg3[%c0_2, %c0_3] : memref<4x4xbf16, #tpu.memory_space<vmem>>, vector<4x4xbf16>
    %c0_4 = arith.constant 0 : index
    %c0_5 = arith.constant 0 : index
    %5 = vector.load %arg4[%c0_4, %c0_5] : memref<4x128xbf16, #tpu.memory_space<vmem>>, vector<4x128xbf16>
    %cst = arith.constant dense<0.000000e+00> : vector<4x128xf32>
    %6 = tpu.matmul %4, %5, %cst {dimension_numbers = #tpu.dot_dimension_numbers<[1], [0], [0], [1], [0, 0, 1, 1], [], []>} : vector<4x4xbf16>, vector<4x128xbf16>, vector<4x128xf32> -> vector<4x128xf32>
    %7 = arith.addf %3, %6 : vector<4x128xf32>
    %c0_6 = arith.constant 0 : index
    %c0_7 = arith.constant 0 : index
    %8 = vector.load %arg9[%c0_6, %c0_7] : memref<4x128xf32, #tpu.memory_space<vmem>>, vector<4x128xf32>
    tpu.vector_store %arg9[%c0_6, %c0_7], %7 {strides = array<i32>} : memref<4x128xf32, #tpu.memory_space<vmem>>, vector<4x128xf32>,
    %c0_i32_8 = arith.constant 0 : i32
    %9 = arith.cmpi eq, %arg1, %c0_i32_8 : i32
    %10 = arith.extui %9 : i1 to i32
    %c0_i32_9 = arith.constant 0 : i32
    %11 = arith.cmpi ne, %10, %c0_i32_9 : i32
    scf.if %11 {
      %c0_10 = arith.constant 0 : index
      %c0_11 = arith.constant 0 : index
      %12 = vector.load %arg2[%c0_10, %c0_11] : memref<4x1xf32, #tpu.memory_space<vmem>>, vector<4x1xf32>
      %c0_12 = arith.constant 0 : index
      %c0_13 = arith.constant 0 : index
      %13 = vector.load %arg9[%c0_12, %c0_13] : memref<4x128xf32, #tpu.memory_space<vmem>>, vector<4x128xf32>
      %cst_14 = arith.constant 2.000000e+00 : f32
      %14 = vector.broadcast %cst_14 : f32 to vector<4x1xf32>
      %15 = arith.mulf %14, %12 : vector<4x1xf32>
      %c0_15 = arith.constant 0 : index
      %c0_16 = arith.constant 0 : index
      %16 = vector.load %arg5[%c0_15, %c0_16] : memref<4x128xf32, #tpu.memory_space<vmem>>, vector<4x128xf32>
      %17 = vector.broadcast %15 : vector<4x1xf32> to vector<4x128xf32>
      %18 = arith.mulf %17, %16 : vector<4x128xf32>
      %19 = arith.addf %13, %18 : vector<4x128xf32>
      %20 = vector.broadcast %12 : vector<4x1xf32> to vector<4x128xf32>
      %21 = arith.mulf %20, %19 : vector<4x128xf32>
      %c0_17 = arith.constant 0 : index
      %c0_18 = arith.constant 0 : index
      %22 = vector.load %arg6[%c0_17, %c0_18] : memref<128x128xf32, #tpu.memory_space<vmem>>, vector<128x128xf32>
      %cst_19 = arith.constant dense<0.000000e+00> : vector<4x128xf32>
      %23 = tpu.matmul %21, %22, %cst_19 {dimension_numbers = #tpu.dot_dimension_numbers<[1], [0], [0], [1], [0, 0, 1, 1], [], []>} : vector<4x128xf32>, vector<128x128xf32>, vector<4x128xf32> -> vector<4x128xf32>
      %c0_20 = arith.constant 0 : index
      %c0_21 = arith.constant 0 : index
      %24 = vector.load %arg7[%c0_20, %c0_21] : memref<1x128xf32, #tpu.memory_space<vmem>>, vector<1x128xf32>
      %25 = vector.broadcast %24 : vector<1x128xf32> to vector<4x128xf32>
      %26 = arith.addf %23, %25 : vector<4x128xf32>
      %cst_22 = arith.constant 0.000000e+00 : f32
      %27 = vector.broadcast %cst_22 : f32 to vector<4x128xf32>
      %28 = arith.maximumf %26, %27 : vector<4x128xf32>
      %c0_23 = arith.constant 0 : index
      %c0_24 = arith.constant 0 : index
      %29 = vector.load %arg9[%c0_23, %c0_24] : memref<4x128xf32, #tpu.memory_space<vmem>>, vector<4x128xf32>
      tpu.vector_store %arg9[%c0_23, %c0_24], %28 {strides = array<i32>} : memref<4x128xf32, #tpu.memory_space<vmem>>, vector<4x128xf32>,
      %c0_25 = arith.constant 0 : index
      %c0_26 = arith.constant 0 : index
      %30 = vector.load %arg8[%c0_25, %c0_26] : memref<1x128xf32, #tpu.memory_space<vmem>>, vector<1x128xf32>
      %31 = arith.mulf %30, %30 : vector<1x128xf32>
      %32 = vector.shape_cast %31 : vector<1x128xf32> to vector<1x1x128xf32>
      %cst_27 = arith.constant dense<0.000000e+00> : vector<1xf32>
      %33 = vector.multi_reduction <add>, %32, %cst_27 [1, 2] : vector<1x1x128xf32> to vector<1xf32>
      %34 = vector.shape_cast %33 : vector<1xf32> to vector<1x1x1xf32>
      %35 = vector.extract %34[0, 0, 0] : f32 from vector<1x1x1xf32>
      %36 = math.rsqrt %35 : f32
      %cst_28 = arith.constant dense<0.000000e+00> : vector<1x4xf32>
      %37 = tpu.matmul %30, %28, %cst_28 {dimension_numbers = #tpu.dot_dimension_numbers<[1], [1], [0], [0], [0, 0, 1, 0], [], []>} : vector<1x128xf32>, vector<4x128xf32>, vector<1x4xf32> -> vector<1x4xf32>
      %38 = vector.broadcast %36 : f32 to vector<1x4xf32>
      %39 = arith.mulf %37, %38 : vector<1x4xf32>
      %40 = math.tanh %39 : vector<1x4xf32>
      %c0_29 = arith.constant 0 : index
      %c0_30 = arith.constant 0 : index
      %41 = vector.load %arg10[%c0_29, %c0_30] : memref<1x4xf32, #tpu.memory_space<vmem>>, vector<1x4xf32>
      tpu.vector_store %arg10[%c0_29, %c0_30], %40 {strides = array<i32>} : memref<1x4xf32, #tpu.memory_space<vmem>>, vector<1x4xf32>,
    } else {
    }
    return
  }
  func.func @transform_0(%arg0: i32, %arg1: i32) -> (i32, i32) {
    %c0_i32 = arith.constant 0 : i32
    %c0_i32_0 = arith.constant 0 : i32
    return %arg0, %c0_i32 : i32, i32
  }
  func.func @transform_1(%arg0: i32, %arg1: i32) -> (i32, i32) {
    %c0_i32 = arith.constant 0 : i32
    return %arg0, %arg1 : i32, i32
  }
  func.func @transform_2(%arg0: i32, %arg1: i32) -> (i32, i32) {
    %c0_i32 = arith.constant 0 : i32
    %c0_i32_0 = arith.constant 0 : i32
    return %arg1, %c0_i32 : i32, i32
  }
  func.func @transform_3(%arg0: i32, %arg1: i32) -> (i32, i32) {
    %c0_i32 = arith.constant 0 : i32
    %c0_i32_0 = arith.constant 0 : i32
    return %arg0, %c0_i32 : i32, i32
  }
  func.func @transform_4(%arg0: i32, %arg1: i32) -> (i32, i32) {
    %c0_i32 = arith.constant 0 : i32
    %c0_i32_0 = arith.constant 0 : i32
    %c0_i32_1 = arith.constant 0 : i32
    return %c0_i32, %c0_i32_0 : i32, i32
  }
  func.func @transform_5(%arg0: i32, %arg1: i32) -> (i32, i32) {
    %c0_i32 = arith.constant 0 : i32
    %c0_i32_0 = arith.constant 0 : i32
    %c0_i32_1 = arith.constant 0 : i32
    return %c0_i32, %c0_i32_0 : i32, i32
  }
  func.func @transform_6(%arg0: i32, %arg1: i32) -> (i32, i32) {
    %c0_i32 = arith.constant 0 : i32
    %c0_i32_0 = arith.constant 0 : i32
    %c0_i32_1 = arith.constant 0 : i32
    return %c0_i32, %c0_i32_0 : i32, i32
  }
  func.func @transform_7(%arg0: i32, %arg1: i32) -> (i32, i32) {
    %c0_i32 = arith.constant 0 : i32
    %c0_i32_0 = arith.constant 0 : i32
    return %arg0, %c0_i32 : i32, i32
  }
  func.func @transform_8(%arg0: i32, %arg1: i32) -> (i32, i32) {
    %c0_i32 = arith.constant 0 : i32
    %c0_i32_0 = arith.constant 0 : i32
    return %c0_i32, %arg0 : i32, i32
  }
}

module attributes {stable_mosaic.version = 11 : i64} {
  func.func @_deg_rsqrt_kernel(%arg0: i32, %arg1: i32, %arg2: memref<2x2xf32, #tpu.memory_space<vmem>>, %arg3: memref<2x1xf32, #tpu.memory_space<vmem>>) attributes {dimension_semantics = [#tpu.dimension_semantics<parallel>, #tpu.dimension_semantics<arbitrary>], iteration_bounds = array<i64: 1, 1>, scalar_prefetch = 0 : i64, scratch_operands = 0 : i64, tpu.core_type = #tpu.core_type<tc>, window_params = [{transform_indices = @transform_0, window_bounds = array<i64: 2, 2>}, {transform_indices = @transform_1, window_bounds = array<i64: 2, 1>}]} {
    %c0_i32 = arith.constant 0 : i32
    %0 = arith.cmpi eq, %arg1, %c0_i32 : i32
    %1 = arith.extui %0 : i1 to i32
    %c0_i32_0 = arith.constant 0 : i32
    %2 = arith.cmpi ne, %1, %c0_i32_0 : i32
    scf.if %2 {
      %cst_8 = arith.constant 0.000000e+00 : f32
      %12 = vector.broadcast %cst_8 : f32 to vector<2x1xf32>
      %c0_9 = arith.constant 0 : index
      %c0_10 = arith.constant 0 : index
      %13 = vector.load %arg3[%c0_9, %c0_10] : memref<2x1xf32, #tpu.memory_space<vmem>>, vector<2x1xf32>
      tpu.vector_store %arg3[%c0_9, %c0_10], %12 {strides = array<i32>} : memref<2x1xf32, #tpu.memory_space<vmem>>, vector<2x1xf32>,
    } else {
    }
    %c0 = arith.constant 0 : index
    %c0_1 = arith.constant 0 : index
    %3 = vector.load %arg3[%c0, %c0_1] : memref<2x1xf32, #tpu.memory_space<vmem>>, vector<2x1xf32>
    %c0_2 = arith.constant 0 : index
    %c0_3 = arith.constant 0 : index
    %4 = vector.load %arg2[%c0_2, %c0_3] : memref<2x2xf32, #tpu.memory_space<vmem>>, vector<2x2xf32>
    %cst = arith.constant dense<0.000000e+00> : vector<2xf32>
    %5 = vector.multi_reduction <add>, %4, %cst [1] : vector<2x2xf32> to vector<2xf32>
    %6 = vector.shape_cast %5 : vector<2xf32> to vector<2x1xf32>
    %7 = arith.addf %3, %6 : vector<2x1xf32>
    %c0_4 = arith.constant 0 : index
    %c0_5 = arith.constant 0 : index
    %8 = vector.load %arg3[%c0_4, %c0_5] : memref<2x1xf32, #tpu.memory_space<vmem>>, vector<2x1xf32>
    tpu.vector_store %arg3[%c0_4, %c0_5], %7 {strides = array<i32>} : memref<2x1xf32, #tpu.memory_space<vmem>>, vector<2x1xf32>,
    %c0_i32_6 = arith.constant 0 : i32
    %9 = arith.cmpi eq, %arg1, %c0_i32_6 : i32
    %10 = arith.extui %9 : i1 to i32
    %c0_i32_7 = arith.constant 0 : i32
    %11 = arith.cmpi ne, %10, %c0_i32_7 : i32
    scf.if %11 {
      %c0_8 = arith.constant 0 : index
      %c0_9 = arith.constant 0 : index
      %12 = vector.load %arg3[%c0_8, %c0_9] : memref<2x1xf32, #tpu.memory_space<vmem>>, vector<2x1xf32>
      %cst_10 = arith.constant 2.000000e+00 : f32
      %13 = vector.broadcast %cst_10 : f32 to vector<2x1xf32>
      %14 = arith.addf %12, %13 : vector<2x1xf32>
      %15 = math.rsqrt %14 : vector<2x1xf32>
      %c0_11 = arith.constant 0 : index
      %c0_12 = arith.constant 0 : index
      %16 = vector.load %arg3[%c0_11, %c0_12] : memref<2x1xf32, #tpu.memory_space<vmem>>, vector<2x1xf32>
      tpu.vector_store %arg3[%c0_11, %c0_12], %15 {strides = array<i32>} : memref<2x1xf32, #tpu.memory_space<vmem>>, vector<2x1xf32>,
    } else {
    }
    return
  }
  func.func @transform_0(%arg0: i32, %arg1: i32) -> (i32, i32) {
    %c0_i32 = arith.constant 0 : i32
    return %arg0, %arg1 : i32, i32
  }
  func.func @transform_1(%arg0: i32, %arg1: i32) -> (i32, i32) {
    %c0_i32 = arith.constant 0 : i32
    %c0_i32_0 = arith.constant 0 : i32
    return %arg0, %c0_i32 : i32, i32
  }
}

module attributes {stable_mosaic.version = 11 : i64} {
  func.func @_gcn_conv_kernel(%arg0: i32, %arg1: i32, %arg2: memref<2x1xf32, #tpu.memory_space<vmem>>, %arg3: memref<2x2xbf16, #tpu.memory_space<vmem>>, %arg4: memref<2x128xbf16, #tpu.memory_space<vmem>>, %arg5: memref<2x128xf32, #tpu.memory_space<vmem>>, %arg6: memref<128x128xf32, #tpu.memory_space<vmem>>, %arg7: memref<1x128xf32, #tpu.memory_space<vmem>>, %arg8: memref<2x128xf32, #tpu.memory_space<vmem>>) attributes {dimension_semantics = [#tpu.dimension_semantics<parallel>, #tpu.dimension_semantics<arbitrary>], iteration_bounds = array<i64: 1, 1>, scalar_prefetch = 0 : i64, scratch_operands = 0 : i64, tpu.core_type = #tpu.core_type<tc>, window_params = [{transform_indices = @transform_0, window_bounds = array<i64: 2, 1>}, {transform_indices = @transform_1, window_bounds = array<i64: 2, 2>}, {transform_indices = @transform_2, window_bounds = array<i64: 2, 128>}, {transform_indices = @transform_3, window_bounds = array<i64: 2, 128>}, {pipeline_mode = #tpu.pipeline_mode<synchronous>, transform_indices = @transform_4, window_bounds = array<i64: 128, 128>}, {pipeline_mode = #tpu.pipeline_mode<synchronous>, transform_indices = @transform_5, window_bounds = array<i64: 1, 128>}, {transform_indices = @transform_6, window_bounds = array<i64: 2, 128>}]} {
    %c0_i32 = arith.constant 0 : i32
    %0 = arith.cmpi eq, %arg1, %c0_i32 : i32
    %1 = arith.extui %0 : i1 to i32
    %c0_i32_0 = arith.constant 0 : i32
    %2 = arith.cmpi ne, %1, %c0_i32_0 : i32
    scf.if %2 {
      %cst_10 = arith.constant 0.000000e+00 : f32
      %12 = vector.broadcast %cst_10 : f32 to vector<2x128xf32>
      %c0_11 = arith.constant 0 : index
      %c0_12 = arith.constant 0 : index
      %13 = vector.load %arg8[%c0_11, %c0_12] : memref<2x128xf32, #tpu.memory_space<vmem>>, vector<2x128xf32>
      tpu.vector_store %arg8[%c0_11, %c0_12], %12 {strides = array<i32>} : memref<2x128xf32, #tpu.memory_space<vmem>>, vector<2x128xf32>,
    } else {
    }
    %c0 = arith.constant 0 : index
    %c0_1 = arith.constant 0 : index
    %3 = vector.load %arg8[%c0, %c0_1] : memref<2x128xf32, #tpu.memory_space<vmem>>, vector<2x128xf32>
    %c0_2 = arith.constant 0 : index
    %c0_3 = arith.constant 0 : index
    %4 = vector.load %arg3[%c0_2, %c0_3] : memref<2x2xbf16, #tpu.memory_space<vmem>>, vector<2x2xbf16>
    %c0_4 = arith.constant 0 : index
    %c0_5 = arith.constant 0 : index
    %5 = vector.load %arg4[%c0_4, %c0_5] : memref<2x128xbf16, #tpu.memory_space<vmem>>, vector<2x128xbf16>
    %cst = arith.constant dense<0.000000e+00> : vector<2x128xf32>
    %6 = tpu.matmul %4, %5, %cst {dimension_numbers = #tpu.dot_dimension_numbers<[1], [0], [0], [1], [0, 0, 1, 1], [], []>} : vector<2x2xbf16>, vector<2x128xbf16>, vector<2x128xf32> -> vector<2x128xf32>
    %7 = arith.addf %3, %6 : vector<2x128xf32>
    %c0_6 = arith.constant 0 : index
    %c0_7 = arith.constant 0 : index
    %8 = vector.load %arg8[%c0_6, %c0_7] : memref<2x128xf32, #tpu.memory_space<vmem>>, vector<2x128xf32>
    tpu.vector_store %arg8[%c0_6, %c0_7], %7 {strides = array<i32>} : memref<2x128xf32, #tpu.memory_space<vmem>>, vector<2x128xf32>,
    %c0_i32_8 = arith.constant 0 : i32
    %9 = arith.cmpi eq, %arg1, %c0_i32_8 : i32
    %10 = arith.extui %9 : i1 to i32
    %c0_i32_9 = arith.constant 0 : i32
    %11 = arith.cmpi ne, %10, %c0_i32_9 : i32
    scf.if %11 {
      %c0_10 = arith.constant 0 : index
      %c0_11 = arith.constant 0 : index
      %12 = vector.load %arg2[%c0_10, %c0_11] : memref<2x1xf32, #tpu.memory_space<vmem>>, vector<2x1xf32>
      %c0_12 = arith.constant 0 : index
      %c0_13 = arith.constant 0 : index
      %13 = vector.load %arg8[%c0_12, %c0_13] : memref<2x128xf32, #tpu.memory_space<vmem>>, vector<2x128xf32>
      %cst_14 = arith.constant 2.000000e+00 : f32
      %14 = vector.broadcast %cst_14 : f32 to vector<2x1xf32>
      %15 = arith.mulf %14, %12 : vector<2x1xf32>
      %c0_15 = arith.constant 0 : index
      %c0_16 = arith.constant 0 : index
      %16 = vector.load %arg5[%c0_15, %c0_16] : memref<2x128xf32, #tpu.memory_space<vmem>>, vector<2x128xf32>
      %17 = vector.broadcast %15 : vector<2x1xf32> to vector<2x128xf32>
      %18 = arith.mulf %17, %16 : vector<2x128xf32>
      %19 = arith.addf %13, %18 : vector<2x128xf32>
      %20 = vector.broadcast %12 : vector<2x1xf32> to vector<2x128xf32>
      %21 = arith.mulf %20, %19 : vector<2x128xf32>
      %c0_17 = arith.constant 0 : index
      %c0_18 = arith.constant 0 : index
      %22 = vector.load %arg6[%c0_17, %c0_18] : memref<128x128xf32, #tpu.memory_space<vmem>>, vector<128x128xf32>
      %cst_19 = arith.constant dense<0.000000e+00> : vector<2x128xf32>
      %23 = tpu.matmul %21, %22, %cst_19 {dimension_numbers = #tpu.dot_dimension_numbers<[1], [0], [0], [1], [0, 0, 1, 1], [], []>} : vector<2x128xf32>, vector<128x128xf32>, vector<2x128xf32> -> vector<2x128xf32>
      %c0_20 = arith.constant 0 : index
      %c0_21 = arith.constant 0 : index
      %24 = vector.load %arg7[%c0_20, %c0_21] : memref<1x128xf32, #tpu.memory_space<vmem>>, vector<1x128xf32>
      %25 = vector.broadcast %24 : vector<1x128xf32> to vector<2x128xf32>
      %26 = arith.addf %23, %25 : vector<2x128xf32>
      %cst_22 = arith.constant 0.000000e+00 : f32
      %27 = vector.broadcast %cst_22 : f32 to vector<2x128xf32>
      %28 = arith.maximumf %26, %27 : vector<2x128xf32>
      %c0_23 = arith.constant 0 : index
      %c0_24 = arith.constant 0 : index
      %29 = vector.load %arg8[%c0_23, %c0_24] : memref<2x128xf32, #tpu.memory_space<vmem>>, vector<2x128xf32>
      tpu.vector_store %arg8[%c0_23, %c0_24], %28 {strides = array<i32>} : memref<2x128xf32, #tpu.memory_space<vmem>>, vector<2x128xf32>,
    } else {
    }
    return
  }
  func.func @transform_0(%arg0: i32, %arg1: i32) -> (i32, i32) {
    %c0_i32 = arith.constant 0 : i32
    %c0_i32_0 = arith.constant 0 : i32
    return %arg0, %c0_i32 : i32, i32
  }
  func.func @transform_1(%arg0: i32, %arg1: i32) -> (i32, i32) {
    %c0_i32 = arith.constant 0 : i32
    return %arg0, %arg1 : i32, i32
  }
  func.func @transform_2(%arg0: i32, %arg1: i32) -> (i32, i32) {
    %c0_i32 = arith.constant 0 : i32
    %c0_i32_0 = arith.constant 0 : i32
    return %arg1, %c0_i32 : i32, i32
  }
  func.func @transform_3(%arg0: i32, %arg1: i32) -> (i32, i32) {
    %c0_i32 = arith.constant 0 : i32
    %c0_i32_0 = arith.constant 0 : i32
    return %arg0, %c0_i32 : i32, i32
  }
  func.func @transform_4(%arg0: i32, %arg1: i32) -> (i32, i32) {
    %c0_i32 = arith.constant 0 : i32
    %c0_i32_0 = arith.constant 0 : i32
    %c0_i32_1 = arith.constant 0 : i32
    return %c0_i32, %c0_i32_0 : i32, i32
  }
  func.func @transform_5(%arg0: i32, %arg1: i32) -> (i32, i32) {
    %c0_i32 = arith.constant 0 : i32
    %c0_i32_0 = arith.constant 0 : i32
    %c0_i32_1 = arith.constant 0 : i32
    return %c0_i32, %c0_i32_0 : i32, i32
  }
  func.func @transform_6(%arg0: i32, %arg1: i32) -> (i32, i32) {
    %c0_i32 = arith.constant 0 : i32
    %c0_i32_0 = arith.constant 0 : i32
    return %arg0, %c0_i32 : i32, i32
  }
}

module attributes {stable_mosaic.version = 11 : i64} {
  func.func @_gcn_conv_kernel(%arg0: i32, %arg1: i32, %arg2: memref<4x1xf32, #tpu.memory_space<vmem>>, %arg3: memref<4x4xbf16, #tpu.memory_space<vmem>>, %arg4: memref<4x128xbf16, #tpu.memory_space<vmem>>, %arg5: memref<4x128xf32, #tpu.memory_space<vmem>>, %arg6: memref<128x128xf32, #tpu.memory_space<vmem>>, %arg7: memref<1x128xf32, #tpu.memory_space<vmem>>, %arg8: memref<4x128xf32, #tpu.memory_space<vmem>>) attributes {dimension_semantics = [#tpu.dimension_semantics<parallel>, #tpu.dimension_semantics<arbitrary>], iteration_bounds = array<i64: 1, 1>, scalar_prefetch = 0 : i64, scratch_operands = 0 : i64, tpu.core_type = #tpu.core_type<tc>, window_params = [{transform_indices = @transform_0, window_bounds = array<i64: 4, 1>}, {transform_indices = @transform_1, window_bounds = array<i64: 4, 4>}, {transform_indices = @transform_2, window_bounds = array<i64: 4, 128>}, {transform_indices = @transform_3, window_bounds = array<i64: 4, 128>}, {pipeline_mode = #tpu.pipeline_mode<synchronous>, transform_indices = @transform_4, window_bounds = array<i64: 128, 128>}, {pipeline_mode = #tpu.pipeline_mode<synchronous>, transform_indices = @transform_5, window_bounds = array<i64: 1, 128>}, {transform_indices = @transform_6, window_bounds = array<i64: 4, 128>}]} {
    %c0_i32 = arith.constant 0 : i32
    %0 = arith.cmpi eq, %arg1, %c0_i32 : i32
    %1 = arith.extui %0 : i1 to i32
    %c0_i32_0 = arith.constant 0 : i32
    %2 = arith.cmpi ne, %1, %c0_i32_0 : i32
    scf.if %2 {
      %cst_10 = arith.constant 0.000000e+00 : f32
      %12 = vector.broadcast %cst_10 : f32 to vector<4x128xf32>
      %c0_11 = arith.constant 0 : index
      %c0_12 = arith.constant 0 : index
      %13 = vector.load %arg8[%c0_11, %c0_12] : memref<4x128xf32, #tpu.memory_space<vmem>>, vector<4x128xf32>
      tpu.vector_store %arg8[%c0_11, %c0_12], %12 {strides = array<i32>} : memref<4x128xf32, #tpu.memory_space<vmem>>, vector<4x128xf32>,
    } else {
    }
    %c0 = arith.constant 0 : index
    %c0_1 = arith.constant 0 : index
    %3 = vector.load %arg8[%c0, %c0_1] : memref<4x128xf32, #tpu.memory_space<vmem>>, vector<4x128xf32>
    %c0_2 = arith.constant 0 : index
    %c0_3 = arith.constant 0 : index
    %4 = vector.load %arg3[%c0_2, %c0_3] : memref<4x4xbf16, #tpu.memory_space<vmem>>, vector<4x4xbf16>
    %c0_4 = arith.constant 0 : index
    %c0_5 = arith.constant 0 : index
    %5 = vector.load %arg4[%c0_4, %c0_5] : memref<4x128xbf16, #tpu.memory_space<vmem>>, vector<4x128xbf16>
    %cst = arith.constant dense<0.000000e+00> : vector<4x128xf32>
    %6 = tpu.matmul %4, %5, %cst {dimension_numbers = #tpu.dot_dimension_numbers<[1], [0], [0], [1], [0, 0, 1, 1], [], []>} : vector<4x4xbf16>, vector<4x128xbf16>, vector<4x128xf32> -> vector<4x128xf32>
    %7 = arith.addf %3, %6 : vector<4x128xf32>
    %c0_6 = arith.constant 0 : index
    %c0_7 = arith.constant 0 : index
    %8 = vector.load %arg8[%c0_6, %c0_7] : memref<4x128xf32, #tpu.memory_space<vmem>>, vector<4x128xf32>
    tpu.vector_store %arg8[%c0_6, %c0_7], %7 {strides = array<i32>} : memref<4x128xf32, #tpu.memory_space<vmem>>, vector<4x128xf32>,
    %c0_i32_8 = arith.constant 0 : i32
    %9 = arith.cmpi eq, %arg1, %c0_i32_8 : i32
    %10 = arith.extui %9 : i1 to i32
    %c0_i32_9 = arith.constant 0 : i32
    %11 = arith.cmpi ne, %10, %c0_i32_9 : i32
    scf.if %11 {
      %c0_10 = arith.constant 0 : index
      %c0_11 = arith.constant 0 : index
      %12 = vector.load %arg2[%c0_10, %c0_11] : memref<4x1xf32, #tpu.memory_space<vmem>>, vector<4x1xf32>
      %c0_12 = arith.constant 0 : index
      %c0_13 = arith.constant 0 : index
      %13 = vector.load %arg8[%c0_12, %c0_13] : memref<4x128xf32, #tpu.memory_space<vmem>>, vector<4x128xf32>
      %cst_14 = arith.constant 2.000000e+00 : f32
      %14 = vector.broadcast %cst_14 : f32 to vector<4x1xf32>
      %15 = arith.mulf %14, %12 : vector<4x1xf32>
      %c0_15 = arith.constant 0 : index
      %c0_16 = arith.constant 0 : index
      %16 = vector.load %arg5[%c0_15, %c0_16] : memref<4x128xf32, #tpu.memory_space<vmem>>, vector<4x128xf32>
      %17 = vector.broadcast %15 : vector<4x1xf32> to vector<4x128xf32>
      %18 = arith.mulf %17, %16 : vector<4x128xf32>
      %19 = arith.addf %13, %18 : vector<4x128xf32>
      %20 = vector.broadcast %12 : vector<4x1xf32> to vector<4x128xf32>
      %21 = arith.mulf %20, %19 : vector<4x128xf32>
      %c0_17 = arith.constant 0 : index
      %c0_18 = arith.constant 0 : index
      %22 = vector.load %arg6[%c0_17, %c0_18] : memref<128x128xf32, #tpu.memory_space<vmem>>, vector<128x128xf32>
      %cst_19 = arith.constant dense<0.000000e+00> : vector<4x128xf32>
      %23 = tpu.matmul %21, %22, %cst_19 {dimension_numbers = #tpu.dot_dimension_numbers<[1], [0], [0], [1], [0, 0, 1, 1], [], []>} : vector<4x128xf32>, vector<128x128xf32>, vector<4x128xf32> -> vector<4x128xf32>
      %c0_20 = arith.constant 0 : index
      %c0_21 = arith.constant 0 : index
      %24 = vector.load %arg7[%c0_20, %c0_21] : memref<1x128xf32, #tpu.memory_space<vmem>>, vector<1x128xf32>
      %25 = vector.broadcast %24 : vector<1x128xf32> to vector<4x128xf32>
      %26 = arith.addf %23, %25 : vector<4x128xf32>
      %cst_22 = arith.constant 0.000000e+00 : f32
      %27 = vector.broadcast %cst_22 : f32 to vector<4x128xf32>
      %28 = arith.maximumf %26, %27 : vector<4x128xf32>
      %c0_23 = arith.constant 0 : index
      %c0_24 = arith.constant 0 : index
      %29 = vector.load %arg8[%c0_23, %c0_24] : memref<4x128xf32, #tpu.memory_space<vmem>>, vector<4x128xf32>
      tpu.vector_store %arg8[%c0_23, %c0_24], %28 {strides = array<i32>} : memref<4x128xf32, #tpu.memory_space<vmem>>, vector<4x128xf32>,
    } else {
    }
    return
  }
  func.func @transform_0(%arg0: i32, %arg1: i32) -> (i32, i32) {
    %c0_i32 = arith.constant 0 : i32
    %c0_i32_0 = arith.constant 0 : i32
    return %arg0, %c0_i32 : i32, i32
  }
  func.func @transform_1(%arg0: i32, %arg1: i32) -> (i32, i32) {
    %c0_i32 = arith.constant 0 : i32
    return %arg0, %arg1 : i32, i32
  }
  func.func @transform_2(%arg0: i32, %arg1: i32) -> (i32, i32) {
    %c0_i32 = arith.constant 0 : i32
    %c0_i32_0 = arith.constant 0 : i32
    return %arg1, %c0_i32 : i32, i32
  }
  func.func @transform_3(%arg0: i32, %arg1: i32) -> (i32, i32) {
    %c0_i32 = arith.constant 0 : i32
    %c0_i32_0 = arith.constant 0 : i32
    return %arg0, %c0_i32 : i32, i32
  }
  func.func @transform_4(%arg0: i32, %arg1: i32) -> (i32, i32) {
    %c0_i32 = arith.constant 0 : i32
    %c0_i32_0 = arith.constant 0 : i32
    %c0_i32_1 = arith.constant 0 : i32
    return %c0_i32, %c0_i32_0 : i32, i32
  }
  func.func @transform_5(%arg0: i32, %arg1: i32) -> (i32, i32) {
    %c0_i32 = arith.constant 0 : i32
    %c0_i32_0 = arith.constant 0 : i32
    %c0_i32_1 = arith.constant 0 : i32
    return %c0_i32, %c0_i32_0 : i32, i32
  }
  func.func @transform_6(%arg0: i32, %arg1: i32) -> (i32, i32) {
    %c0_i32 = arith.constant 0 : i32
    %c0_i32_0 = arith.constant 0 : i32
    return %arg0, %c0_i32 : i32, i32
  }
}

module attributes {stable_mosaic.version = 11 : i64} {
  func.func @_gcn_conv_kernel(%arg0: i32, %arg1: i32, %arg2: memref<8x1xf32, #tpu.memory_space<vmem>>, %arg3: memref<8x8xbf16, #tpu.memory_space<vmem>>, %arg4: memref<8x128xbf16, #tpu.memory_space<vmem>>, %arg5: memref<8x128xf32, #tpu.memory_space<vmem>>, %arg6: memref<128x128xf32, #tpu.memory_space<vmem>>, %arg7: memref<1x128xf32, #tpu.memory_space<vmem>>, %arg8: memref<8x128xf32, #tpu.memory_space<vmem>>) attributes {dimension_semantics = [#tpu.dimension_semantics<parallel>, #tpu.dimension_semantics<arbitrary>], iteration_bounds = array<i64: 1, 1>, scalar_prefetch = 0 : i64, scratch_operands = 0 : i64, tpu.core_type = #tpu.core_type<tc>, window_params = [{transform_indices = @transform_0, window_bounds = array<i64: 8, 1>}, {transform_indices = @transform_1, window_bounds = array<i64: 8, 8>}, {transform_indices = @transform_2, window_bounds = array<i64: 8, 128>}, {transform_indices = @transform_3, window_bounds = array<i64: 8, 128>}, {pipeline_mode = #tpu.pipeline_mode<synchronous>, transform_indices = @transform_4, window_bounds = array<i64: 128, 128>}, {pipeline_mode = #tpu.pipeline_mode<synchronous>, transform_indices = @transform_5, window_bounds = array<i64: 1, 128>}, {transform_indices = @transform_6, window_bounds = array<i64: 8, 128>}]} {
    %c0_i32 = arith.constant 0 : i32
    %0 = arith.cmpi eq, %arg1, %c0_i32 : i32
    %1 = arith.extui %0 : i1 to i32
    %c0_i32_0 = arith.constant 0 : i32
    %2 = arith.cmpi ne, %1, %c0_i32_0 : i32
    scf.if %2 {
      %cst_10 = arith.constant 0.000000e+00 : f32
      %12 = vector.broadcast %cst_10 : f32 to vector<8x128xf32>
      %c0_11 = arith.constant 0 : index
      %c0_12 = arith.constant 0 : index
      %13 = vector.load %arg8[%c0_11, %c0_12] : memref<8x128xf32, #tpu.memory_space<vmem>>, vector<8x128xf32>
      tpu.vector_store %arg8[%c0_11, %c0_12], %12 {strides = array<i32>} : memref<8x128xf32, #tpu.memory_space<vmem>>, vector<8x128xf32>,
    } else {
    }
    %c0 = arith.constant 0 : index
    %c0_1 = arith.constant 0 : index
    %3 = vector.load %arg8[%c0, %c0_1] : memref<8x128xf32, #tpu.memory_space<vmem>>, vector<8x128xf32>
    %c0_2 = arith.constant 0 : index
    %c0_3 = arith.constant 0 : index
    %4 = vector.load %arg3[%c0_2, %c0_3] : memref<8x8xbf16, #tpu.memory_space<vmem>>, vector<8x8xbf16>
    %c0_4 = arith.constant 0 : index
    %c0_5 = arith.constant 0 : index
    %5 = vector.load %arg4[%c0_4, %c0_5] : memref<8x128xbf16, #tpu.memory_space<vmem>>, vector<8x128xbf16>
    %cst = arith.constant dense<0.000000e+00> : vector<8x128xf32>
    %6 = tpu.matmul %4, %5, %cst {dimension_numbers = #tpu.dot_dimension_numbers<[1], [0], [0], [1], [0, 0, 1, 1], [], []>} : vector<8x8xbf16>, vector<8x128xbf16>, vector<8x128xf32> -> vector<8x128xf32>
    %7 = arith.addf %3, %6 : vector<8x128xf32>
    %c0_6 = arith.constant 0 : index
    %c0_7 = arith.constant 0 : index
    %8 = vector.load %arg8[%c0_6, %c0_7] : memref<8x128xf32, #tpu.memory_space<vmem>>, vector<8x128xf32>
    tpu.vector_store %arg8[%c0_6, %c0_7], %7 {strides = array<i32>} : memref<8x128xf32, #tpu.memory_space<vmem>>, vector<8x128xf32>,
    %c0_i32_8 = arith.constant 0 : i32
    %9 = arith.cmpi eq, %arg1, %c0_i32_8 : i32
    %10 = arith.extui %9 : i1 to i32
    %c0_i32_9 = arith.constant 0 : i32
    %11 = arith.cmpi ne, %10, %c0_i32_9 : i32
    scf.if %11 {
      %c0_10 = arith.constant 0 : index
      %c0_11 = arith.constant 0 : index
      %12 = vector.load %arg2[%c0_10, %c0_11] : memref<8x1xf32, #tpu.memory_space<vmem>>, vector<8x1xf32>
      %c0_12 = arith.constant 0 : index
      %c0_13 = arith.constant 0 : index
      %13 = vector.load %arg8[%c0_12, %c0_13] : memref<8x128xf32, #tpu.memory_space<vmem>>, vector<8x128xf32>
      %cst_14 = arith.constant 2.000000e+00 : f32
      %14 = vector.broadcast %cst_14 : f32 to vector<8x1xf32>
      %15 = arith.mulf %14, %12 : vector<8x1xf32>
      %c0_15 = arith.constant 0 : index
      %c0_16 = arith.constant 0 : index
      %16 = vector.load %arg5[%c0_15, %c0_16] : memref<8x128xf32, #tpu.memory_space<vmem>>, vector<8x128xf32>
      %17 = vector.broadcast %15 : vector<8x1xf32> to vector<8x128xf32>
      %18 = arith.mulf %17, %16 : vector<8x128xf32>
      %19 = arith.addf %13, %18 : vector<8x128xf32>
      %20 = vector.broadcast %12 : vector<8x1xf32> to vector<8x128xf32>
      %21 = arith.mulf %20, %19 : vector<8x128xf32>
      %c0_17 = arith.constant 0 : index
      %c0_18 = arith.constant 0 : index
      %22 = vector.load %arg6[%c0_17, %c0_18] : memref<128x128xf32, #tpu.memory_space<vmem>>, vector<128x128xf32>
      %cst_19 = arith.constant dense<0.000000e+00> : vector<8x128xf32>
      %23 = tpu.matmul %21, %22, %cst_19 {dimension_numbers = #tpu.dot_dimension_numbers<[1], [0], [0], [1], [0, 0, 1, 1], [], []>} : vector<8x128xf32>, vector<128x128xf32>, vector<8x128xf32> -> vector<8x128xf32>
      %c0_20 = arith.constant 0 : index
      %c0_21 = arith.constant 0 : index
      %24 = vector.load %arg7[%c0_20, %c0_21] : memref<1x128xf32, #tpu.memory_space<vmem>>, vector<1x128xf32>
      %25 = vector.broadcast %24 : vector<1x128xf32> to vector<8x128xf32>
      %26 = arith.addf %23, %25 : vector<8x128xf32>
      %cst_22 = arith.constant 0.000000e+00 : f32
      %27 = vector.broadcast %cst_22 : f32 to vector<8x128xf32>
      %28 = arith.maximumf %26, %27 : vector<8x128xf32>
      %c0_23 = arith.constant 0 : index
      %c0_24 = arith.constant 0 : index
      %29 = vector.load %arg8[%c0_23, %c0_24] : memref<8x128xf32, #tpu.memory_space<vmem>>, vector<8x128xf32>
      tpu.vector_store %arg8[%c0_23, %c0_24], %28 {strides = array<i32>} : memref<8x128xf32, #tpu.memory_space<vmem>>, vector<8x128xf32>,
    } else {
    }
    return
  }
  func.func @transform_0(%arg0: i32, %arg1: i32) -> (i32, i32) {
    %c0_i32 = arith.constant 0 : i32
    %c0_i32_0 = arith.constant 0 : i32
    return %arg0, %c0_i32 : i32, i32
  }
  func.func @transform_1(%arg0: i32, %arg1: i32) -> (i32, i32) {
    %c0_i32 = arith.constant 0 : i32
    return %arg0, %arg1 : i32, i32
  }
  func.func @transform_2(%arg0: i32, %arg1: i32) -> (i32, i32) {
    %c0_i32 = arith.constant 0 : i32
    %c0_i32_0 = arith.constant 0 : i32
    return %arg1, %c0_i32 : i32, i32
  }
  func.func @transform_3(%arg0: i32, %arg1: i32) -> (i32, i32) {
    %c0_i32 = arith.constant 0 : i32
    %c0_i32_0 = arith.constant 0 : i32
    return %arg0, %c0_i32 : i32, i32
  }
  func.func @transform_4(%arg0: i32, %arg1: i32) -> (i32, i32) {
    %c0_i32 = arith.constant 0 : i32
    %c0_i32_0 = arith.constant 0 : i32
    %c0_i32_1 = arith.constant 0 : i32
    return %c0_i32, %c0_i32_0 : i32, i32
  }
  func.func @transform_5(%arg0: i32, %arg1: i32) -> (i32, i32) {
    %c0_i32 = arith.constant 0 : i32
    %c0_i32_0 = arith.constant 0 : i32
    %c0_i32_1 = arith.constant 0 : i32
    return %c0_i32, %c0_i32_0 : i32, i32
  }
  func.func @transform_6(%arg0: i32, %arg1: i32) -> (i32, i32) {
    %c0_i32 = arith.constant 0 : i32
    %c0_i32_0 = arith.constant 0 : i32
    return %arg0, %c0_i32 : i32, i32
  }
}

module attributes {stable_mosaic.version = 11 : i64} {
  func.func @_gcn_conv_kernel(%arg0: i32, %arg1: i32, %arg2: memref<16x1xf32, #tpu.memory_space<vmem>>, %arg3: memref<16x16xbf16, #tpu.memory_space<vmem>>, %arg4: memref<16x128xbf16, #tpu.memory_space<vmem>>, %arg5: memref<16x128xf32, #tpu.memory_space<vmem>>, %arg6: memref<128x128xf32, #tpu.memory_space<vmem>>, %arg7: memref<1x128xf32, #tpu.memory_space<vmem>>, %arg8: memref<16x128xf32, #tpu.memory_space<vmem>>) attributes {dimension_semantics = [#tpu.dimension_semantics<parallel>, #tpu.dimension_semantics<arbitrary>], iteration_bounds = array<i64: 1, 1>, scalar_prefetch = 0 : i64, scratch_operands = 0 : i64, tpu.core_type = #tpu.core_type<tc>, window_params = [{transform_indices = @transform_0, window_bounds = array<i64: 16, 1>}, {transform_indices = @transform_1, window_bounds = array<i64: 16, 16>}, {transform_indices = @transform_2, window_bounds = array<i64: 16, 128>}, {transform_indices = @transform_3, window_bounds = array<i64: 16, 128>}, {pipeline_mode = #tpu.pipeline_mode<synchronous>, transform_indices = @transform_4, window_bounds = array<i64: 128, 128>}, {pipeline_mode = #tpu.pipeline_mode<synchronous>, transform_indices = @transform_5, window_bounds = array<i64: 1, 128>}, {transform_indices = @transform_6, window_bounds = array<i64: 16, 128>}]} {
    %c0_i32 = arith.constant 0 : i32
    %0 = arith.cmpi eq, %arg1, %c0_i32 : i32
    %1 = arith.extui %0 : i1 to i32
    %c0_i32_0 = arith.constant 0 : i32
    %2 = arith.cmpi ne, %1, %c0_i32_0 : i32
    scf.if %2 {
      %cst_10 = arith.constant 0.000000e+00 : f32
      %12 = vector.broadcast %cst_10 : f32 to vector<16x128xf32>
      %c0_11 = arith.constant 0 : index
      %c0_12 = arith.constant 0 : index
      %13 = vector.load %arg8[%c0_11, %c0_12] : memref<16x128xf32, #tpu.memory_space<vmem>>, vector<16x128xf32>
      tpu.vector_store %arg8[%c0_11, %c0_12], %12 {strides = array<i32>} : memref<16x128xf32, #tpu.memory_space<vmem>>, vector<16x128xf32>,
    } else {
    }
    %c0 = arith.constant 0 : index
    %c0_1 = arith.constant 0 : index
    %3 = vector.load %arg8[%c0, %c0_1] : memref<16x128xf32, #tpu.memory_space<vmem>>, vector<16x128xf32>
    %c0_2 = arith.constant 0 : index
    %c0_3 = arith.constant 0 : index
    %4 = vector.load %arg3[%c0_2, %c0_3] : memref<16x16xbf16, #tpu.memory_space<vmem>>, vector<16x16xbf16>
    %c0_4 = arith.constant 0 : index
    %c0_5 = arith.constant 0 : index
    %5 = vector.load %arg4[%c0_4, %c0_5] : memref<16x128xbf16, #tpu.memory_space<vmem>>, vector<16x128xbf16>
    %cst = arith.constant dense<0.000000e+00> : vector<16x128xf32>
    %6 = tpu.matmul %4, %5, %cst {dimension_numbers = #tpu.dot_dimension_numbers<[1], [0], [0], [1], [0, 0, 1, 1], [], []>} : vector<16x16xbf16>, vector<16x128xbf16>, vector<16x128xf32> -> vector<16x128xf32>
    %7 = arith.addf %3, %6 : vector<16x128xf32>
    %c0_6 = arith.constant 0 : index
    %c0_7 = arith.constant 0 : index
    %8 = vector.load %arg8[%c0_6, %c0_7] : memref<16x128xf32, #tpu.memory_space<vmem>>, vector<16x128xf32>
    tpu.vector_store %arg8[%c0_6, %c0_7], %7 {strides = array<i32>} : memref<16x128xf32, #tpu.memory_space<vmem>>, vector<16x128xf32>,
    %c0_i32_8 = arith.constant 0 : i32
    %9 = arith.cmpi eq, %arg1, %c0_i32_8 : i32
    %10 = arith.extui %9 : i1 to i32
    %c0_i32_9 = arith.constant 0 : i32
    %11 = arith.cmpi ne, %10, %c0_i32_9 : i32
    scf.if %11 {
      %c0_10 = arith.constant 0 : index
      %c0_11 = arith.constant 0 : index
      %12 = vector.load %arg2[%c0_10, %c0_11] : memref<16x1xf32, #tpu.memory_space<vmem>>, vector<16x1xf32>
      %c0_12 = arith.constant 0 : index
      %c0_13 = arith.constant 0 : index
      %13 = vector.load %arg8[%c0_12, %c0_13] : memref<16x128xf32, #tpu.memory_space<vmem>>, vector<16x128xf32>
      %cst_14 = arith.constant 2.000000e+00 : f32
      %14 = vector.broadcast %cst_14 : f32 to vector<16x1xf32>
      %15 = arith.mulf %14, %12 : vector<16x1xf32>
      %c0_15 = arith.constant 0 : index
      %c0_16 = arith.constant 0 : index
      %16 = vector.load %arg5[%c0_15, %c0_16] : memref<16x128xf32, #tpu.memory_space<vmem>>, vector<16x128xf32>
      %17 = vector.broadcast %15 : vector<16x1xf32> to vector<16x128xf32>
      %18 = arith.mulf %17, %16 : vector<16x128xf32>
      %19 = arith.addf %13, %18 : vector<16x128xf32>
      %20 = vector.broadcast %12 : vector<16x1xf32> to vector<16x128xf32>
      %21 = arith.mulf %20, %19 : vector<16x128xf32>
      %c0_17 = arith.constant 0 : index
      %c0_18 = arith.constant 0 : index
      %22 = vector.load %arg6[%c0_17, %c0_18] : memref<128x128xf32, #tpu.memory_space<vmem>>, vector<128x128xf32>
      %cst_19 = arith.constant dense<0.000000e+00> : vector<16x128xf32>
      %23 = tpu.matmul %21, %22, %cst_19 {dimension_numbers = #tpu.dot_dimension_numbers<[1], [0], [0], [1], [0, 0, 1, 1], [], []>} : vector<16x128xf32>, vector<128x128xf32>, vector<16x128xf32> -> vector<16x128xf32>
      %c0_20 = arith.constant 0 : index
      %c0_21 = arith.constant 0 : index
      %24 = vector.load %arg7[%c0_20, %c0_21] : memref<1x128xf32, #tpu.memory_space<vmem>>, vector<1x128xf32>
      %25 = vector.broadcast %24 : vector<1x128xf32> to vector<16x128xf32>
      %26 = arith.addf %23, %25 : vector<16x128xf32>
      %c0_22 = arith.constant 0 : index
      %c0_23 = arith.constant 0 : index
      %27 = vector.load %arg8[%c0_22, %c0_23] : memref<16x128xf32, #tpu.memory_space<vmem>>, vector<16x128xf32>
      tpu.vector_store %arg8[%c0_22, %c0_23], %26 {strides = array<i32>} : memref<16x128xf32, #tpu.memory_space<vmem>>, vector<16x128xf32>,
    } else {
    }
    return
  }
  func.func @transform_0(%arg0: i32, %arg1: i32) -> (i32, i32) {
    %c0_i32 = arith.constant 0 : i32
    %c0_i32_0 = arith.constant 0 : i32
    return %arg0, %c0_i32 : i32, i32
  }
  func.func @transform_1(%arg0: i32, %arg1: i32) -> (i32, i32) {
    %c0_i32 = arith.constant 0 : i32
    return %arg0, %arg1 : i32, i32
  }
  func.func @transform_2(%arg0: i32, %arg1: i32) -> (i32, i32) {
    %c0_i32 = arith.constant 0 : i32
    %c0_i32_0 = arith.constant 0 : i32
    return %arg1, %c0_i32 : i32, i32
  }
  func.func @transform_3(%arg0: i32, %arg1: i32) -> (i32, i32) {
    %c0_i32 = arith.constant 0 : i32
    %c0_i32_0 = arith.constant 0 : i32
    return %arg0, %c0_i32 : i32, i32
  }
  func.func @transform_4(%arg0: i32, %arg1: i32) -> (i32, i32) {
    %c0_i32 = arith.constant 0 : i32
    %c0_i32_0 = arith.constant 0 : i32
    %c0_i32_1 = arith.constant 0 : i32
    return %c0_i32, %c0_i32_0 : i32, i32
  }
  func.func @transform_5(%arg0: i32, %arg1: i32) -> (i32, i32) {
    %c0_i32 = arith.constant 0 : i32
    %c0_i32_0 = arith.constant 0 : i32
    %c0_i32_1 = arith.constant 0 : i32
    return %c0_i32, %c0_i32_0 : i32, i32
  }
  func.func @transform_6(%arg0: i32, %arg1: i32) -> (i32, i32) {
    %c0_i32 = arith.constant 0 : i32
    %c0_i32_0 = arith.constant 0 : i32
    return %arg0, %c0_i32 : i32, i32
  }
}

</mosaic_0001>

<llo_original>
// kernel: gcn_unet2_forward.14
$region0: #{gcn_unet2_forward.14}
  #allocation0 [shape = 'u32[]', space=smem, size = 0x4, offset = 0x4, fixed_abs, tag = 'smem constant byte address 0x4 - core index']
  #allocation1 [shape = 'u32[144,128]{1,0:T(1,128)}', space=vmem, size = 0x12000, scoped, tag = 'internal scratch']
  %s0 = inlined_call_operand.vmem [shape: f32[16,16], index: 0, kind: input, shape index: {}]
  %s1 = inlined_call_operand.vmem [shape: f32[16,1], index: 1, kind: output, shape index: {}]
  %s2 = sld [smem:[#allocation0]]
  $region22: #{gcn_unet2_forward.14} parent=0
    _
  %s4 = ssub.s32 1, %s2
  %s5 = scalar_select 0, %s4, %s2
  // Predicated region
  $region2: #{gcn_unet2_forward.14} parent=0 // pred_check
    _
  $region3: #{gcn_unet2_forward.14} parent=0 // pred_check_branch
    %7 = sbr.rel (0) target = $region5
  $region4: #{gcn_unet2_forward.14} parent=0 // pred_region
    _
  $region5: #{gcn_unet2_forward.14} parent=0 // pred_fallthru
    _
  %p8 = scmp.eq.s32.totalorder 0, 0
  // Predicated region
  $region6: #{gcn_unet2_forward.14} parent=0 // pred_check
    %p9 = pneg %p8
  $region7: #{gcn_unet2_forward.14} parent=0 // pred_check_branch
    %11 = sbr.rel (%p9) target = $region9
  $region8: #{gcn_unet2_forward.14} parent=0 // pred_region
    %vm12 = vcmask 7168
    %13 = vst.msk [vmem:[%s1] sm:$0xff] %vm12, 0.0
    %14 = vst.msk [vmem:[%s1 + $0x8] sm:$0xff] %vm12, 0.0
  $region9: #{gcn_unet2_forward.14} parent=0 // pred_fallthru
    _
  %v15 = vld [vmem:[%s1] sm:$0xff]
  %v16 = vld [vmem:[%s1 + $0x8] sm:$0xff]
  %v17 = vld [vmem:[%s0] sm:$0xff]
  %v18 = vld [vmem:[%s0 + $0x8] sm:$0xff]
  %vm19 = vcmask 130048
  %v20 = vsel %vm19, %v17, 0.0
  %21 = vadd.xlane.f32.xlu0 %v20
  %v22 = vpop.xlane.xlu0 %21
  %v23 = vsel %vm19, %v18, 0.0
  %24 = vadd.xlane.f32.xlu0 %v23
  %v25 = vpop.xlane.xlu0 %24
  %v26 = vadd.f32 %v15, %v22
  %v27 = vadd.f32 %v16, %v25
  %vm28 = vcmask 7168
  %29 = vst.msk [vmem:[%s1] sm:$0xff] %vm28, %v26
  %30 = vst.msk [vmem:[%s1 + $0x8] sm:$0xff] %vm28, %v27
  // Predicated region
  $region10: #{gcn_unet2_forward.14} parent=0 // pred_check
    %p31 = pneg %p8
  $region11: #{gcn_unet2_forward.14} parent=0 // pred_check_branch
    %33 = sbr.rel (%p31) target = $region13
  $region12: #{gcn_unet2_forward.14} parent=0 // pred_region
    %v34 = vld [vmem:[%s1] sm:$0xff]
    %v35 = vld [vmem:[%s1 + $0x8] sm:$0xff]
    %v36 = vadd.f32 %v34, 2.0
    %v37 = vadd.f32 %v35, 2.0
    %v38 = vrsqrt.pop %v36
    %v39 = vrsqrt.pop %v37
    %40 = vst.msk [vmem:[%s1] sm:$0xff] %vm28, %v38
    %41 = vst.msk [vmem:[%s1 + $0x8] sm:$0xff] %vm28, %v39
  $region13: #{gcn_unet2_forward.14} parent=0 // pred_fallthru
    _
  // Predicated region
  $region14: #{gcn_unet2_forward.14} parent=0 // pred_check
    _
  $region15: #{gcn_unet2_forward.14} parent=0 // pred_check_branch
    %43 = sbr.rel (0) target = $region17
  $region16: #{gcn_unet2_forward.14} parent=0 // pred_region
    _
  $region17: #{gcn_unet2_forward.14} parent=0 // pred_fallthru
    _
  // Predicated region
  $region18: #{gcn_unet2_forward.14} parent=0 // pred_check
    _
  $region19: #{gcn_unet2_forward.14} parent=0 // pred_check_branch
    %45 = sbr.rel (0) target = $region21
  $region20: #{gcn_unet2_forward.14} parent=0 // pred_region
    _
  $region21: #{gcn_unet2_forward.14} parent=0 // pred_fallthru
    _

// kernel: gcn_unet2_forward.16
$region0: #{gcn_unet2_forward.16}
  #allocation0 [shape = 'u32[]', space=smem, size = 0x4, offset = 0x4, fixed_abs, tag = 'smem constant byte address 0x4 - core index']
  #allocation1 [shape = 'u32[144,128]{1,0:T(1,128)}', space=vmem, size = 0x12000, scoped, tag = 'internal scratch']
  %s0 = inlined_call_operand.vmem [shape: bf16[16,16], index: 0, kind: input, shape index: {}, may-alias: {0,1}]
  %s1 = inlined_call_operand.vmem [shape: bf16[16,16], index: 1, kind: input, shape index: {}, may-alias: {0,1}]
  %s2 = inlined_call_operand.vmem [shape: f32[16,16], index: 2, kind: input, shape index: {}]
  %s3 = inlined_call_operand.vmem [shape: f32[16,16], index: 3, kind: output, shape index: {}]
  %s4 = sld [smem:[#allocation0]]
  $region30: #{gcn_unet2_forward.16} parent=0
    _
  %s6 = ssub.s32 1, %s4
  %s7 = scalar_select 0, %s6, %s4
  // Predicated region
  $region2: #{gcn_unet2_forward.16} parent=0 // pred_check
    _
  $region3: #{gcn_unet2_forward.16} parent=0 // pred_check_branch
    %9 = sbr.rel (0) target = $region5
  $region4: #{gcn_unet2_forward.16} parent=0 // pred_region
    _
  $region5: #{gcn_unet2_forward.16} parent=0 // pred_fallthru
    _
  // Predicated region
  $region6: #{gcn_unet2_forward.16} parent=0 // pred_check
    _
  $region7: #{gcn_unet2_forward.16} parent=0 // pred_check_branch
    %11 = sbr.rel (0) target = $region9
  $region8: #{gcn_unet2_forward.16} parent=0 // pred_region
    _
  $region9: #{gcn_unet2_forward.16} parent=0 // pred_fallthru
    _
  // Predicated region
  $region10: #{gcn_unet2_forward.16} parent=0 // pred_check
    _
  $region11: #{gcn_unet2_forward.16} parent=0 // pred_check_branch
    %13 = sbr.rel (0) target = $region13
  $region12: #{gcn_unet2_forward.16} parent=0 // pred_region
    _
  $region13: #{gcn_unet2_forward.16} parent=0 // pred_fallthru
    _
  %p15 = scmp.eq.s32.totalorder 0, 0
  // Predicated region
  $region14: #{gcn_unet2_forward.16} parent=0 // pred_check
    %p16 = pneg %p15
  $region15: #{gcn_unet2_forward.16} parent=0 // pred_check_branch
    %18 = sbr.rel (%p16) target = $region17
  $region16: #{gcn_unet2_forward.16} parent=0 // pred_region
    %v19 = vld [vmem:[%s2] sm:$0xff]
    %v20 = vld [vmem:[%s2 + $0x8] sm:$0xff]
    %v21 = vmul.f32 %v19, 2.0
    %v22 = vmul.f32 %v20, 2.0
    %vm23 = vcmask 130048
    %24 = vst.msk [vmem:[%s3] sm:$0xff] %vm23, %v21
    %25 = vst.msk [vmem:[%s3 + $0x8] sm:$0xff] %vm23, %v22
  $region17: #{gcn_unet2_forward.16} parent=0 // pred_fallthru
    _
  %v26 = vld [vmem:[%s3] sm:$0xff]
  %v27 = vld [vmem:[%s3 + $0x8] sm:$0xff]
  %v28 = vld [vmem:[%s0] sm:$0xf]
  %v29 = vld [vmem:[%s0 + $0x4] sm:$0xf]
  %v30 = vld [vmem:[%s1] sm:$0xf]
  %v31 = vld [vmem:[%s1 + $0x4] sm:$0xf]
  %v34 = vunpack.c.l.b16 %v28
  %v35 = vunpack.c.l.b16 %v29
  %v36 = vpack.c.b16 %v35, %v34
  %v39 = vunpack.c.l.b16 %v30
  %v40 = vunpack.c.l.b16 %v31
  %v41 = vpack.c.b16 %v40, %v39
  %vm43 = vcmask 130048
  %v45 = vsel %vm43, %v36, 0
  %47 = vmatprep.subr.bf16.mxu0 0
  %48 = vmatpush1.bf16.msra.mxu0 %v41
  %49 = vmatprep.subr.bf16.mxu0 0
  %50 = vmatpush1.bf16.msra.mxu0 0
  %51 = vmatprep.subr.bf16.mxu0 0
  %52 = vmatpush1.bf16.msra.mxu0 0
  %53 = vmatprep.subr.bf16.mxu0 0
  %54 = vmatpush1.bf16.msra.mxu0 0
  %55 = vmatprep.subr.bf16.mxu0 0
  %56 = vmatpush1.bf16.msra.mxu0 0
  %57 = vmatprep.subr.bf16.mxu0 0
  %58 = vmatpush1.bf16.msra.mxu0 0
  %59 = vmatprep.subr.bf16.mxu0 0
  %60 = vmatpush1.bf16.msra.mxu0 0
  %61 = vmatprep.subr.bf16.mxu0 0
  %62 = vmatpush1.bf16.msra.mxu0 0
  %63 = vmatprep.subr.bf16.mxu0 0
  %64 = vmatpush1.bf16.msra.mxu0 0
  %65 = vmatprep.subr.bf16.mxu0 0
  %66 = vmatpush1.bf16.msra.mxu0 0
  %67 = vmatprep.subr.bf16.mxu0 0
  %68 = vmatpush1.bf16.msra.mxu0 0
  %69 = vmatprep.subr.bf16.mxu0 0
  %70 = vmatpush1.bf16.msra.mxu0 0
  %71 = vmatprep.subr.bf16.mxu0 0
  %72 = vmatpush1.bf16.msra.mxu0 0
  %73 = vmatprep.subr.bf16.mxu0 0
  %74 = vmatpush1.bf16.msra.mxu0 0
  %75 = vmatprep.subr.bf16.mxu0 0
  %76 = vmatpush1.bf16.msra.mxu0 0
  %77 = vmatprep.subr.bf16.mxu0 0
  %78 = vmatpush1.bf16.msra.mxu0 0
  %79 = vmatprep.mubr.bf16.mxu0 0
  %80 = vmatmul.mubr.bf16.gmra.mrb[0].mxu0 %v45
  %v81 = vpop.f32.mrb[0].mxu0
  %v82 = vadd.f32 0.0, %v81
  %v83 = vpop.f32.mrb[0].mxu0
  %v84 = vpop.f32.mrb[0].mxu0
  %v85 = vadd.f32 0.0, %v84
  %v86 = vpop.f32.mrb[0].mxu0
  %87 = vdwg.mxu0
  %v88 = vadd.f32 %v26, %v82
  %v89 = vadd.f32 %v27, %v85
  %90 = vst.msk [vmem:[%s3] sm:$0xff] %vm43, %v88
  %91 = vst.msk [vmem:[%s3 + $0x8] sm:$0xff] %vm43, %v89
  %p92 = scmp.eq.s32.totalorder 0, 0
  %p93 = pnand %p15, %p92
  %p94 = pneg %p93
  // Predicated region
  $region18: #{gcn_unet2_forward.16} parent=0 // pred_check
    _
  $region19: #{gcn_unet2_forward.16} parent=0 // pred_check_branch
    %96 = sbr.rel (%p93) target = $region21
  $region20: #{gcn_unet2_forward.16} parent=0 // pred_region
    %v97 = vlaneseq
    %v98 = vshrl.u32 %v97, 7
    %v99 = vadd.s32 %v98, 8
    %v100 = vlaneseq
    %v101 = vand.u32 %v100, 127
    %vm102 = vcmp.eq.s32.totalorder %v98, %v101
    %vm103 = vcmp.eq.s32.totalorder %v99, %v101
    %v104 = vld [vmem:[%s3] sm:$0xff]
    %v105 = vld [vmem:[%s3 + $0x8] sm:$0xff]
    %v106 = vsel %vm102, 0.0, %v104
    %v107 = vsel %vm103, 0.0, %v105
    %108 = vst.msk [vmem:[%s3] sm:$0xff] %vm43, %v106
    %109 = vst.msk [vmem:[%s3 + $0x8] sm:$0xff] %vm43, %v107
  $region21: #{gcn_unet2_forward.16} parent=0 // pred_fallthru
    _
  // Predicated region
  $region22: #{gcn_unet2_forward.16} parent=0 // pred_check
    _
  $region23: #{gcn_unet2_forward.16} parent=0 // pred_check_branch
    %111 = sbr.rel (0) target = $region25
  $region24: #{gcn_unet2_forward.16} parent=0 // pred_region
    _
  $region25: #{gcn_unet2_forward.16} parent=0 // pred_fallthru
    _
  // Predicated region
  $region26: #{gcn_unet2_forward.16} parent=0 // pred_check
    _
  $region27: #{gcn_unet2_forward.16} parent=0 // pred_check_branch
    %113 = sbr.rel (0) target = $region29
  $region28: #{gcn_unet2_forward.16} parent=0 // pred_region
    _
  $region29: #{gcn_unet2_forward.16} parent=0 // pred_fallthru
    _

// kernel: gcn_unet2_forward.15
$region0: #{gcn_unet2_forward.15}
  #allocation0 [shape = 'u32[]', space=smem, size = 0x4, offset = 0x4, fixed_abs, tag = 'smem constant byte address 0x4 - core index']
  #allocation1 [shape = 'u32[144,128]{1,0:T(1,128)}', space=vmem, size = 0x12000, scoped, tag = 'internal scratch']
  %s0 = inlined_call_operand.vmem [shape: f32[16,1], index: 0, kind: input, shape index: {}]
  %s1 = inlined_call_operand.vmem [shape: bf16[16,16], index: 1, kind: input, shape index: {}]
  %s2 = inlined_call_operand.vmem [shape: bf16[16,128], index: 2, kind: input, shape index: {}]
  %s3 = inlined_call_operand.vmem [shape: f32[16,128], index: 3, kind: input, shape index: {}]
  %s4 = inlined_call_operand.vmem [shape: f32[128,128], index: 4, kind: input, shape index: {}]
  %s5 = inlined_call_operand.vmem [shape: f32[1,128], index: 5, kind: input, shape index: {}]
  %s6 = inlined_call_operand.vmem [shape: f32[1,128], index: 6, kind: input, shape index: {}]
  %s7 = inlined_call_operand.vmem [shape: f32[16,128], index: 7, kind: output, shape index: {0}]
  %s8 = inlined_call_operand.vmem [shape: f32[1,16], index: 8, kind: output, shape index: {1}]
  %9 = xla_tuple %s7, %s8
  %s10 = sld [smem:[#allocation0]]
  $region54: #{gcn_unet2_forward.15} parent=0
    _
  %s12 = ssub.s32 1, %s10
  %s13 = scalar_select 0, %s12, %s10
  // Predicated region
  $region2: #{gcn_unet2_forward.15} parent=0 // pred_check
    _
  $region3: #{gcn_unet2_forward.15} parent=0 // pred_check_branch
    %15 = sbr.rel (0) target = $region5
  $region4: #{gcn_unet2_forward.15} parent=0 // pred_region
    _
  $region5: #{gcn_unet2_forward.15} parent=0 // pred_fallthru
    _
  // Predicated region
  $region6: #{gcn_unet2_forward.15} parent=0 // pred_check
    _
  $region7: #{gcn_unet2_forward.15} parent=0 // pred_check_branch
    %17 = sbr.rel (0) target = $region9
  $region8: #{gcn_unet2_forward.15} parent=0 // pred_region
    _
  $region9: #{gcn_unet2_forward.15} parent=0 // pred_fallthru
    _
  // Predicated region
  $region10: #{gcn_unet2_forward.15} parent=0 // pred_check
    _
  $region11: #{gcn_unet2_forward.15} parent=0 // pred_check_branch
    %19 = sbr.rel (0) target = $region13
  $region12: #{gcn_unet2_forward.15} parent=0 // pred_region
    _
  $region13: #{gcn_unet2_forward.15} parent=0 // pred_fallthru
    _
  // Predicated region
  $region14: #{gcn_unet2_forward.15} parent=0 // pred_check
    _
  $region15: #{gcn_unet2_forward.15} parent=0 // pred_check_branch
    %21 = sbr.rel (0) target = $region17
  $region16: #{gcn_unet2_forward.15} parent=0 // pred_region
    _
  $region17: #{gcn_unet2_forward.15} parent=0 // pred_fallthru
    _
  // Predicated region
  $region18: #{gcn_unet2_forward.15} parent=0 // pred_check
    _
  $region19: #{gcn_unet2_forward.15} parent=0 // pred_check_branch
    %23 = sbr.rel (0) target = $region21
  $region20: #{gcn_unet2_forward.15} parent=0 // pred_region
    _
  $region21: #{gcn_unet2_forward.15} parent=0 // pred_fallthru
    _
  // Predicated region
  $region22: #{gcn_unet2_forward.15} parent=0 // pred_check
    _
  $region23: #{gcn_unet2_forward.15} parent=0 // pred_check_branch
    %25 = sbr.rel (0) target = $region25
  $region24: #{gcn_unet2_forward.15} parent=0 // pred_region
    _
  $region25: #{gcn_unet2_forward.15} parent=0 // pred_fallthru
    _
  // Predicated region
  $region26: #{gcn_unet2_forward.15} parent=0 // pred_check
    _
  $region27: #{gcn_unet2_forward.15} parent=0 // pred_check_branch
    %27 = sbr.rel (0) target = $region29
  $region28: #{gcn_unet2_forward.15} parent=0 // pred_region
    _
  $region29: #{gcn_unet2_forward.15} parent=0 // pred_fallthru
    _
  %p29 = scmp.eq.s32.totalorder 0, 0
  // Predicated region
  $region30: #{gcn_unet2_forward.15} parent=0 // pred_check
    %p30 = pneg %p29
  $region31: #{gcn_unet2_forward.15} parent=0 // pred_check_branch
    %32 = sbr.rel (%p30) target = $region33
  $region32: #{gcn_unet2_forward.15} parent=0 // pred_region
    %33 = vst [vmem:[%s7] sm:$0xff] 0.0
    %34 = vst [vmem:[%s7 + $0x8] sm:$0xff] 0.0
  $region33: #{gcn_unet2_forward.15} parent=0 // pred_fallthru
    _
  %v35 = vld [vmem:[%s7] sm:$0xff]
  %v36 = vld [vmem:[%s7 + $0x8] sm:$0xff]
  %v37 = vld [vmem:[%s1] sm:$0xf]
  %v38 = vld [vmem:[%s1 + $0x4] sm:$0xf]
  %v39 = vld [vmem:[%s2] sm:$0xf]
  %v40 = vld [vmem:[%s2 + $0x4] sm:$0xf]
  %v43 = vunpack.c.l.b16 %v37
  %v44 = vunpack.c.l.b16 %v38
  %v45 = vpack.c.b16 %v44, %v43
  %v48 = vunpack.c.l.b16 %v39
  %v49 = vunpack.c.l.b16 %v40
  %v50 = vpack.c.b16 %v49, %v48
  %vm52 = vcmask 130048
  %v54 = vsel %vm52, %v45, 0
  %56 = vmatprep.subr.bf16.mxu0 0
  %57 = vmatpush1.bf16.msra.mxu0 %v50
  %58 = vmatprep.subr.bf16.mxu0 0
  %59 = vmatpush1.bf16.msra.mxu0 0
  %60 = vmatprep.subr.bf16.mxu0 0
  %61 = vmatpush1.bf16.msra.mxu0 0
  %62 = vmatprep.subr.bf16.mxu0 0
  %63 = vmatpush1.bf16.msra.mxu0 0
  %64 = vmatprep.subr.bf16.mxu0 0
  %65 = vmatpush1.bf16.msra.mxu0 0
  %66 = vmatprep.subr.bf16.mxu0 0
  %67 = vmatpush1.bf16.msra.mxu0 0
  %68 = vmatprep.subr.bf16.mxu0 0
  %69 = vmatpush1.bf16.msra.mxu0 0
  %70 = vmatprep.subr.bf16.mxu0 0
  %71 = vmatpush1.bf16.msra.mxu0 0
  %72 = vmatprep.subr.bf16.mxu0 0
  %73 = vmatpush1.bf16.msra.mxu0 0
  %74 = vmatprep.subr.bf16.mxu0 0
  %75 = vmatpush1.bf16.msra.mxu0 0
  %76 = vmatprep.subr.bf16.mxu0 0
  %77 = vmatpush1.bf16.msra.mxu0 0
  %78 = vmatprep.subr.bf16.mxu0 0
  %79 = vmatpush1.bf16.msra.mxu0 0
  %80 = vmatprep.subr.bf16.mxu0 0
  %81 = vmatpush1.bf16.msra.mxu0 0
  %82 = vmatprep.subr.bf16.mxu0 0
  %83 = vmatpush1.bf16.msra.mxu0 0
  %84 = vmatprep.subr.bf16.mxu0 0
  %85 = vmatpush1.bf16.msra.mxu0 0
  %86 = vmatprep.subr.bf16.mxu0 0
  %87 = vmatpush1.bf16.msra.mxu0 0
  %88 = vmatprep.mubr.bf16.mxu0 0
  %89 = vmatmul.mubr.bf16.gmra.mrb[0].mxu0 %v54
  %v90 = vpop.f32.mrb[0].mxu0
  %v91 = vadd.f32 0.0, %v90
  %v92 = vpop.f32.mrb[0].mxu0
  %v93 = vpop.f32.mrb[0].mxu0
  %v94 = vadd.f32 0.0, %v93
  %v95 = vpop.f32.mrb[0].mxu0
  %96 = vdwg.mxu0
  %v97 = vadd.f32 %v35, %v91
  %v98 = vadd.f32 %v36, %v94
  %99 = vst [vmem:[%s7] sm:$0xff] %v97
  %100 = vst [vmem:[%s7 + $0x8] sm:$0xff] %v98
  // Predicated region
  $region34: #{gcn_unet2_forward.15} parent=0 // pred_check
    %p101 = pneg %p29
  $region35: #{gcn_unet2_forward.15} parent=0 // pred_check_branch
    %103 = sbr.rel (%p101) target = $region37
  $region36: #{gcn_unet2_forward.15} parent=0 // pred_region
    %v104 = vld [vmem:[%s0] sm:$0xff]
    %v105 = vld [vmem:[%s0 + $0x8] sm:$0xff]
    %v106 = vld [vmem:[%s7] sm:$0xff]
    %v107 = vld [vmem:[%s7 + $0x8] sm:$0xff]
    %v108 = vmul.f32 %v104, 2.0
    %v109 = vmul.f32 %v105, 2.0
    %v110 = vld [vmem:[%s3] sm:$0xff]
    %v111 = vld [vmem:[%s3 + $0x8] sm:$0xff]
    %113 = vset.pattern.permute.xlu0 0
    %114 = vperm.xlu0 %113, %v108
    %v115 = vpop.permute.xlu0 %114
    %118 = vset.pattern.permute.xlu0 0
    %119 = vperm.xlu0 %118, %v109
    %v120 = vpop.permute.xlu0 %119
    %v122 = vmul.f32 %v115, %v110
    %v123 = vmul.f32 %v120, %v111
    %v124 = vadd.f32 %v106, %v122
    %v125 = vadd.f32 %v107, %v123
    %127 = vset.pattern.permute.xlu0 0
    %128 = vperm.xlu0 %127, %v104
    %v129 = vpop.permute.xlu0 %128
    %132 = vset.pattern.permute.xlu0 0
    %133 = vperm.xlu0 %132, %v105
    %v134 = vpop.permute.xlu0 %133
    %v136 = vmul.f32 %v129, %v124
    %v137 = vmul.f32 %v134, %v125
    %v138 = vld [vmem:[%s4] sm:$0xff]
    %v139 = vld [vmem:[%s4 + $0x8] sm:$0xff]
    %v140 = vld [vmem:[%s4 + $0x10] sm:$0xff]
    %v141 = vld [vmem:[%s4 + $0x18] sm:$0xff]
    %v142 = vld [vmem:[%s4 + $0x20] sm:$0xff]
    %v143 = vld [vmem:[%s4 + $0x28] sm:$0xff]
    %v144 = vld [vmem:[%s4 + $0x30] sm:$0xff]
    %v145 = vld [vmem:[%s4 + $0x38] sm:$0xff]
    %v146 = vld [vmem:[%s4 + $0x40] sm:$0xff]
    %v147 = vld [vmem:[%s4 + $0x48] sm:$0xff]
    %v148 = vld [vmem:[%s4 + $0x50] sm:$0xff]
    %v149 = vld [vmem:[%s4 + $0x58] sm:$0xff]
    %v150 = vld [vmem:[%s4 + $0x60] sm:$0xff]
    %v151 = vld [vmem:[%s4 + $0x68] sm:$0xff]
    %v152 = vld [vmem:[%s4 + $0x70] sm:$0xff]
    %v153 = vld [vmem:[%s4 + $0x78] sm:$0xff]
    %v154 = vld [vmem:[%s5] sm:$0x1]
    %v156 = vlaneseq
    %v157 = vshrl.u32 %v156, 7
    %v158 = vsub.s32 0, %v157
    %v159 = vrot.slane %v154, %v158
    %161 = vmatprep.subr.mxu0 0.0
    %162 = vmatpush1.msra.mxu0 %v138
    %163 = vmatprep.subr.mxu0 0.0
    %164 = vmatpush1.msra.mxu0 %v139
    %165 = vmatprep.subr.mxu0 0.0
    %166 = vmatpush1.msra.mxu0 %v140
    %167 = vmatprep.subr.mxu0 0.0
    %168 = vmatpush1.msra.mxu0 %v141
    %169 = vmatprep.subr.mxu0 0.0
    %170 = vmatpush1.msra.mxu0 %v142
    %171 = vmatprep.subr.mxu0 0.0
    %172 = vmatpush1.msra.mxu0 %v143
    %173 = vmatprep.subr.mxu0 0.0
    %174 = vmatpush1.msra.mxu0 %v144
    %175 = vmatprep.subr.mxu0 0.0
    %176 = vmatpush1.msra.mxu0 %v145
    %177 = vmatprep.subr.mxu0 0.0
    %178 = vmatpush1.msra.mxu0 %v146
    %179 = vmatprep.subr.mxu0 0.0
    %180 = vmatpush1.msra.mxu0 %v147
    %181 = vmatprep.subr.mxu0 0.0
    %182 = vmatpush1.msra.mxu0 %v148
    %183 = vmatprep.subr.mxu0 0.0
    %184 = vmatpush1.msra.mxu0 %v149
    %185 = vmatprep.subr.mxu0 0.0
    %186 = vmatpush1.msra.mxu0 %v150
    %187 = vmatprep.subr.mxu0 0.0
    %188 = vmatpush1.msra.mxu0 %v151
    %189 = vmatprep.subr.mxu0 0.0
    %190 = vmatpush1.msra.mxu0 %v152
    %191 = vmatprep.subr.mxu0 0.0
    %192 = vmatpush1.msra.mxu0 %v153
    %193 = vmatprep.subr.mxu0 0.0
    %194 = vmatpush1.msra.mxu0 0.0
    %195 = vmatprep.subr.mxu0 0.0
    %196 = vmatpush1.msra.mxu0 0.0
    %197 = vmatprep.subr.mxu0 0.0
    %198 = vmatpush1.msra.mxu0 0.0
    %199 = vmatprep.subr.mxu0 0.0
    %200 = vmatpush1.msra.mxu0 0.0
    %201 = vmatprep.subr.mxu0 0.0
    %202 = vmatpush1.msra.mxu0 0.0
    %203 = vmatprep.subr.mxu0 0.0
    %204 = vmatpush1.msra.mxu0 0.0
    %205 = vmatprep.subr.mxu0 0.0
    %206 = vmatpush1.msra.mxu0 0.0
    %207 = vmatprep.subr.mxu0 0.0
    %208 = vmatpush1.msra.mxu0 0.0
    %209 = vmatprep.subr.mxu0 0.0
    %210 = vmatpush1.msra.mxu0 0.0
    %211 = vmatprep.subr.mxu0 0.0
    %212 = vmatpush1.msra.mxu0 0.0
    %213 = vmatprep.subr.mxu0 0.0
    %214 = vmatpush1.msra.mxu0 0.0
    %215 = vmatprep.subr.mxu0 0.0
    %216 = vmatpush1.msra.mxu0 0.0
    %217 = vmatprep.subr.mxu0 0.0
    %218 = vmatpush1.msra.mxu0 0.0
    %219 = vmatprep.subr.mxu0 0.0
    %220 = vmatpush1.msra.mxu0 0.0
    %221 = vmatprep.subr.mxu0 0.0
    %222 = vmatpush1.msra.mxu0 0.0
    %223 = vmatprep.subr.mxu0 0.0
    %224 = vmatpush1.msra.mxu0 0.0
    %225 = vmatprep.mubr.f32.mxu0 0.0
    %226 = vmatmul.mubr.f32.gmra.mrb[0].mxu0 %v136
    %v227 = vpop.f32.mrb[0].mxu0
    %v228 = vadd.f32 %v159, %v227
    %v229 = vpop.f32.mrb[0].mxu0
    %230 = vmatprep.mubr.f32.mxu0 0.0
    %231 = vmatmul.mubr.f32.gmra.mrb[0].mxu0 %v137
    %v232 = vpop.f32.mrb[0].mxu0
    %v233 = vadd.f32 %v159, %v232
    %v234 = vpop.f32.mrb[0].mxu0
    %235 = vdwg.mxu0
    %v236 = vmax.f32 %v228, 0.0
    %v237 = vmax.f32 %v233, 0.0
    %238 = vst [vmem:[%s7] sm:$0xff] %v236
    %239 = vst [vmem:[%s7 + $0x8] sm:$0xff] %v237
    %v240 = vld [vmem:[%s6] sm:$0x1]
    %v241 = vmul.f32 %v240, %v240
    %vm242 = vcmask 1040384
    %v243 = vsel %vm242, %v241, 0.0
    %244 = vadd.xlane.f32.xlu0 %v243
    %v245 = vpop.xlane.xlu0 %244
    %v246 = vrot.slane %v245, 4
    %v247 = vadd.f32 %v245, %v246
    %v248 = vrot.slane %v247, 2
    %v249 = vadd.f32 %v247, %v248
    %v250 = vrot.slane %v249, 1
    %v251 = vadd.f32 %v249, %v250
    %s252 = vtos %v251
    %v253 = vstv %s252
    %v254 = vrsqrt.pop %v253
    %s255 = vtos %v254
    %256 = vmatprep.subr.mxu0 0.0
    %257 = vmatpush1.xpose.msra.mxu0 %v236
    %258 = vmatprep.subr.mxu0 0.0
    %259 = vmatpush1.xpose.msra.mxu0 %v237
    %260 = vmatprep.subr.mxu0 0.0
    %261 = vmatpush1.xpose.msra.mxu0 0.0
    %262 = vmatprep.subr.mxu0 0.0
    %263 = vmatpush1.xpose.msra.mxu0 0.0
    %264 = vmatprep.subr.mxu0 0.0
    %265 = vmatpush1.xpose.msra.mxu0 0.0
    %266 = vmatprep.subr.mxu0 0.0
    %267 = vmatpush1.xpose.msra.mxu0 0.0
    %268 = vmatprep.subr.mxu0 0.0
    %269 = vmatpush1.xpose.msra.mxu0 0.0
    %270 = vmatprep.subr.mxu0 0.0
    %271 = vmatpush1.xpose.msra.mxu0 0.0
    %272 = vmatprep.subr.mxu0 0.0
    %273 = vmatpush1.xpose.msra.mxu0 0.0
    %274 = vmatprep.subr.mxu0 0.0
    %275 = vmatpush1.xpose.msra.mxu0 0.0
    %276 = vmatprep.subr.mxu0 0.0
    %277 = vmatpush1.xpose.msra.mxu0 0.0
    %278 = vmatprep.subr.mxu0 0.0
    %279 = vmatpush1.xpose.msra.mxu0 0.0
    %280 = vmatprep.subr.mxu0 0.0
    %281 = vmatpush1.xpose.msra.mxu0 0.0
    %282 = vmatprep.subr.mxu0 0.0
    %283 = vmatpush1.xpose.msra.mxu0 0.0
    %284 = vmatprep.subr.mxu0 0.0
    %285 = vmatpush1.xpose.msra.mxu0 0.0
    %286 = vmatprep.subr.mxu0 0.0
    %287 = vmatpush1.xpose.msra.mxu0 0.0
    %288 = vmatprep.subr.mxu0 0.0
    %289 = vmatpush1.xpose.msra.mxu0 0.0
    %290 = vmatprep.subr.mxu0 0.0
    %291 = vmatpush1.xpose.msra.mxu0 0.0
    %292 = vmatprep.subr.mxu0 0.0
    %293 = vmatpush1.xpose.msra.mxu0 0.0
    %294 = vmatprep.subr.mxu0 0.0
    %295 = vmatpush1.xpose.msra.mxu0 0.0
    %296 = vmatprep.subr.mxu0 0.0
    %297 = vmatpush1.xpose.msra.mxu0 0.0
    %298 = vmatprep.subr.mxu0 0.0
    %299 = vmatpush1.xpose.msra.mxu0 0.0
    %300 = vmatprep.subr.mxu0 0.0
    %301 = vmatpush1.xpose.msra.mxu0 0.0
    %302 = vmatprep.subr.mxu0 0.0
    %303 = vmatpush1.xpose.msra.mxu0 0.0
    %304 = vmatprep.subr.mxu0 0.0
    %305 = vmatpush1.xpose.msra.mxu0 0.0
    %306 = vmatprep.subr.mxu0 0.0
    %307 = vmatpush1.xpose.msra.mxu0 0.0
    %308 = vmatprep.subr.mxu0 0.0
    %309 = vmatpush1.xpose.msra.mxu0 0.0
    %310 = vmatprep.subr.mxu0 0.0
    %311 = vmatpush1.xpose.msra.mxu0 0.0
    %312 = vmatprep.subr.mxu0 0.0
    %313 = vmatpush1.xpose.msra.mxu0 0.0
    %314 = vmatprep.subr.mxu0 0.0
    %315 = vmatpush1.xpose.msra.mxu0 0.0
    %316 = vmatprep.subr.mxu0 0.0
    %317 = vmatpush1.xpose.msra.mxu0 0.0
    %318 = vmatprep.subr.mxu0 0.0
    %319 = vmatpush1.xpose.msra.mxu0 0.0
    %320 = vmatprep.mubr.f32.mxu0 0.0
    %321 = vmatmul.mubr.f32.gmra.mrb[0].mxu0 %v240
    %v322 = vpop.f32.mrb[0].mxu0
    %v323 = vadd.f32 0.0, %v322
    %v324 = vpop.f32.mrb[0].mxu0
    %325 = vdwg.mxu0
    %v326 = vstv %s255
    %v327 = vmul.f32 %v323, %v326
    %v328 = vtanh.pop %v327
    %vm329 = vcmask 122880
    %330 = vst.msk [vmem:[%s8] sm:$0x1] %vm329, %v328
  $region37: #{gcn_unet2_forward.15} parent=0 // pred_fallthru
    _
  // Predicated region
  $region38: #{gcn_unet2_forward.15} parent=0 // pred_check
    _
  $region39: #{gcn_unet2_forward.15} parent=0 // pred_check_branch
    %332 = sbr.rel (0) target = $region41
  $region40: #{gcn_unet2_forward.15} parent=0 // pred_region
    _
  $region41: #{gcn_unet2_forward.15} parent=0 // pred_fallthru
    _
  // Predicated region
  $region42: #{gcn_unet2_forward.15} parent=0 // pred_check
    _
  $region43: #{gcn_unet2_forward.15} parent=0 // pred_check_branch
    %334 = sbr.rel (0) target = $region45
  $region44: #{gcn_unet2_forward.15} parent=0 // pred_region
    _
  $region45: #{gcn_unet2_forward.15} parent=0 // pred_fallthru
    _
  // Predicated region
  $region46: #{gcn_unet2_forward.15} parent=0 // pred_check
    _
  $region47: #{gcn_unet2_forward.15} parent=0 // pred_check_branch
    %336 = sbr.rel (0) target = $region49
  $region48: #{gcn_unet2_forward.15} parent=0 // pred_region
    _
  $region49: #{gcn_unet2_forward.15} parent=0 // pred_fallthru
    _
  // Predicated region
  $region50: #{gcn_unet2_forward.15} parent=0 // pred_check
    _
  $region51: #{gcn_unet2_forward.15} parent=0 // pred_check_branch
    %338 = sbr.rel (0) target = $region53
  $region52: #{gcn_unet2_forward.15} parent=0 // pred_region
    _
  $region53: #{gcn_unet2_forward.15} parent=0 // pred_fallthru
    _

// kernel: gcn_unet2_forward.17
$region0: #{gcn_unet2_forward.17}
  #allocation0 [shape = 'u32[]', space=smem, size = 0x4, offset = 0x4, fixed_abs, tag = 'smem constant byte address 0x4 - core index']
  #allocation1 [shape = 'u32[144,128]{1,0:T(1,128)}', space=vmem, size = 0x12000, scoped, tag = 'internal scratch']
  %s0 = inlined_call_operand.vmem [shape: f32[8,8], index: 0, kind: input, shape index: {}]
  %s1 = inlined_call_operand.vmem [shape: f32[8,1], index: 1, kind: output, shape index: {}]
  %s2 = sld [smem:[#allocation0]]
  $region22: #{gcn_unet2_forward.17} parent=0
    _
  %s4 = ssub.s32 1, %s2
  %s5 = scalar_select 0, %s4, %s2
  // Predicated region
  $region2: #{gcn_unet2_forward.17} parent=0 // pred_check
    _
  $region3: #{gcn_unet2_forward.17} parent=0 // pred_check_branch
    %7 = sbr.rel (0) target = $region5
  $region4: #{gcn_unet2_forward.17} parent=0 // pred_region
    _
  $region5: #{gcn_unet2_forward.17} parent=0 // pred_fallthru
    _
  %p8 = scmp.eq.s32.totalorder 0, 0
  // Predicated region
  $region6: #{gcn_unet2_forward.17} parent=0 // pred_check
    %p9 = pneg %p8
  $region7: #{gcn_unet2_forward.17} parent=0 // pred_check_branch
    %11 = sbr.rel (%p9) target = $region9
  $region8: #{gcn_unet2_forward.17} parent=0 // pred_region
    %vm12 = vcmask 7168
    %13 = vst.msk [vmem:[%s1] sm:$0xff] %vm12, 0.0
  $region9: #{gcn_unet2_forward.17} parent=0 // pred_fallthru
    _
  %v14 = vld [vmem:[%s1] sm:$0xff]
  %v15 = vld [vmem:[%s0] sm:$0xff]
  %vm16 = vcmask 64512
  %v17 = vsel %vm16, %v15, 0.0
  %18 = vadd.xlane.f32.xlu0 %v17
  %v19 = vpop.xlane.xlu0 %18
  %v20 = vadd.f32 %v14, %v19
  %vm21 = vcmask 7168
  %22 = vst.msk [vmem:[%s1] sm:$0xff] %vm21, %v20
  // Predicated region
  $region10: #{gcn_unet2_forward.17} parent=0 // pred_check
    %p23 = pneg %p8
  $region11: #{gcn_unet2_forward.17} parent=0 // pred_check_branch
    %25 = sbr.rel (%p23) target = $region13
  $region12: #{gcn_unet2_forward.17} parent=0 // pred_region
    %v26 = vld [vmem:[%s1] sm:$0xff]
    %v27 = vadd.f32 %v26, 2.0
    %v28 = vrsqrt.pop %v27
    %29 = vst.msk [vmem:[%s1] sm:$0xff] %vm21, %v28
  $region13: #{gcn_unet2_forward.17} parent=0 // pred_fallthru
    _
  // Predicated region
  $region14: #{gcn_unet2_forward.17} parent=0 // pred_check
    _
  $region15: #{gcn_unet2_forward.17} parent=0 // pred_check_branch
    %31 = sbr.rel (0) target = $region17
  $region16: #{gcn_unet2_forward.17} parent=0 // pred_region
    _
  $region17: #{gcn_unet2_forward.17} parent=0 // pred_fallthru
    _
  // Predicated region
  $region18: #{gcn_unet2_forward.17} parent=0 // pred_check
    _
  $region19: #{gcn_unet2_forward.17} parent=0 // pred_check_branch
    %33 = sbr.rel (0) target = $region21
  $region20: #{gcn_unet2_forward.17} parent=0 // pred_region
    _
  $region21: #{gcn_unet2_forward.17} parent=0 // pred_fallthru
    _

// kernel: gcn_unet2_forward.19
$region0: #{gcn_unet2_forward.19}
  #allocation0 [shape = 'u32[]', space=smem, size = 0x4, offset = 0x4, fixed_abs, tag = 'smem constant byte address 0x4 - core index']
  #allocation1 [shape = 'u32[144,128]{1,0:T(1,128)}', space=vmem, size = 0x12000, scoped, tag = 'internal scratch']
  %s0 = inlined_call_operand.vmem [shape: bf16[8,8], index: 0, kind: input, shape index: {}, may-alias: {0,1}]
  %s1 = inlined_call_operand.vmem [shape: bf16[8,8], index: 1, kind: input, shape index: {}, may-alias: {0,1}]
  %s2 = inlined_call_operand.vmem [shape: f32[8,8], index: 2, kind: input, shape index: {}]
  %s3 = inlined_call_operand.vmem [shape: f32[8,8], index: 3, kind: output, shape index: {}]
  %s4 = sld [smem:[#allocation0]]
  $region30: #{gcn_unet2_forward.19} parent=0
    _
  %s6 = ssub.s32 1, %s4
  %s7 = scalar_select 0, %s6, %s4
  // Predicated region
  $region2: #{gcn_unet2_forward.19} parent=0 // pred_check
    _
  $region3: #{gcn_unet2_forward.19} parent=0 // pred_check_branch
    %9 = sbr.rel (0) target = $region5
  $region4: #{gcn_unet2_forward.19} parent=0 // pred_region
    _
  $region5: #{gcn_unet2_forward.19} parent=0 // pred_fallthru
    _
  // Predicated region
  $region6: #{gcn_unet2_forward.19} parent=0 // pred_check
    _
  $region7: #{gcn_unet2_forward.19} parent=0 // pred_check_branch
    %11 = sbr.rel (0) target = $region9
  $region8: #{gcn_unet2_forward.19} parent=0 // pred_region
    _
  $region9: #{gcn_unet2_forward.19} parent=0 // pred_fallthru
    _
  // Predicated region
  $region10: #{gcn_unet2_forward.19} parent=0 // pred_check
    _
  $region11: #{gcn_unet2_forward.19} parent=0 // pred_check_branch
    %13 = sbr.rel (0) target = $region13
  $region12: #{gcn_unet2_forward.19} parent=0 // pred_region
    _
  $region13: #{gcn_unet2_forward.19} parent=0 // pred_fallthru
    _
  %p15 = scmp.eq.s32.totalorder 0, 0
  // Predicated region
  $region14: #{gcn_unet2_forward.19} parent=0 // pred_check
    %p16 = pneg %p15
  $region15: #{gcn_unet2_forward.19} parent=0 // pred_check_branch
    %18 = sbr.rel (%p16) target = $region17
  $region16: #{gcn_unet2_forward.19} parent=0 // pred_region
    %v19 = vld [vmem:[%s2] sm:$0xff]
    %v20 = vmul.f32 %v19, 2.0
    %vm21 = vcmask 64512
    %22 = vst.msk [vmem:[%s3] sm:$0xff] %vm21, %v20
  $region17: #{gcn_unet2_forward.19} parent=0 // pred_fallthru
    _
  %v23 = vld [vmem:[%s3] sm:$0xff]
  %v24 = vld [vmem:[%s0] sm:$0xf]
  %v25 = vld [vmem:[%s1] sm:$0xf]
  %vm26 = vcmask 64512
  %v28 = vsel %vm26, %v24, 0
  %vm30 = vcmask 1043456
  %v32 = vsel %vm30, %v25, 0
  %34 = vmatprep.subr.bf16.mxu0 0
  %35 = vmatpush1.bf16.msra.mxu0 %v32
  %36 = vmatprep.subr.bf16.mxu0 0
  %37 = vmatpush1.bf16.msra.mxu0 0
  %38 = vmatprep.subr.bf16.mxu0 0
  %39 = vmatpush1.bf16.msra.mxu0 0
  %40 = vmatprep.subr.bf16.mxu0 0
  %41 = vmatpush1.bf16.msra.mxu0 0
  %42 = vmatprep.subr.bf16.mxu0 0
  %43 = vmatpush1.bf16.msra.mxu0 0
  %44 = vmatprep.subr.bf16.mxu0 0
  %45 = vmatpush1.bf16.msra.mxu0 0
  %46 = vmatprep.subr.bf16.mxu0 0
  %47 = vmatpush1.bf16.msra.mxu0 0
  %48 = vmatprep.subr.bf16.mxu0 0
  %49 = vmatpush1.bf16.msra.mxu0 0
  %50 = vmatprep.subr.bf16.mxu0 0
  %51 = vmatpush1.bf16.msra.mxu0 0
  %52 = vmatprep.subr.bf16.mxu0 0
  %53 = vmatpush1.bf16.msra.mxu0 0
  %54 = vmatprep.subr.bf16.mxu0 0
  %55 = vmatpush1.bf16.msra.mxu0 0
  %56 = vmatprep.subr.bf16.mxu0 0
  %57 = vmatpush1.bf16.msra.mxu0 0
  %58 = vmatprep.subr.bf16.mxu0 0
  %59 = vmatpush1.bf16.msra.mxu0 0
  %60 = vmatprep.subr.bf16.mxu0 0
  %61 = vmatpush1.bf16.msra.mxu0 0
  %62 = vmatprep.subr.bf16.mxu0 0
  %63 = vmatpush1.bf16.msra.mxu0 0
  %64 = vmatprep.subr.bf16.mxu0 0
  %65 = vmatpush1.bf16.msra.mxu0 0
  %66 = vmatprep.mubr.bf16.mxu0 0
  %67 = vmatmul.mubr.bf16.gmra.mrb[0].mxu0 %v28
  %v68 = vpop.f32.mrb[0].mxu0
  %v69 = vadd.f32 0.0, %v68
  %v70 = vpop.f32.mrb[0].mxu0
  %v71 = vpop.f32.mrb[0].mxu0
  %v72 = vpop.f32.mrb[0].mxu0
  %73 = vdwg.mxu0
  %v74 = vadd.f32 %v23, %v69
  %75 = vst.msk [vmem:[%s3] sm:$0xff] %vm26, %v74
  %p76 = scmp.eq.s32.totalorder 0, 0
  %p77 = pnand %p15, %p76
  %p78 = pneg %p77
  // Predicated region
  $region18: #{gcn_unet2_forward.19} parent=0 // pred_check
    _
  $region19: #{gcn_unet2_forward.19} parent=0 // pred_check_branch
    %80 = sbr.rel (%p77) target = $region21
  $region20: #{gcn_unet2_forward.19} parent=0 // pred_region
    %v81 = vlaneseq
    %v82 = vshrl.u32 %v81, 7
    %v83 = vlaneseq
    %v84 = vand.u32 %v83, 127
    %vm85 = vcmp.eq.s32.totalorder %v82, %v84
    %v86 = vld [vmem:[%s3] sm:$0xff]
    %v87 = vsel %vm85, 0.0, %v86
    %88 = vst.msk [vmem:[%s3] sm:$0xff] %vm26, %v87
  $region21: #{gcn_unet2_forward.19} parent=0 // pred_fallthru
    _
  // Predicated region
  $region22: #{gcn_unet2_forward.19} parent=0 // pred_check
    _
  $region23: #{gcn_unet2_forward.19} parent=0 // pred_check_branch
    %90 = sbr.rel (0) target = $region25
  $region24: #{gcn_unet2_forward.19} parent=0 // pred_region
    _
  $region25: #{gcn_unet2_forward.19} parent=0 // pred_fallthru
    _
  // Predicated region
  $region26: #{gcn_unet2_forward.19} parent=0 // pred_check
    _
  $region27: #{gcn_unet2_forward.19} parent=0 // pred_check_branch
    %92 = sbr.rel (0) target = $region29
  $region28: #{gcn_unet2_forward.19} parent=0 // pred_region
    _
  $region29: #{gcn_unet2_forward.19} parent=0 // pred_fallthru
    _

// kernel: gcn_unet2_forward.20
$region0: #{gcn_unet2_forward.20}
  #allocation0 [shape = 'u32[]', space=smem, size = 0x4, offset = 0x4, fixed_abs, tag = 'smem constant byte address 0x4 - core index']
  #allocation1 [shape = 'u32[144,128]{1,0:T(1,128)}', space=vmem, size = 0x12000, scoped, tag = 'internal scratch']
  %s0 = inlined_call_operand.vmem [shape: f32[4,4], index: 0, kind: input, shape index: {}]
  %s1 = inlined_call_operand.vmem [shape: f32[4,1], index: 1, kind: output, shape index: {}]
  %s2 = sld [smem:[#allocation0]]
  $region22: #{gcn_unet2_forward.20} parent=0
    _
  %s4 = ssub.s32 1, %s2
  %s5 = scalar_select 0, %s4, %s2
  // Predicated region
  $region2: #{gcn_unet2_forward.20} parent=0 // pred_check
    _
  $region3: #{gcn_unet2_forward.20} parent=0 // pred_check_branch
    %7 = sbr.rel (0) target = $region5
  $region4: #{gcn_unet2_forward.20} parent=0 // pred_region
    _
  $region5: #{gcn_unet2_forward.20} parent=0 // pred_fallthru
    _
  %p8 = scmp.eq.s32.totalorder 0, 0
  // Predicated region
  $region6: #{gcn_unet2_forward.20} parent=0 // pred_check
    %p9 = pneg %p8
  $region7: #{gcn_unet2_forward.20} parent=0 // pred_check_branch
    %11 = sbr.rel (%p9) target = $region9
  $region8: #{gcn_unet2_forward.20} parent=0 // pred_region
    %vm12 = vcmask 3072
    %13 = vst.msk [vmem:[%s1] sm:$0xf] %vm12, 0.0
  $region9: #{gcn_unet2_forward.20} parent=0 // pred_fallthru
    _
  %v14 = vld [vmem:[%s1] sm:$0xf]
  %v15 = vld [vmem:[%s0] sm:$0xf]
  %vm16 = vcmask 27648
  %v17 = vsel %vm16, %v15, 0.0
  %18 = vadd.xlane.f32.xlu0 %v17
  %v19 = vpop.xlane.xlu0 %18
  %v20 = vadd.f32 %v14, %v19
  %vm21 = vcmask 3072
  %22 = vst.msk [vmem:[%s1] sm:$0xf] %vm21, %v20
  // Predicated region
  $region10: #{gcn_unet2_forward.20} parent=0 // pred_check
    %p23 = pneg %p8
  $region11: #{gcn_unet2_forward.20} parent=0 // pred_check_branch
    %25 = sbr.rel (%p23) target = $region13
  $region12: #{gcn_unet2_forward.20} parent=0 // pred_region
    %v26 = vld [vmem:[%s1] sm:$0xf]
    %v27 = vadd.f32 %v26, 2.0
    %v28 = vrsqrt.pop %v27
    %29 = vst.msk [vmem:[%s1] sm:$0xf] %vm21, %v28
  $region13: #{gcn_unet2_forward.20} parent=0 // pred_fallthru
    _
  // Predicated region
  $region14: #{gcn_unet2_forward.20} parent=0 // pred_check
    _
  $region15: #{gcn_unet2_forward.20} parent=0 // pred_check_branch
    %31 = sbr.rel (0) target = $region17
  $region16: #{gcn_unet2_forward.20} parent=0 // pred_region
    _
  $region17: #{gcn_unet2_forward.20} parent=0 // pred_fallthru
    _
  // Predicated region
  $region18: #{gcn_unet2_forward.20} parent=0 // pred_check
    _
  $region19: #{gcn_unet2_forward.20} parent=0 // pred_check_branch
    %33 = sbr.rel (0) target = $region21
  $region20: #{gcn_unet2_forward.20} parent=0 // pred_region
    _
  $region21: #{gcn_unet2_forward.20} parent=0 // pred_fallthru
    _

// kernel: gcn_unet2_forward.18
$region0: #{gcn_unet2_forward.18}
  #allocation0 [shape = 'u32[]', space=smem, size = 0x4, offset = 0x4, fixed_abs, tag = 'smem constant byte address 0x4 - core index']
  #allocation1 [shape = 'u32[144,128]{1,0:T(1,128)}', space=vmem, size = 0x12000, scoped, tag = 'internal scratch']
  %s0 = inlined_call_operand.vmem [shape: f32[8,1], index: 0, kind: input, shape index: {}]
  %s1 = inlined_call_operand.vmem [shape: bf16[8,8], index: 1, kind: input, shape index: {}]
  %s2 = inlined_call_operand.vmem [shape: bf16[8,128], index: 2, kind: input, shape index: {}]
  %s3 = inlined_call_operand.vmem [shape: f32[8,128], index: 3, kind: input, shape index: {}]
  %s4 = inlined_call_operand.vmem [shape: f32[128,128], index: 4, kind: input, shape index: {}]
  %s5 = inlined_call_operand.vmem [shape: f32[1,128], index: 5, kind: input, shape index: {}]
  %s6 = inlined_call_operand.vmem [shape: f32[1,128], index: 6, kind: input, shape index: {}]
  %s7 = inlined_call_operand.vmem [shape: f32[8,128], index: 7, kind: output, shape index: {0}]
  %s8 = inlined_call_operand.vmem [shape: f32[1,8], index: 8, kind: output, shape index: {1}]
  %9 = xla_tuple %s7, %s8
  %s10 = sld [smem:[#allocation0]]
  $region54: #{gcn_unet2_forward.18} parent=0
    _
  %s12 = ssub.s32 1, %s10
  %s13 = scalar_select 0, %s12, %s10
  // Predicated region
  $region2: #{gcn_unet2_forward.18} parent=0 // pred_check
    _
  $region3: #{gcn_unet2_forward.18} parent=0 // pred_check_branch
    %15 = sbr.rel (0) target = $region5
  $region4: #{gcn_unet2_forward.18} parent=0 // pred_region
    _
  $region5: #{gcn_unet2_forward.18} parent=0 // pred_fallthru
    _
  // Predicated region
  $region6: #{gcn_unet2_forward.18} parent=0 // pred_check
    _
  $region7: #{gcn_unet2_forward.18} parent=0 // pred_check_branch
    %17 = sbr.rel (0) target = $region9
  $region8: #{gcn_unet2_forward.18} parent=0 // pred_region
    _
  $region9: #{gcn_unet2_forward.18} parent=0 // pred_fallthru
    _
  // Predicated region
  $region10: #{gcn_unet2_forward.18} parent=0 // pred_check
    _
  $region11: #{gcn_unet2_forward.18} parent=0 // pred_check_branch
    %19 = sbr.rel (0) target = $region13
  $region12: #{gcn_unet2_forward.18} parent=0 // pred_region
    _
  $region13: #{gcn_unet2_forward.18} parent=0 // pred_fallthru
    _
  // Predicated region
  $region14: #{gcn_unet2_forward.18} parent=0 // pred_check
    _
  $region15: #{gcn_unet2_forward.18} parent=0 // pred_check_branch
    %21 = sbr.rel (0) target = $region17
  $region16: #{gcn_unet2_forward.18} parent=0 // pred_region
    _
  $region17: #{gcn_unet2_forward.18} parent=0 // pred_fallthru
    _
  // Predicated region
  $region18: #{gcn_unet2_forward.18} parent=0 // pred_check
    _
  $region19: #{gcn_unet2_forward.18} parent=0 // pred_check_branch
    %23 = sbr.rel (0) target = $region21
  $region20: #{gcn_unet2_forward.18} parent=0 // pred_region
    _
  $region21: #{gcn_unet2_forward.18} parent=0 // pred_fallthru
    _
  // Predicated region
  $region22: #{gcn_unet2_forward.18} parent=0 // pred_check
    _
  $region23: #{gcn_unet2_forward.18} parent=0 // pred_check_branch
    %25 = sbr.rel (0) target = $region25
  $region24: #{gcn_unet2_forward.18} parent=0 // pred_region
    _
  $region25: #{gcn_unet2_forward.18} parent=0 // pred_fallthru
    _
  // Predicated region
  $region26: #{gcn_unet2_forward.18} parent=0 // pred_check
    _
  $region27: #{gcn_unet2_forward.18} parent=0 // pred_check_branch
    %27 = sbr.rel (0) target = $region29
  $region28: #{gcn_unet2_forward.18} parent=0 // pred_region
    _
  $region29: #{gcn_unet2_forward.18} parent=0 // pred_fallthru
    _
  %p29 = scmp.eq.s32.totalorder 0, 0
  // Predicated region
  $region30: #{gcn_unet2_forward.18} parent=0 // pred_check
    %p30 = pneg %p29
  $region31: #{gcn_unet2_forward.18} parent=0 // pred_check_branch
    %32 = sbr.rel (%p30) target = $region33
  $region32: #{gcn_unet2_forward.18} parent=0 // pred_region
    %33 = vst [vmem:[%s7] sm:$0xff] 0.0
  $region33: #{gcn_unet2_forward.18} parent=0 // pred_fallthru
    _
  %v34 = vld [vmem:[%s7] sm:$0xff]
  %v35 = vld [vmem:[%s1] sm:$0xf]
  %v36 = vld [vmem:[%s2] sm:$0xf]
  %vm37 = vcmask 64512
  %v39 = vsel %vm37, %v35, 0
  %vm41 = vcmask 1043456
  %v43 = vsel %vm41, %v36, 0
  %45 = vmatprep.subr.bf16.mxu0 0
  %46 = vmatpush1.bf16.msra.mxu0 %v43
  %47 = vmatprep.subr.bf16.mxu0 0
  %48 = vmatpush1.bf16.msra.mxu0 0
  %49 = vmatprep.subr.bf16.mxu0 0
  %50 = vmatpush1.bf16.msra.mxu0 0
  %51 = vmatprep.subr.bf16.mxu0 0
  %52 = vmatpush1.bf16.msra.mxu0 0
  %53 = vmatprep.subr.bf16.mxu0 0
  %54 = vmatpush1.bf16.msra.mxu0 0
  %55 = vmatprep.subr.bf16.mxu0 0
  %56 = vmatpush1.bf16.msra.mxu0 0
  %57 = vmatprep.subr.bf16.mxu0 0
  %58 = vmatpush1.bf16.msra.mxu0 0
  %59 = vmatprep.subr.bf16.mxu0 0
  %60 = vmatpush1.bf16.msra.mxu0 0
  %61 = vmatprep.subr.bf16.mxu0 0
  %62 = vmatpush1.bf16.msra.mxu0 0
  %63 = vmatprep.subr.bf16.mxu0 0
  %64 = vmatpush1.bf16.msra.mxu0 0
  %65 = vmatprep.subr.bf16.mxu0 0
  %66 = vmatpush1.bf16.msra.mxu0 0
  %67 = vmatprep.subr.bf16.mxu0 0
  %68 = vmatpush1.bf16.msra.mxu0 0
  %69 = vmatprep.subr.bf16.mxu0 0
  %70 = vmatpush1.bf16.msra.mxu0 0
  %71 = vmatprep.subr.bf16.mxu0 0
  %72 = vmatpush1.bf16.msra.mxu0 0
  %73 = vmatprep.subr.bf16.mxu0 0
  %74 = vmatpush1.bf16.msra.mxu0 0
  %75 = vmatprep.subr.bf16.mxu0 0
  %76 = vmatpush1.bf16.msra.mxu0 0
  %77 = vmatprep.mubr.bf16.mxu0 0
  %78 = vmatmul.mubr.bf16.gmra.mrb[0].mxu0 %v39
  %v79 = vpop.f32.mrb[0].mxu0
  %v80 = vadd.f32 0.0, %v79
  %v81 = vpop.f32.mrb[0].mxu0
  %v82 = vpop.f32.mrb[0].mxu0
  %v83 = vpop.f32.mrb[0].mxu0
  %84 = vdwg.mxu0
  %v85 = vadd.f32 %v34, %v80
  %86 = vst [vmem:[%s7] sm:$0xff] %v85
  // Predicated region
  $region34: #{gcn_unet2_forward.18} parent=0 // pred_check
    %p87 = pneg %p29
  $region35: #{gcn_unet2_forward.18} parent=0 // pred_check_branch
    %89 = sbr.rel (%p87) target = $region37
  $region36: #{gcn_unet2_forward.18} parent=0 // pred_region
    %v90 = vld [vmem:[%s0] sm:$0xff]
    %v91 = vld [vmem:[%s7] sm:$0xff]
    %v92 = vmul.f32 %v90, 2.0
    %v93 = vld [vmem:[%s3] sm:$0xff]
    %95 = vset.pattern.permute.xlu0 0
    %96 = vperm.xlu0 %95, %v92
    %v97 = vpop.permute.xlu0 %96
    %v99 = vmul.f32 %v97, %v93
    %v100 = vadd.f32 %v91, %v99
    %102 = vset.pattern.permute.xlu0 0
    %103 = vperm.xlu0 %102, %v90
    %v104 = vpop.permute.xlu0 %103
    %v106 = vmul.f32 %v104, %v100
    %v107 = vld [vmem:[%s4] sm:$0xff]
    %v108 = vld [vmem:[%s4 + $0x8] sm:$0xff]
    %v109 = vld [vmem:[%s4 + $0x10] sm:$0xff]
    %v110 = vld [vmem:[%s4 + $0x18] sm:$0xff]
    %v111 = vld [vmem:[%s4 + $0x20] sm:$0xff]
    %v112 = vld [vmem:[%s4 + $0x28] sm:$0xff]
    %v113 = vld [vmem:[%s4 + $0x30] sm:$0xff]
    %v114 = vld [vmem:[%s4 + $0x38] sm:$0xff]
    %v115 = vld [vmem:[%s4 + $0x40] sm:$0xff]
    %v116 = vld [vmem:[%s4 + $0x48] sm:$0xff]
    %v117 = vld [vmem:[%s4 + $0x50] sm:$0xff]
    %v118 = vld [vmem:[%s4 + $0x58] sm:$0xff]
    %v119 = vld [vmem:[%s4 + $0x60] sm:$0xff]
    %v120 = vld [vmem:[%s4 + $0x68] sm:$0xff]
    %v121 = vld [vmem:[%s4 + $0x70] sm:$0xff]
    %v122 = vld [vmem:[%s4 + $0x78] sm:$0xff]
    %v123 = vld [vmem:[%s5] sm:$0x1]
    %v125 = vlaneseq
    %v126 = vshrl.u32 %v125, 7
    %v127 = vsub.s32 0, %v126
    %v128 = vrot.slane %v123, %v127
    %130 = vmatprep.subr.mxu0 0.0
    %131 = vmatpush1.msra.mxu0 %v107
    %132 = vmatprep.subr.mxu0 0.0
    %133 = vmatpush1.msra.mxu0 %v108
    %134 = vmatprep.subr.mxu0 0.0
    %135 = vmatpush1.msra.mxu0 %v109
    %136 = vmatprep.subr.mxu0 0.0
    %137 = vmatpush1.msra.mxu0 %v110
    %138 = vmatprep.subr.mxu0 0.0
    %139 = vmatpush1.msra.mxu0 %v111
    %140 = vmatprep.subr.mxu0 0.0
    %141 = vmatpush1.msra.mxu0 %v112
    %142 = vmatprep.subr.mxu0 0.0
    %143 = vmatpush1.msra.mxu0 %v113
    %144 = vmatprep.subr.mxu0 0.0
    %145 = vmatpush1.msra.mxu0 %v114
    %146 = vmatprep.subr.mxu0 0.0
    %147 = vmatpush1.msra.mxu0 %v115
    %148 = vmatprep.subr.mxu0 0.0
    %149 = vmatpush1.msra.mxu0 %v116
    %150 = vmatprep.subr.mxu0 0.0
    %151 = vmatpush1.msra.mxu0 %v117
    %152 = vmatprep.subr.mxu0 0.0
    %153 = vmatpush1.msra.mxu0 %v118
    %154 = vmatprep.subr.mxu0 0.0
    %155 = vmatpush1.msra.mxu0 %v119
    %156 = vmatprep.subr.mxu0 0.0
    %157 = vmatpush1.msra.mxu0 %v120
    %158 = vmatprep.subr.mxu0 0.0
    %159 = vmatpush1.msra.mxu0 %v121
    %160 = vmatprep.subr.mxu0 0.0
    %161 = vmatpush1.msra.mxu0 %v122
    %162 = vmatprep.subr.mxu0 0.0
    %163 = vmatpush1.msra.mxu0 0.0
    %164 = vmatprep.subr.mxu0 0.0
    %165 = vmatpush1.msra.mxu0 0.0
    %166 = vmatprep.subr.mxu0 0.0
    %167 = vmatpush1.msra.mxu0 0.0
    %168 = vmatprep.subr.mxu0 0.0
    %169 = vmatpush1.msra.mxu0 0.0
    %170 = vmatprep.subr.mxu0 0.0
    %171 = vmatpush1.msra.mxu0 0.0
    %172 = vmatprep.subr.mxu0 0.0
    %173 = vmatpush1.msra.mxu0 0.0
    %174 = vmatprep.subr.mxu0 0.0
    %175 = vmatpush1.msra.mxu0 0.0
    %176 = vmatprep.subr.mxu0 0.0
    %177 = vmatpush1.msra.mxu0 0.0
    %178 = vmatprep.subr.mxu0 0.0
    %179 = vmatpush1.msra.mxu0 0.0
    %180 = vmatprep.subr.mxu0 0.0
    %181 = vmatpush1.msra.mxu0 0.0
    %182 = vmatprep.subr.mxu0 0.0
    %183 = vmatpush1.msra.mxu0 0.0
    %184 = vmatprep.subr.mxu0 0.0
    %185 = vmatpush1.msra.mxu0 0.0
    %186 = vmatprep.subr.mxu0 0.0
    %187 = vmatpush1.msra.mxu0 0.0
    %188 = vmatprep.subr.mxu0 0.0
    %189 = vmatpush1.msra.mxu0 0.0
    %190 = vmatprep.subr.mxu0 0.0
    %191 = vmatpush1.msra.mxu0 0.0
    %192 = vmatprep.subr.mxu0 0.0
    %193 = vmatpush1.msra.mxu0 0.0
    %194 = vmatprep.mubr.f32.mxu0 0.0
    %195 = vmatmul.mubr.f32.gmra.mrb[0].mxu0 %v106
    %v196 = vpop.f32.mrb[0].mxu0
    %v197 = vadd.f32 %v128, %v196
    %v198 = vpop.f32.mrb[0].mxu0
    %199 = vdwg.mxu0
    %v200 = vmax.f32 %v197, 0.0
    %201 = vst [vmem:[%s7] sm:$0xff] %v200
    %v202 = vld [vmem:[%s6] sm:$0x1]
    %v203 = vmul.f32 %v202, %v202
    %vm204 = vcmask 1040384
    %v205 = vsel %vm204, %v203, 0.0
    %206 = vadd.xlane.f32.xlu0 %v205
    %v207 = vpop.xlane.xlu0 %206
    %v208 = vrot.slane %v207, 4
    %v209 = vadd.f32 %v207, %v208
    %v210 = vrot.slane %v209, 2
    %v211 = vadd.f32 %v209, %v210
    %v212 = vrot.slane %v211, 1
    %v213 = vadd.f32 %v211, %v212
    %s214 = vtos %v213
    %v215 = vstv %s214
    %v216 = vrsqrt.pop %v215
    %s217 = vtos %v216
    %218 = vmatprep.subr.mxu0 0.0
    %219 = vmatpush1.xpose.msra.mxu0 %v200
    %220 = vmatprep.subr.mxu0 0.0
    %221 = vmatpush1.xpose.msra.mxu0 0.0
    %222 = vmatprep.subr.mxu0 0.0
    %223 = vmatpush1.xpose.msra.mxu0 0.0
    %224 = vmatprep.subr.mxu0 0.0
    %225 = vmatpush1.xpose.msra.mxu0 0.0
    %226 = vmatprep.subr.mxu0 0.0
    %227 = vmatpush1.xpose.msra.mxu0 0.0
    %228 = vmatprep.subr.mxu0 0.0
    %229 = vmatpush1.xpose.msra.mxu0 0.0
    %230 = vmatprep.subr.mxu0 0.0
    %231 = vmatpush1.xpose.msra.mxu0 0.0
    %232 = vmatprep.subr.mxu0 0.0
    %233 = vmatpush1.xpose.msra.mxu0 0.0
    %234 = vmatprep.subr.mxu0 0.0
    %235 = vmatpush1.xpose.msra.mxu0 0.0
    %236 = vmatprep.subr.mxu0 0.0
    %237 = vmatpush1.xpose.msra.mxu0 0.0
    %238 = vmatprep.subr.mxu0 0.0
    %239 = vmatpush1.xpose.msra.mxu0 0.0
    %240 = vmatprep.subr.mxu0 0.0
    %241 = vmatpush1.xpose.msra.mxu0 0.0
    %242 = vmatprep.subr.mxu0 0.0
    %243 = vmatpush1.xpose.msra.mxu0 0.0
    %244 = vmatprep.subr.mxu0 0.0
    %245 = vmatpush1.xpose.msra.mxu0 0.0
    %246 = vmatprep.subr.mxu0 0.0
    %247 = vmatpush1.xpose.msra.mxu0 0.0
    %248 = vmatprep.subr.mxu0 0.0
    %249 = vmatpush1.xpose.msra.mxu0 0.0
    %250 = vmatprep.subr.mxu0 0.0
    %251 = vmatpush1.xpose.msra.mxu0 0.0
    %252 = vmatprep.subr.mxu0 0.0
    %253 = vmatpush1.xpose.msra.mxu0 0.0
    %254 = vmatprep.subr.mxu0 0.0
    %255 = vmatpush1.xpose.msra.mxu0 0.0
    %256 = vmatprep.subr.mxu0 0.0
    %257 = vmatpush1.xpose.msra.mxu0 0.0
    %258 = vmatprep.subr.mxu0 0.0
    %259 = vmatpush1.xpose.msra.mxu0 0.0
    %260 = vmatprep.subr.mxu0 0.0
    %261 = vmatpush1.xpose.msra.mxu0 0.0
    %262 = vmatprep.subr.mxu0 0.0
    %263 = vmatpush1.xpose.msra.mxu0 0.0
    %264 = vmatprep.subr.mxu0 0.0
    %265 = vmatpush1.xpose.msra.mxu0 0.0
    %266 = vmatprep.subr.mxu0 0.0
    %267 = vmatpush1.xpose.msra.mxu0 0.0
    %268 = vmatprep.subr.mxu0 0.0
    %269 = vmatpush1.xpose.msra.mxu0 0.0
    %270 = vmatprep.subr.mxu0 0.0
    %271 = vmatpush1.xpose.msra.mxu0 0.0
    %272 = vmatprep.subr.mxu0 0.0
    %273 = vmatpush1.xpose.msra.mxu0 0.0
    %274 = vmatprep.subr.mxu0 0.0
    %275 = vmatpush1.xpose.msra.mxu0 0.0
    %276 = vmatprep.subr.mxu0 0.0
    %277 = vmatpush1.xpose.msra.mxu0 0.0
    %278 = vmatprep.subr.mxu0 0.0
    %279 = vmatpush1.xpose.msra.mxu0 0.0
    %280 = vmatprep.subr.mxu0 0.0
    %281 = vmatpush1.xpose.msra.mxu0 0.0
    %282 = vmatprep.mubr.f32.mxu0 0.0
    %283 = vmatmul.mubr.f32.gmra.mrb[0].mxu0 %v202
    %v284 = vpop.f32.mrb[0].mxu0
    %v285 = vadd.f32 0.0, %v284
    %v286 = vpop.f32.mrb[0].mxu0
    %287 = vdwg.mxu0
    %v288 = vstv %s217
    %v289 = vmul.f32 %v285, %v288
    %v290 = vtanh.pop %v289
    %vm291 = vcmask 57344
    %292 = vst.msk [vmem:[%s8] sm:$0x1] %vm291, %v290
  $region37: #{gcn_unet2_forward.18} parent=0 // pred_fallthru
    _
  // Predicated region
  $region38: #{gcn_unet2_forward.18} parent=0 // pred_check
    _
  $region39: #{gcn_unet2_forward.18} parent=0 // pred_check_branch
    %294 = sbr.rel (0) target = $region41
  $region40: #{gcn_unet2_forward.18} parent=0 // pred_region
    _
  $region41: #{gcn_unet2_forward.18} parent=0 // pred_fallthru
    _
  // Predicated region
  $region42: #{gcn_unet2_forward.18} parent=0 // pred_check
    _
  $region43: #{gcn_unet2_forward.18} parent=0 // pred_check_branch
    %296 = sbr.rel (0) target = $region45
  $region44: #{gcn_unet2_forward.18} parent=0 // pred_region
    _
  $region45: #{gcn_unet2_forward.18} parent=0 // pred_fallthru
    _
  // Predicated region
  $region46: #{gcn_unet2_forward.18} parent=0 // pred_check
    _
  $region47: #{gcn_unet2_forward.18} parent=0 // pred_check_branch
    %298 = sbr.rel (0) target = $region49
  $region48: #{gcn_unet2_forward.18} parent=0 // pred_region
    _
  $region49: #{gcn_unet2_forward.18} parent=0 // pred_fallthru
    _
  // Predicated region
  $region50: #{gcn_unet2_forward.18} parent=0 // pred_check
    _
  $region51: #{gcn_unet2_forward.18} parent=0 // pred_check_branch
    %300 = sbr.rel (0) target = $region53
  $region52: #{gcn_unet2_forward.18} parent=0 // pred_region
    _
  $region53: #{gcn_unet2_forward.18} parent=0 // pred_fallthru
    _

// kernel: gcn_unet2_forward.22
$region0: #{gcn_unet2_forward.22}
  #allocation0 [shape = 'u32[]', space=smem, size = 0x4, offset = 0x4, fixed_abs, tag = 'smem constant byte address 0x4 - core index']
  #allocation1 [shape = 'u32[144,128]{1,0:T(1,128)}', space=vmem, size = 0x12000, scoped, tag = 'internal scratch']
  %s0 = inlined_call_operand.vmem [shape: bf16[4,4], index: 0, kind: input, shape index: {}, may-alias: {0,1}]
  %s1 = inlined_call_operand.vmem [shape: bf16[4,4], index: 1, kind: input, shape index: {}, may-alias: {0,1}]
  %s2 = inlined_call_operand.vmem [shape: f32[4,4], index: 2, kind: input, shape index: {}]
  %s3 = inlined_call_operand.vmem [shape: f32[4,4], index: 3, kind: output, shape index: {}]
  %s4 = sld [smem:[#allocation0]]
  $region30: #{gcn_unet2_forward.22} parent=0
    _
  %s6 = ssub.s32 1, %s4
  %s7 = scalar_select 0, %s6, %s4
  // Predicated region
  $region2: #{gcn_unet2_forward.22} parent=0 // pred_check
    _
  $region3: #{gcn_unet2_forward.22} parent=0 // pred_check_branch
    %9 = sbr.rel (0) target = $region5
  $region4: #{gcn_unet2_forward.22} parent=0 // pred_region
    _
  $region5: #{gcn_unet2_forward.22} parent=0 // pred_fallthru
    _
  // Predicated region
  $region6: #{gcn_unet2_forward.22} parent=0 // pred_check
    _
  $region7: #{gcn_unet2_forward.22} parent=0 // pred_check_branch
    %11 = sbr.rel (0) target = $region9
  $region8: #{gcn_unet2_forward.22} parent=0 // pred_region
    _
  $region9: #{gcn_unet2_forward.22} parent=0 // pred_fallthru
    _
  // Predicated region
  $region10: #{gcn_unet2_forward.22} parent=0 // pred_check
    _
  $region11: #{gcn_unet2_forward.22} parent=0 // pred_check_branch
    %13 = sbr.rel (0) target = $region13
  $region12: #{gcn_unet2_forward.22} parent=0 // pred_region
    _
  $region13: #{gcn_unet2_forward.22} parent=0 // pred_fallthru
    _
  %p15 = scmp.eq.s32.totalorder 0, 0
  // Predicated region
  $region14: #{gcn_unet2_forward.22} parent=0 // pred_check
    %p16 = pneg %p15
  $region15: #{gcn_unet2_forward.22} parent=0 // pred_check_branch
    %18 = sbr.rel (%p16) target = $region17
  $region16: #{gcn_unet2_forward.22} parent=0 // pred_region
    %v19 = vld [vmem:[%s2] sm:$0xf]
    %v20 = vmul.f32 %v19, 2.0
    %vm21 = vcmask 27648
    %22 = vst.msk [vmem:[%s3] sm:$0xf] %vm21, %v20
  $region17: #{gcn_unet2_forward.22} parent=0 // pred_fallthru
    _
  %v23 = vld [vmem:[%s3] sm:$0xf]
  %v24 = vld [vmem:[%s0] sm:$0x3]
  %v25 = vld [vmem:[%s1] sm:$0x3]
  %vm26 = vcmask 31744
  %v28 = vsel %vm26, %v24, 0
  %vm30 = vcmask 1041408
  %v32 = vsel %vm30, %v25, 0
  %34 = vmatprep.subr.bf16.mxu0 0
  %35 = vmatpush1.bf16.msra.mxu0 %v32
  %36 = vmatprep.subr.bf16.mxu0 0
  %37 = vmatpush1.bf16.msra.mxu0 0
  %38 = vmatprep.subr.bf16.mxu0 0
  %39 = vmatpush1.bf16.msra.mxu0 0
  %40 = vmatprep.subr.bf16.mxu0 0
  %41 = vmatpush1.bf16.msra.mxu0 0
  %42 = vmatprep.subr.bf16.mxu0 0
  %43 = vmatpush1.bf16.msra.mxu0 0
  %44 = vmatprep.subr.bf16.mxu0 0
  %45 = vmatpush1.bf16.msra.mxu0 0
  %46 = vmatprep.subr.bf16.mxu0 0
  %47 = vmatpush1.bf16.msra.mxu0 0
  %48 = vmatprep.subr.bf16.mxu0 0
  %49 = vmatpush1.bf16.msra.mxu0 0
  %50 = vmatprep.subr.bf16.mxu0 0
  %51 = vmatpush1.bf16.msra.mxu0 0
  %52 = vmatprep.subr.bf16.mxu0 0
  %53 = vmatpush1.bf16.msra.mxu0 0
  %54 = vmatprep.subr.bf16.mxu0 0
  %55 = vmatpush1.bf16.msra.mxu0 0
  %56 = vmatprep.subr.bf16.mxu0 0
  %57 = vmatpush1.bf16.msra.mxu0 0
  %58 = vmatprep.subr.bf16.mxu0 0
  %59 = vmatpush1.bf16.msra.mxu0 0
  %60 = vmatprep.subr.bf16.mxu0 0
  %61 = vmatpush1.bf16.msra.mxu0 0
  %62 = vmatprep.subr.bf16.mxu0 0
  %63 = vmatpush1.bf16.msra.mxu0 0
  %64 = vmatprep.subr.bf16.mxu0 0
  %65 = vmatpush1.bf16.msra.mxu0 0
  %66 = vmatprep.mubr.bf16.mxu0 0
  %67 = vmatmul.mubr.bf16.gmra.mrb[0].mxu0 %v28
  %v68 = vpop.f32.mrb[0].mxu0
  %v69 = vadd.f32 0.0, %v68
  %v70 = vpop.f32.mrb[0].mxu0
  %v71 = vpop.f32.mrb[0].mxu0
  %v72 = vpop.f32.mrb[0].mxu0
  %73 = vdwg.mxu0
  %v74 = vadd.f32 %v23, %v69
  %vm75 = vcmask 27648
  %76 = vst.msk [vmem:[%s3] sm:$0xf] %vm75, %v74
  %p77 = scmp.eq.s32.totalorder 0, 0
  %p78 = pnand %p15, %p77
  %p79 = pneg %p78
  // Predicated region
  $region18: #{gcn_unet2_forward.22} parent=0 // pred_check
    _
  $region19: #{gcn_unet2_forward.22} parent=0 // pred_check_branch
    %81 = sbr.rel (%p78) target = $region21
  $region20: #{gcn_unet2_forward.22} parent=0 // pred_region
    %v82 = vlaneseq
    %v83 = vshrl.u32 %v82, 7
    %v84 = vlaneseq
    %v85 = vand.u32 %v84, 127
    %vm86 = vcmp.eq.s32.totalorder %v83, %v85
    %v87 = vld [vmem:[%s3] sm:$0xf]
    %v88 = vsel %vm86, 0.0, %v87
    %89 = vst.msk [vmem:[%s3] sm:$0xf] %vm75, %v88
  $region21: #{gcn_unet2_forward.22} parent=0 // pred_fallthru
    _
  // Predicated region
  $region22: #{gcn_unet2_forward.22} parent=0 // pred_check
    _
  $region23: #{gcn_unet2_forward.22} parent=0 // pred_check_branch
    %91 = sbr.rel (0) target = $region25
  $region24: #{gcn_unet2_forward.22} parent=0 // pred_region
    _
  $region25: #{gcn_unet2_forward.22} parent=0 // pred_fallthru
    _
  // Predicated region
  $region26: #{gcn_unet2_forward.22} parent=0 // pred_check
    _
  $region27: #{gcn_unet2_forward.22} parent=0 // pred_check_branch
    %93 = sbr.rel (0) target = $region29
  $region28: #{gcn_unet2_forward.22} parent=0 // pred_region
    _
  $region29: #{gcn_unet2_forward.22} parent=0 // pred_fallthru
    _

// kernel: gcn_unet2_forward.21
$region0: #{gcn_unet2_forward.21}
  #allocation0 [shape = 'u32[]', space=smem, size = 0x4, offset = 0x4, fixed_abs, tag = 'smem constant byte address 0x4 - core index']
  #allocation1 [shape = 'u32[144,128]{1,0:T(1,128)}', space=vmem, size = 0x12000, scoped, tag = 'internal scratch']
  %s0 = inlined_call_operand.vmem [shape: f32[4,1], index: 0, kind: input, shape index: {}]
  %s1 = inlined_call_operand.vmem [shape: bf16[4,4], index: 1, kind: input, shape index: {}]
  %s2 = inlined_call_operand.vmem [shape: bf16[4,128], index: 2, kind: input, shape index: {}]
  %s3 = inlined_call_operand.vmem [shape: f32[4,128], index: 3, kind: input, shape index: {}]
  %s4 = inlined_call_operand.vmem [shape: f32[128,128], index: 4, kind: input, shape index: {}]
  %s5 = inlined_call_operand.vmem [shape: f32[1,128], index: 5, kind: input, shape index: {}]
  %s6 = inlined_call_operand.vmem [shape: f32[1,128], index: 6, kind: input, shape index: {}]
  %s7 = inlined_call_operand.vmem [shape: f32[4,128], index: 7, kind: output, shape index: {0}]
  %s8 = inlined_call_operand.vmem [shape: f32[1,4], index: 8, kind: output, shape index: {1}]
  %9 = xla_tuple %s7, %s8
  %s10 = sld [smem:[#allocation0]]
  $region54: #{gcn_unet2_forward.21} parent=0
    _
  %s12 = ssub.s32 1, %s10
  %s13 = scalar_select 0, %s12, %s10
  // Predicated region
  $region2: #{gcn_unet2_forward.21} parent=0 // pred_check
    _
  $region3: #{gcn_unet2_forward.21} parent=0 // pred_check_branch
    %15 = sbr.rel (0) target = $region5
  $region4: #{gcn_unet2_forward.21} parent=0 // pred_region
    _
  $region5: #{gcn_unet2_forward.21} parent=0 // pred_fallthru
    _
  // Predicated region
  $region6: #{gcn_unet2_forward.21} parent=0 // pred_check
    _
  $region7: #{gcn_unet2_forward.21} parent=0 // pred_check_branch
    %17 = sbr.rel (0) target = $region9
  $region8: #{gcn_unet2_forward.21} parent=0 // pred_region
    _
  $region9: #{gcn_unet2_forward.21} parent=0 // pred_fallthru
    _
  // Predicated region
  $region10: #{gcn_unet2_forward.21} parent=0 // pred_check
    _
  $region11: #{gcn_unet2_forward.21} parent=0 // pred_check_branch
    %19 = sbr.rel (0) target = $region13
  $region12: #{gcn_unet2_forward.21} parent=0 // pred_region
    _
  $region13: #{gcn_unet2_forward.21} parent=0 // pred_fallthru
    _
  // Predicated region
  $region14: #{gcn_unet2_forward.21} parent=0 // pred_check
    _
  $region15: #{gcn_unet2_forward.21} parent=0 // pred_check_branch
    %21 = sbr.rel (0) target = $region17
  $region16: #{gcn_unet2_forward.21} parent=0 // pred_region
    _
  $region17: #{gcn_unet2_forward.21} parent=0 // pred_fallthru
    _
  // Predicated region
  $region18: #{gcn_unet2_forward.21} parent=0 // pred_check
    _
  $region19: #{gcn_unet2_forward.21} parent=0 // pred_check_branch
    %23 = sbr.rel (0) target = $region21
  $region20: #{gcn_unet2_forward.21} parent=0 // pred_region
    _
  $region21: #{gcn_unet2_forward.21} parent=0 // pred_fallthru
    _
  // Predicated region
  $region22: #{gcn_unet2_forward.21} parent=0 // pred_check
    _
  $region23: #{gcn_unet2_forward.21} parent=0 // pred_check_branch
    %25 = sbr.rel (0) target = $region25
  $region24: #{gcn_unet2_forward.21} parent=0 // pred_region
    _
  $region25: #{gcn_unet2_forward.21} parent=0 // pred_fallthru
    _
  // Predicated region
  $region26: #{gcn_unet2_forward.21} parent=0 // pred_check
    _
  $region27: #{gcn_unet2_forward.21} parent=0 // pred_check_branch
    %27 = sbr.rel (0) target = $region29
  $region28: #{gcn_unet2_forward.21} parent=0 // pred_region
    _
  $region29: #{gcn_unet2_forward.21} parent=0 // pred_fallthru
    _
  %p29 = scmp.eq.s32.totalorder 0, 0
  // Predicated region
  $region30: #{gcn_unet2_forward.21} parent=0 // pred_check
    %p30 = pneg %p29
  $region31: #{gcn_unet2_forward.21} parent=0 // pred_check_branch
    %32 = sbr.rel (%p30) target = $region33
  $region32: #{gcn_unet2_forward.21} parent=0 // pred_region
    %33 = vst [vmem:[%s7] sm:$0xf] 0.0
  $region33: #{gcn_unet2_forward.21} parent=0 // pred_fallthru
    _
  %v34 = vld [vmem:[%s7] sm:$0xf]
  %v35 = vld [vmem:[%s1] sm:$0x3]
  %v36 = vld [vmem:[%s2] sm:$0x3]
  %vm37 = vcmask 31744
  %v39 = vsel %vm37, %v35, 0
  %vm41 = vcmask 1041408
  %v43 = vsel %vm41, %v36, 0
  %45 = vmatprep.subr.bf16.mxu0 0
  %46 = vmatpush1.bf16.msra.mxu0 %v43
  %47 = vmatprep.subr.bf16.mxu0 0
  %48 = vmatpush1.bf16.msra.mxu0 0
  %49 = vmatprep.subr.bf16.mxu0 0
  %50 = vmatpush1.bf16.msra.mxu0 0
  %51 = vmatprep.subr.bf16.mxu0 0
  %52 = vmatpush1.bf16.msra.mxu0 0
  %53 = vmatprep.subr.bf16.mxu0 0
  %54 = vmatpush1.bf16.msra.mxu0 0
  %55 = vmatprep.subr.bf16.mxu0 0
  %56 = vmatpush1.bf16.msra.mxu0 0
  %57 = vmatprep.subr.bf16.mxu0 0
  %58 = vmatpush1.bf16.msra.mxu0 0
  %59 = vmatprep.subr.bf16.mxu0 0
  %60 = vmatpush1.bf16.msra.mxu0 0
  %61 = vmatprep.subr.bf16.mxu0 0
  %62 = vmatpush1.bf16.msra.mxu0 0
  %63 = vmatprep.subr.bf16.mxu0 0
  %64 = vmatpush1.bf16.msra.mxu0 0
  %65 = vmatprep.subr.bf16.mxu0 0
  %66 = vmatpush1.bf16.msra.mxu0 0
  %67 = vmatprep.subr.bf16.mxu0 0
  %68 = vmatpush1.bf16.msra.mxu0 0
  %69 = vmatprep.subr.bf16.mxu0 0
  %70 = vmatpush1.bf16.msra.mxu0 0
  %71 = vmatprep.subr.bf16.mxu0 0
  %72 = vmatpush1.bf16.msra.mxu0 0
  %73 = vmatprep.subr.bf16.mxu0 0
  %74 = vmatpush1.bf16.msra.mxu0 0
  %75 = vmatprep.subr.bf16.mxu0 0
  %76 = vmatpush1.bf16.msra.mxu0 0
  %77 = vmatprep.mubr.bf16.mxu0 0
  %78 = vmatmul.mubr.bf16.gmra.mrb[0].mxu0 %v39
  %v79 = vpop.f32.mrb[0].mxu0
  %v80 = vadd.f32 0.0, %v79
  %v81 = vpop.f32.mrb[0].mxu0
  %v82 = vpop.f32.mrb[0].mxu0
  %v83 = vpop.f32.mrb[0].mxu0
  %84 = vdwg.mxu0
  %v85 = vadd.f32 %v34, %v80
  %86 = vst [vmem:[%s7] sm:$0xf] %v85
  // Predicated region
  $region34: #{gcn_unet2_forward.21} parent=0 // pred_check
    %p87 = pneg %p29
  $region35: #{gcn_unet2_forward.21} parent=0 // pred_check_branch
    %89 = sbr.rel (%p87) target = $region37
  $region36: #{gcn_unet2_forward.21} parent=0 // pred_region
    %v90 = vld [vmem:[%s0] sm:$0xf]
    %v91 = vld [vmem:[%s7] sm:$0xf]
    %v92 = vmul.f32 %v90, 2.0
    %v93 = vld [vmem:[%s3] sm:$0xf]
    %95 = vset.pattern.permute.xlu0 0
    %96 = vperm.xlu0 %95, %v92
    %v97 = vpop.permute.xlu0 %96
    %v99 = vmul.f32 %v97, %v93
    %v100 = vadd.f32 %v91, %v99
    %102 = vset.pattern.permute.xlu0 0
    %103 = vperm.xlu0 %102, %v90
    %v104 = vpop.permute.xlu0 %103
    %v106 = vmul.f32 %v104, %v100
    %v107 = vld [vmem:[%s4] sm:$0xff]
    %v108 = vld [vmem:[%s4 + $0x8] sm:$0xff]
    %v109 = vld [vmem:[%s4 + $0x10] sm:$0xff]
    %v110 = vld [vmem:[%s4 + $0x18] sm:$0xff]
    %v111 = vld [vmem:[%s4 + $0x20] sm:$0xff]
    %v112 = vld [vmem:[%s4 + $0x28] sm:$0xff]
    %v113 = vld [vmem:[%s4 + $0x30] sm:$0xff]
    %v114 = vld [vmem:[%s4 + $0x38] sm:$0xff]
    %v115 = vld [vmem:[%s4 + $0x40] sm:$0xff]
    %v116 = vld [vmem:[%s4 + $0x48] sm:$0xff]
    %v117 = vld [vmem:[%s4 + $0x50] sm:$0xff]
    %v118 = vld [vmem:[%s4 + $0x58] sm:$0xff]
    %v119 = vld [vmem:[%s4 + $0x60] sm:$0xff]
    %v120 = vld [vmem:[%s4 + $0x68] sm:$0xff]
    %v121 = vld [vmem:[%s4 + $0x70] sm:$0xff]
    %v122 = vld [vmem:[%s4 + $0x78] sm:$0xff]
    %v123 = vld [vmem:[%s5] sm:$0x1]
    %v125 = vlaneseq
    %v126 = vshrl.u32 %v125, 7
    %v127 = vsub.s32 0, %v126
    %v128 = vrot.slane %v123, %v127
    %130 = vmatprep.subr.mxu0 0.0
    %131 = vmatpush1.msra.mxu0 %v107
    %132 = vmatprep.subr.mxu0 0.0
    %133 = vmatpush1.msra.mxu0 %v108
    %134 = vmatprep.subr.mxu0 0.0
    %135 = vmatpush1.msra.mxu0 %v109
    %136 = vmatprep.subr.mxu0 0.0
    %137 = vmatpush1.msra.mxu0 %v110
    %138 = vmatprep.subr.mxu0 0.0
    %139 = vmatpush1.msra.mxu0 %v111
    %140 = vmatprep.subr.mxu0 0.0
    %141 = vmatpush1.msra.mxu0 %v112
    %142 = vmatprep.subr.mxu0 0.0
    %143 = vmatpush1.msra.mxu0 %v113
    %144 = vmatprep.subr.mxu0 0.0
    %145 = vmatpush1.msra.mxu0 %v114
    %146 = vmatprep.subr.mxu0 0.0
    %147 = vmatpush1.msra.mxu0 %v115
    %148 = vmatprep.subr.mxu0 0.0
    %149 = vmatpush1.msra.mxu0 %v116
    %150 = vmatprep.subr.mxu0 0.0
    %151 = vmatpush1.msra.mxu0 %v117
    %152 = vmatprep.subr.mxu0 0.0
    %153 = vmatpush1.msra.mxu0 %v118
    %154 = vmatprep.subr.mxu0 0.0
    %155 = vmatpush1.msra.mxu0 %v119
    %156 = vmatprep.subr.mxu0 0.0
    %157 = vmatpush1.msra.mxu0 %v120
    %158 = vmatprep.subr.mxu0 0.0
    %159 = vmatpush1.msra.mxu0 %v121
    %160 = vmatprep.subr.mxu0 0.0
    %161 = vmatpush1.msra.mxu0 %v122
    %162 = vmatprep.subr.mxu0 0.0
    %163 = vmatpush1.msra.mxu0 0.0
    %164 = vmatprep.subr.mxu0 0.0
    %165 = vmatpush1.msra.mxu0 0.0
    %166 = vmatprep.subr.mxu0 0.0
    %167 = vmatpush1.msra.mxu0 0.0
    %168 = vmatprep.subr.mxu0 0.0
    %169 = vmatpush1.msra.mxu0 0.0
    %170 = vmatprep.subr.mxu0 0.0
    %171 = vmatpush1.msra.mxu0 0.0
    %172 = vmatprep.subr.mxu0 0.0
    %173 = vmatpush1.msra.mxu0 0.0
    %174 = vmatprep.subr.mxu0 0.0
    %175 = vmatpush1.msra.mxu0 0.0
    %176 = vmatprep.subr.mxu0 0.0
    %177 = vmatpush1.msra.mxu0 0.0
    %178 = vmatprep.subr.mxu0 0.0
    %179 = vmatpush1.msra.mxu0 0.0
    %180 = vmatprep.subr.mxu0 0.0
    %181 = vmatpush1.msra.mxu0 0.0
    %182 = vmatprep.subr.mxu0 0.0
    %183 = vmatpush1.msra.mxu0 0.0
    %184 = vmatprep.subr.mxu0 0.0
    %185 = vmatpush1.msra.mxu0 0.0
    %186 = vmatprep.subr.mxu0 0.0
    %187 = vmatpush1.msra.mxu0 0.0
    %188 = vmatprep.subr.mxu0 0.0
    %189 = vmatpush1.msra.mxu0 0.0
    %190 = vmatprep.subr.mxu0 0.0
    %191 = vmatpush1.msra.mxu0 0.0
    %192 = vmatprep.subr.mxu0 0.0
    %193 = vmatpush1.msra.mxu0 0.0
    %194 = vmatprep.mubr.f32.mxu0 0.0
    %195 = vmatmul.mubr.f32.gmra.mrb[0].mxu0 %v106
    %v196 = vpop.f32.mrb[0].mxu0
    %v197 = vadd.f32 %v128, %v196
    %v198 = vpop.f32.mrb[0].mxu0
    %199 = vdwg.mxu0
    %v200 = vmax.f32 %v197, 0.0
    %201 = vst [vmem:[%s7] sm:$0xf] %v200
    %v202 = vld [vmem:[%s6] sm:$0x1]
    %v203 = vmul.f32 %v202, %v202
    %vm204 = vcmask 1040384
    %v205 = vsel %vm204, %v203, 0.0
    %206 = vadd.xlane.f32.xlu0 %v205
    %v207 = vpop.xlane.xlu0 %206
    %v208 = vrot.slane %v207, 4
    %v209 = vadd.f32 %v207, %v208
    %v210 = vrot.slane %v209, 2
    %v211 = vadd.f32 %v209, %v210
    %v212 = vrot.slane %v211, 1
    %v213 = vadd.f32 %v211, %v212
    %s214 = vtos %v213
    %v215 = vstv %s214
    %v216 = vrsqrt.pop %v215
    %s217 = vtos %v216
    %218 = vmatprep.subr.mxu0 0.0
    %219 = vmatpush1.xpose.msra.mxu0 %v200
    %220 = vmatprep.subr.mxu0 0.0
    %221 = vmatpush1.xpose.msra.mxu0 0.0
    %222 = vmatprep.subr.mxu0 0.0
    %223 = vmatpush1.xpose.msra.mxu0 0.0
    %224 = vmatprep.subr.mxu0 0.0
    %225 = vmatpush1.xpose.msra.mxu0 0.0
    %226 = vmatprep.subr.mxu0 0.0
    %227 = vmatpush1.xpose.msra.mxu0 0.0
    %228 = vmatprep.subr.mxu0 0.0
    %229 = vmatpush1.xpose.msra.mxu0 0.0
    %230 = vmatprep.subr.mxu0 0.0
    %231 = vmatpush1.xpose.msra.mxu0 0.0
    %232 = vmatprep.subr.mxu0 0.0
    %233 = vmatpush1.xpose.msra.mxu0 0.0
    %234 = vmatprep.subr.mxu0 0.0
    %235 = vmatpush1.xpose.msra.mxu0 0.0
    %236 = vmatprep.subr.mxu0 0.0
    %237 = vmatpush1.xpose.msra.mxu0 0.0
    %238 = vmatprep.subr.mxu0 0.0
    %239 = vmatpush1.xpose.msra.mxu0 0.0
    %240 = vmatprep.subr.mxu0 0.0
    %241 = vmatpush1.xpose.msra.mxu0 0.0
    %242 = vmatprep.subr.mxu0 0.0
    %243 = vmatpush1.xpose.msra.mxu0 0.0
    %244 = vmatprep.subr.mxu0 0.0
    %245 = vmatpush1.xpose.msra.mxu0 0.0
    %246 = vmatprep.subr.mxu0 0.0
    %247 = vmatpush1.xpose.msra.mxu0 0.0
    %248 = vmatprep.subr.mxu0 0.0
    %249 = vmatpush1.xpose.msra.mxu0 0.0
    %250 = vmatprep.subr.mxu0 0.0
    %251 = vmatpush1.xpose.msra.mxu0 0.0
    %252 = vmatprep.subr.mxu0 0.0
    %253 = vmatpush1.xpose.msra.mxu0 0.0
    %254 = vmatprep.subr.mxu0 0.0
    %255 = vmatpush1.xpose.msra.mxu0 0.0
    %256 = vmatprep.subr.mxu0 0.0
    %257 = vmatpush1.xpose.msra.mxu0 0.0
    %258 = vmatprep.subr.mxu0 0.0
    %259 = vmatpush1.xpose.msra.mxu0 0.0
    %260 = vmatprep.subr.mxu0 0.0
    %261 = vmatpush1.xpose.msra.mxu0 0.0
    %262 = vmatprep.subr.mxu0 0.0
    %263 = vmatpush1.xpose.msra.mxu0 0.0
    %264 = vmatprep.subr.mxu0 0.0
    %265 = vmatpush1.xpose.msra.mxu0 0.0
    %266 = vmatprep.subr.mxu0 0.0
    %267 = vmatpush1.xpose.msra.mxu0 0.0
    %268 = vmatprep.subr.mxu0 0.0
    %269 = vmatpush1.xpose.msra.mxu0 0.0
    %270 = vmatprep.subr.mxu0 0.0
    %271 = vmatpush1.xpose.msra.mxu0 0.0
    %272 = vmatprep.subr.mxu0 0.0
    %273 = vmatpush1.xpose.msra.mxu0 0.0
    %274 = vmatprep.subr.mxu0 0.0
    %275 = vmatpush1.xpose.msra.mxu0 0.0
    %276 = vmatprep.subr.mxu0 0.0
    %277 = vmatpush1.xpose.msra.mxu0 0.0
    %278 = vmatprep.subr.mxu0 0.0
    %279 = vmatpush1.xpose.msra.mxu0 0.0
    %280 = vmatprep.subr.mxu0 0.0
    %281 = vmatpush1.xpose.msra.mxu0 0.0
    %282 = vmatprep.mubr.f32.mxu0 0.0
    %283 = vmatmul.mubr.f32.gmra.mrb[0].mxu0 %v202
    %v284 = vpop.f32.mrb[0].mxu0
    %v285 = vadd.f32 0.0, %v284
    %v286 = vpop.f32.mrb[0].mxu0
    %287 = vdwg.mxu0
    %v288 = vstv %s217
    %v289 = vmul.f32 %v285, %v288
    %v290 = vtanh.pop %v289
    %vm291 = vcmask 24576
    %292 = vst.msk [vmem:[%s8] sm:$0x1] %vm291, %v290
  $region37: #{gcn_unet2_forward.21} parent=0 // pred_fallthru
    _
  // Predicated region
  $region38: #{gcn_unet2_forward.21} parent=0 // pred_check
    _
  $region39: #{gcn_unet2_forward.21} parent=0 // pred_check_branch
    %294 = sbr.rel (0) target = $region41
  $region40: #{gcn_unet2_forward.21} parent=0 // pred_region
    _
  $region41: #{gcn_unet2_forward.21} parent=0 // pred_fallthru
    _
  // Predicated region
  $region42: #{gcn_unet2_forward.21} parent=0 // pred_check
    _
  $region43: #{gcn_unet2_forward.21} parent=0 // pred_check_branch
    %296 = sbr.rel (0) target = $region45
  $region44: #{gcn_unet2_forward.21} parent=0 // pred_region
    _
  $region45: #{gcn_unet2_forward.21} parent=0 // pred_fallthru
    _
  // Predicated region
  $region46: #{gcn_unet2_forward.21} parent=0 // pred_check
    _
  $region47: #{gcn_unet2_forward.21} parent=0 // pred_check_branch
    %298 = sbr.rel (0) target = $region49
  $region48: #{gcn_unet2_forward.21} parent=0 // pred_region
    _
  $region49: #{gcn_unet2_forward.21} parent=0 // pred_fallthru
    _
  // Predicated region
  $region50: #{gcn_unet2_forward.21} parent=0 // pred_check
    _
  $region51: #{gcn_unet2_forward.21} parent=0 // pred_check_branch
    %300 = sbr.rel (0) target = $region53
  $region52: #{gcn_unet2_forward.21} parent=0 // pred_region
    _
  $region53: #{gcn_unet2_forward.21} parent=0 // pred_fallthru
    _

// kernel: gcn_unet2_forward.23
$region0: #{gcn_unet2_forward.23}
  #allocation0 [shape = 'u32[]', space=smem, size = 0x4, offset = 0x4, fixed_abs, tag = 'smem constant byte address 0x4 - core index']
  #allocation1 [shape = 'u32[144,128]{1,0:T(1,128)}', space=vmem, size = 0x12000, scoped, tag = 'internal scratch']
  %s0 = inlined_call_operand.vmem [shape: f32[2,2], index: 0, kind: input, shape index: {}]
  %s1 = inlined_call_operand.vmem [shape: f32[2,1], index: 1, kind: output, shape index: {}]
  %s2 = sld [smem:[#allocation0]]
  $region22: #{gcn_unet2_forward.23} parent=0
    _
  %s4 = ssub.s32 1, %s2
  %s5 = scalar_select 0, %s4, %s2
  // Predicated region
  $region2: #{gcn_unet2_forward.23} parent=0 // pred_check
    _
  $region3: #{gcn_unet2_forward.23} parent=0 // pred_check_branch
    %7 = sbr.rel (0) target = $region5
  $region4: #{gcn_unet2_forward.23} parent=0 // pred_region
    _
  $region5: #{gcn_unet2_forward.23} parent=0 // pred_fallthru
    _
  %p8 = scmp.eq.s32.totalorder 0, 0
  // Predicated region
  $region6: #{gcn_unet2_forward.23} parent=0 // pred_check
    %p9 = pneg %p8
  $region7: #{gcn_unet2_forward.23} parent=0 // pred_check_branch
    %11 = sbr.rel (%p9) target = $region9
  $region8: #{gcn_unet2_forward.23} parent=0 // pred_region
    %vm12 = vcmask 1024
    %13 = vst.msk [vmem:[%s1] sm:$0x3] %vm12, 0.0
  $region9: #{gcn_unet2_forward.23} parent=0 // pred_fallthru
    _
  %v14 = vld [vmem:[%s1] sm:$0x3]
  %v15 = vld [vmem:[%s0] sm:$0x3]
  %vm16 = vcmask 9216
  %v17 = vsel %vm16, %v15, 0.0
  %18 = vadd.xlane.f32.xlu0 %v17
  %v19 = vpop.xlane.xlu0 %18
  %v20 = vadd.f32 %v14, %v19
  %vm21 = vcmask 1024
  %22 = vst.msk [vmem:[%s1] sm:$0x3] %vm21, %v20
  // Predicated region
  $region10: #{gcn_unet2_forward.23} parent=0 // pred_check
    %p23 = pneg %p8
  $region11: #{gcn_unet2_forward.23} parent=0 // pred_check_branch
    %25 = sbr.rel (%p23) target = $region13
  $region12: #{gcn_unet2_forward.23} parent=0 // pred_region
    %v26 = vld [vmem:[%s1] sm:$0x3]
    %v27 = vadd.f32 %v26, 2.0
    %v28 = vrsqrt.pop %v27
    %29 = vst.msk [vmem:[%s1] sm:$0x3] %vm21, %v28
  $region13: #{gcn_unet2_forward.23} parent=0 // pred_fallthru
    _
  // Predicated region
  $region14: #{gcn_unet2_forward.23} parent=0 // pred_check
    _
  $region15: #{gcn_unet2_forward.23} parent=0 // pred_check_branch
    %31 = sbr.rel (0) target = $region17
  $region16: #{gcn_unet2_forward.23} parent=0 // pred_region
    _
  $region17: #{gcn_unet2_forward.23} parent=0 // pred_fallthru
    _
  // Predicated region
  $region18: #{gcn_unet2_forward.23} parent=0 // pred_check
    _
  $region19: #{gcn_unet2_forward.23} parent=0 // pred_check_branch
    %33 = sbr.rel (0) target = $region21
  $region20: #{gcn_unet2_forward.23} parent=0 // pred_region
    _
  $region21: #{gcn_unet2_forward.23} parent=0 // pred_fallthru
    _

// kernel: gcn_unet2_forward.24
$region0: #{gcn_unet2_forward.24}
  #allocation0 [shape = 'u32[]', space=smem, size = 0x4, offset = 0x4, fixed_abs, tag = 'smem constant byte address 0x4 - core index']
  #allocation1 [shape = 'u32[144,128]{1,0:T(1,128)}', space=vmem, size = 0x12000, scoped, tag = 'internal scratch']
  %s0 = inlined_call_operand.vmem [shape: f32[2,1], index: 0, kind: input, shape index: {}]
  %s1 = inlined_call_operand.vmem [shape: bf16[2,2], index: 1, kind: input, shape index: {}]
  %s2 = inlined_call_operand.vmem [shape: bf16[2,128], index: 2, kind: input, shape index: {}]
  %s3 = inlined_call_operand.vmem [shape: f32[2,128], index: 3, kind: input, shape index: {}]
  %s4 = inlined_call_operand.vmem [shape: f32[128,128], index: 4, kind: input, shape index: {}]
  %s5 = inlined_call_operand.vmem [shape: f32[1,128], index: 5, kind: input, shape index: {}]
  %s6 = inlined_call_operand.vmem [shape: f32[2,128], index: 6, kind: output, shape index: {}]
  %s7 = sld [smem:[#allocation0]]
  $region42: #{gcn_unet2_forward.24} parent=0
    _
  %s9 = ssub.s32 1, %s7
  %s10 = scalar_select 0, %s9, %s7
  // Predicated region
  $region2: #{gcn_unet2_forward.24} parent=0 // pred_check
    _
  $region3: #{gcn_unet2_forward.24} parent=0 // pred_check_branch
    %12 = sbr.rel (0) target = $region5
  $region4: #{gcn_unet2_forward.24} parent=0 // pred_region
    _
  $region5: #{gcn_unet2_forward.24} parent=0 // pred_fallthru
    _
  // Predicated region
  $region6: #{gcn_unet2_forward.24} parent=0 // pred_check
    _
  $region7: #{gcn_unet2_forward.24} parent=0 // pred_check_branch
    %14 = sbr.rel (0) target = $region9
  $region8: #{gcn_unet2_forward.24} parent=0 // pred_region
    _
  $region9: #{gcn_unet2_forward.24} parent=0 // pred_fallthru
    _
  // Predicated region
  $region10: #{gcn_unet2_forward.24} parent=0 // pred_check
    _
  $region11: #{gcn_unet2_forward.24} parent=0 // pred_check_branch
    %16 = sbr.rel (0) target = $region13
  $region12: #{gcn_unet2_forward.24} parent=0 // pred_region
    _
  $region13: #{gcn_unet2_forward.24} parent=0 // pred_fallthru
    _
  // Predicated region
  $region14: #{gcn_unet2_forward.24} parent=0 // pred_check
    _
  $region15: #{gcn_unet2_forward.24} parent=0 // pred_check_branch
    %18 = sbr.rel (0) target = $region17
  $region16: #{gcn_unet2_forward.24} parent=0 // pred_region
    _
  $region17: #{gcn_unet2_forward.24} parent=0 // pred_fallthru
    _
  // Predicated region
  $region18: #{gcn_unet2_forward.24} parent=0 // pred_check
    _
  $region19: #{gcn_unet2_forward.24} parent=0 // pred_check_branch
    %20 = sbr.rel (0) target = $region21
  $region20: #{gcn_unet2_forward.24} parent=0 // pred_region
    _
  $region21: #{gcn_unet2_forward.24} parent=0 // pred_fallthru
    _
  // Predicated region
  $region22: #{gcn_unet2_forward.24} parent=0 // pred_check
    _
  $region23: #{gcn_unet2_forward.24} parent=0 // pred_check_branch
    %22 = sbr.rel (0) target = $region25
  $region24: #{gcn_unet2_forward.24} parent=0 // pred_region
    _
  $region25: #{gcn_unet2_forward.24} parent=0 // pred_fallthru
    _
  %p24 = scmp.eq.s32.totalorder 0, 0
  // Predicated region
  $region26: #{gcn_unet2_forward.24} parent=0 // pred_check
    %p25 = pneg %p24
  $region27: #{gcn_unet2_forward.24} parent=0 // pred_check_branch
    %27 = sbr.rel (%p25) target = $region29
  $region28: #{gcn_unet2_forward.24} parent=0 // pred_region
    %28 = vst [vmem:[%s6] sm:$0x3] 0.0
  $region29: #{gcn_unet2_forward.24} parent=0 // pred_fallthru
    _
  %v29 = vld [vmem:[%s6] sm:$0x3]
  %v30 = vld [vmem:[%s1] sm:$0x1]
  %v31 = vld [vmem:[%s2] sm:$0x1]
  %vm32 = vcmask 15360
  %v34 = vsel %vm32, %v30, 0
  %vm36 = vcmask 1040384
  %v38 = vsel %vm36, %v31, 0
  %40 = vmatprep.subr.bf16.mxu0 0
  %41 = vmatpush1.bf16.msra.mxu0 %v38
  %42 = vmatprep.subr.bf16.mxu0 0
  %43 = vmatpush1.bf16.msra.mxu0 0
  %44 = vmatprep.subr.bf16.mxu0 0
  %45 = vmatpush1.bf16.msra.mxu0 0
  %46 = vmatprep.subr.bf16.mxu0 0
  %47 = vmatpush1.bf16.msra.mxu0 0
  %48 = vmatprep.subr.bf16.mxu0 0
  %49 = vmatpush1.bf16.msra.mxu0 0
  %50 = vmatprep.subr.bf16.mxu0 0
  %51 = vmatpush1.bf16.msra.mxu0 0
  %52 = vmatprep.subr.bf16.mxu0 0
  %53 = vmatpush1.bf16.msra.mxu0 0
  %54 = vmatprep.subr.bf16.mxu0 0
  %55 = vmatpush1.bf16.msra.mxu0 0
  %56 = vmatprep.subr.bf16.mxu0 0
  %57 = vmatpush1.bf16.msra.mxu0 0
  %58 = vmatprep.subr.bf16.mxu0 0
  %59 = vmatpush1.bf16.msra.mxu0 0
  %60 = vmatprep.subr.bf16.mxu0 0
  %61 = vmatpush1.bf16.msra.mxu0 0
  %62 = vmatprep.subr.bf16.mxu0 0
  %63 = vmatpush1.bf16.msra.mxu0 0
  %64 = vmatprep.subr.bf16.mxu0 0
  %65 = vmatpush1.bf16.msra.mxu0 0
  %66 = vmatprep.subr.bf16.mxu0 0
  %67 = vmatpush1.bf16.msra.mxu0 0
  %68 = vmatprep.subr.bf16.mxu0 0
  %69 = vmatpush1.bf16.msra.mxu0 0
  %70 = vmatprep.subr.bf16.mxu0 0
  %71 = vmatpush1.bf16.msra.mxu0 0
  %72 = vmatprep.mubr.bf16.mxu0 0
  %73 = vmatmul.mubr.bf16.gmra.mrb[0].mxu0 %v34
  %v74 = vpop.f32.mrb[0].mxu0
  %v75 = vadd.f32 0.0, %v74
  %v76 = vpop.f32.mrb[0].mxu0
  %v77 = vpop.f32.mrb[0].mxu0
  %v78 = vpop.f32.mrb[0].mxu0
  %79 = vdwg.mxu0
  %v80 = vadd.f32 %v29, %v75
  %81 = vst [vmem:[%s6] sm:$0x3] %v80
  // Predicated region
  $region30: #{gcn_unet2_forward.24} parent=0 // pred_check
    %p82 = pneg %p24
  $region31: #{gcn_unet2_forward.24} parent=0 // pred_check_branch
    %84 = sbr.rel (%p82) target = $region33
  $region32: #{gcn_unet2_forward.24} parent=0 // pred_region
    %v85 = vld [vmem:[%s0] sm:$0x3]
    %v86 = vld [vmem:[%s6] sm:$0x3]
    %v87 = vmul.f32 %v85, 2.0
    %v88 = vld [vmem:[%s3] sm:$0x3]
    %90 = vset.pattern.permute.xlu0 0
    %91 = vperm.xlu0 %90, %v87
    %v92 = vpop.permute.xlu0 %91
    %v94 = vmul.f32 %v92, %v88
    %v95 = vadd.f32 %v86, %v94
    %97 = vset.pattern.permute.xlu0 0
    %98 = vperm.xlu0 %97, %v85
    %v99 = vpop.permute.xlu0 %98
    %v101 = vmul.f32 %v99, %v95
    %v102 = vld [vmem:[%s4] sm:$0xff]
    %v103 = vld [vmem:[%s4 + $0x8] sm:$0xff]
    %v104 = vld [vmem:[%s4 + $0x10] sm:$0xff]
    %v105 = vld [vmem:[%s4 + $0x18] sm:$0xff]
    %v106 = vld [vmem:[%s4 + $0x20] sm:$0xff]
    %v107 = vld [vmem:[%s4 + $0x28] sm:$0xff]
    %v108 = vld [vmem:[%s4 + $0x30] sm:$0xff]
    %v109 = vld [vmem:[%s4 + $0x38] sm:$0xff]
    %v110 = vld [vmem:[%s4 + $0x40] sm:$0xff]
    %v111 = vld [vmem:[%s4 + $0x48] sm:$0xff]
    %v112 = vld [vmem:[%s4 + $0x50] sm:$0xff]
    %v113 = vld [vmem:[%s4 + $0x58] sm:$0xff]
    %v114 = vld [vmem:[%s4 + $0x60] sm:$0xff]
    %v115 = vld [vmem:[%s4 + $0x68] sm:$0xff]
    %v116 = vld [vmem:[%s4 + $0x70] sm:$0xff]
    %v117 = vld [vmem:[%s4 + $0x78] sm:$0xff]
    %v118 = vld [vmem:[%s5] sm:$0x1]
    %v120 = vlaneseq
    %v121 = vshrl.u32 %v120, 7
    %v122 = vsub.s32 0, %v121
    %v123 = vrot.slane %v118, %v122
    %125 = vmatprep.subr.mxu0 0.0
    %126 = vmatpush1.msra.mxu0 %v102
    %127 = vmatprep.subr.mxu0 0.0
    %128 = vmatpush1.msra.mxu0 %v103
    %129 = vmatprep.subr.mxu0 0.0
    %130 = vmatpush1.msra.mxu0 %v104
    %131 = vmatprep.subr.mxu0 0.0
    %132 = vmatpush1.msra.mxu0 %v105
    %133 = vmatprep.subr.mxu0 0.0
    %134 = vmatpush1.msra.mxu0 %v106
    %135 = vmatprep.subr.mxu0 0.0
    %136 = vmatpush1.msra.mxu0 %v107
    %137 = vmatprep.subr.mxu0 0.0
    %138 = vmatpush1.msra.mxu0 %v108
    %139 = vmatprep.subr.mxu0 0.0
    %140 = vmatpush1.msra.mxu0 %v109
    %141 = vmatprep.subr.mxu0 0.0
    %142 = vmatpush1.msra.mxu0 %v110
    %143 = vmatprep.subr.mxu0 0.0
    %144 = vmatpush1.msra.mxu0 %v111
    %145 = vmatprep.subr.mxu0 0.0
    %146 = vmatpush1.msra.mxu0 %v112
    %147 = vmatprep.subr.mxu0 0.0
    %148 = vmatpush1.msra.mxu0 %v113
    %149 = vmatprep.subr.mxu0 0.0
    %150 = vmatpush1.msra.mxu0 %v114
    %151 = vmatprep.subr.mxu0 0.0
    %152 = vmatpush1.msra.mxu0 %v115
    %153 = vmatprep.subr.mxu0 0.0
    %154 = vmatpush1.msra.mxu0 %v116
    %155 = vmatprep.subr.mxu0 0.0
    %156 = vmatpush1.msra.mxu0 %v117
    %157 = vmatprep.subr.mxu0 0.0
    %158 = vmatpush1.msra.mxu0 0.0
    %159 = vmatprep.subr.mxu0 0.0
    %160 = vmatpush1.msra.mxu0 0.0
    %161 = vmatprep.subr.mxu0 0.0
    %162 = vmatpush1.msra.mxu0 0.0
    %163 = vmatprep.subr.mxu0 0.0
    %164 = vmatpush1.msra.mxu0 0.0
    %165 = vmatprep.subr.mxu0 0.0
    %166 = vmatpush1.msra.mxu0 0.0
    %167 = vmatprep.subr.mxu0 0.0
    %168 = vmatpush1.msra.mxu0 0.0
    %169 = vmatprep.subr.mxu0 0.0
    %170 = vmatpush1.msra.mxu0 0.0
    %171 = vmatprep.subr.mxu0 0.0
    %172 = vmatpush1.msra.mxu0 0.0
    %173 = vmatprep.subr.mxu0 0.0
    %174 = vmatpush1.msra.mxu0 0.0
    %175 = vmatprep.subr.mxu0 0.0
    %176 = vmatpush1.msra.mxu0 0.0
    %177 = vmatprep.subr.mxu0 0.0
    %178 = vmatpush1.msra.mxu0 0.0
    %179 = vmatprep.subr.mxu0 0.0
    %180 = vmatpush1.msra.mxu0 0.0
    %181 = vmatprep.subr.mxu0 0.0
    %182 = vmatpush1.msra.mxu0 0.0
    %183 = vmatprep.subr.mxu0 0.0
    %184 = vmatpush1.msra.mxu0 0.0
    %185 = vmatprep.subr.mxu0 0.0
    %186 = vmatpush1.msra.mxu0 0.0
    %187 = vmatprep.subr.mxu0 0.0
    %188 = vmatpush1.msra.mxu0 0.0
    %189 = vmatprep.mubr.f32.mxu0 0.0
    %190 = vmatmul.mubr.f32.gmra.mrb[0].mxu0 %v101
    %v191 = vpop.f32.mrb[0].mxu0
    %v192 = vadd.f32 %v123, %v191
    %v193 = vpop.f32.mrb[0].mxu0
    %194 = vdwg.mxu0
    %v195 = vmax.f32 %v192, 0.0
    %196 = vst [vmem:[%s6] sm:$0x3] %v195
  $region33: #{gcn_unet2_forward.24} parent=0 // pred_fallthru
    _
  // Predicated region
  $region34: #{gcn_unet2_forward.24} parent=0 // pred_check
    _
  $region35: #{gcn_unet2_forward.24} parent=0 // pred_check_branch
    %198 = sbr.rel (0) target = $region37
  $region36: #{gcn_unet2_forward.24} parent=0 // pred_region
    _
  $region37: #{gcn_unet2_forward.24} parent=0 // pred_fallthru
    _
  // Predicated region
  $region38: #{gcn_unet2_forward.24} parent=0 // pred_check
    _
  $region39: #{gcn_unet2_forward.24} parent=0 // pred_check_branch
    %200 = sbr.rel (0) target = $region41
  $region40: #{gcn_unet2_forward.24} parent=0 // pred_region
    _
  $region41: #{gcn_unet2_forward.24} parent=0 // pred_fallthru
    _

// kernel: gcn_unet2_forward.25
$region0: #{gcn_unet2_forward.25}
  #allocation0 [shape = 'u32[]', space=smem, size = 0x4, offset = 0x4, fixed_abs, tag = 'smem constant byte address 0x4 - core index']
  #allocation1 [shape = 'u32[144,128]{1,0:T(1,128)}', space=vmem, size = 0x12000, scoped, tag = 'internal scratch']
  %s0 = inlined_call_operand.vmem [shape: f32[4,1], index: 0, kind: input, shape index: {}]
  %s1 = inlined_call_operand.vmem [shape: bf16[4,4], index: 1, kind: input, shape index: {}]
  %s2 = inlined_call_operand.vmem [shape: bf16[4,128], index: 2, kind: input, shape index: {}]
  %s3 = inlined_call_operand.vmem [shape: f32[4,128], index: 3, kind: input, shape index: {}]
  %s4 = inlined_call_operand.vmem [shape: f32[128,128], index: 4, kind: input, shape index: {}]
  %s5 = inlined_call_operand.vmem [shape: f32[1,128], index: 5, kind: input, shape index: {}]
  %s6 = inlined_call_operand.vmem [shape: f32[4,128], index: 6, kind: output, shape index: {}]
  %s7 = sld [smem:[#allocation0]]
  $region42: #{gcn_unet2_forward.25} parent=0
    _
  %s9 = ssub.s32 1, %s7
  %s10 = scalar_select 0, %s9, %s7
  // Predicated region
  $region2: #{gcn_unet2_forward.25} parent=0 // pred_check
    _
  $region3: #{gcn_unet2_forward.25} parent=0 // pred_check_branch
    %12 = sbr.rel (0) target = $region5
  $region4: #{gcn_unet2_forward.25} parent=0 // pred_region
    _
  $region5: #{gcn_unet2_forward.25} parent=0 // pred_fallthru
    _
  // Predicated region
  $region6: #{gcn_unet2_forward.25} parent=0 // pred_check
    _
  $region7: #{gcn_unet2_forward.25} parent=0 // pred_check_branch
    %14 = sbr.rel (0) target = $region9
  $region8: #{gcn_unet2_forward.25} parent=0 // pred_region
    _
  $region9: #{gcn_unet2_forward.25} parent=0 // pred_fallthru
    _
  // Predicated region
  $region10: #{gcn_unet2_forward.25} parent=0 // pred_check
    _
  $region11: #{gcn_unet2_forward.25} parent=0 // pred_check_branch
    %16 = sbr.rel (0) target = $region13
  $region12: #{gcn_unet2_forward.25} parent=0 // pred_region
    _
  $region13: #{gcn_unet2_forward.25} parent=0 // pred_fallthru
    _
  // Predicated region
  $region14: #{gcn_unet2_forward.25} parent=0 // pred_check
    _
  $region15: #{gcn_unet2_forward.25} parent=0 // pred_check_branch
    %18 = sbr.rel (0) target = $region17
  $region16: #{gcn_unet2_forward.25} parent=0 // pred_region
    _
  $region17: #{gcn_unet2_forward.25} parent=0 // pred_fallthru
    _
  // Predicated region
  $region18: #{gcn_unet2_forward.25} parent=0 // pred_check
    _
  $region19: #{gcn_unet2_forward.25} parent=0 // pred_check_branch
    %20 = sbr.rel (0) target = $region21
  $region20: #{gcn_unet2_forward.25} parent=0 // pred_region
    _
  $region21: #{gcn_unet2_forward.25} parent=0 // pred_fallthru
    _
  // Predicated region
  $region22: #{gcn_unet2_forward.25} parent=0 // pred_check
    _
  $region23: #{gcn_unet2_forward.25} parent=0 // pred_check_branch
    %22 = sbr.rel (0) target = $region25
  $region24: #{gcn_unet2_forward.25} parent=0 // pred_region
    _
  $region25: #{gcn_unet2_forward.25} parent=0 // pred_fallthru
    _
  %p24 = scmp.eq.s32.totalorder 0, 0
  // Predicated region
  $region26: #{gcn_unet2_forward.25} parent=0 // pred_check
    %p25 = pneg %p24
  $region27: #{gcn_unet2_forward.25} parent=0 // pred_check_branch
    %27 = sbr.rel (%p25) target = $region29
  $region28: #{gcn_unet2_forward.25} parent=0 // pred_region
    %28 = vst [vmem:[%s6] sm:$0xf] 0.0
  $region29: #{gcn_unet2_forward.25} parent=0 // pred_fallthru
    _
  %v29 = vld [vmem:[%s6] sm:$0xf]
  %v30 = vld [vmem:[%s1] sm:$0x3]
  %v31 = vld [vmem:[%s2] sm:$0x3]
  %vm32 = vcmask 31744
  %v34 = vsel %vm32, %v30, 0
  %vm36 = vcmask 1041408
  %v38 = vsel %vm36, %v31, 0
  %40 = vmatprep.subr.bf16.mxu0 0
  %41 = vmatpush1.bf16.msra.mxu0 %v38
  %42 = vmatprep.subr.bf16.mxu0 0
  %43 = vmatpush1.bf16.msra.mxu0 0
  %44 = vmatprep.subr.bf16.mxu0 0
  %45 = vmatpush1.bf16.msra.mxu0 0
  %46 = vmatprep.subr.bf16.mxu0 0
  %47 = vmatpush1.bf16.msra.mxu0 0
  %48 = vmatprep.subr.bf16.mxu0 0
  %49 = vmatpush1.bf16.msra.mxu0 0
  %50 = vmatprep.subr.bf16.mxu0 0
  %51 = vmatpush1.bf16.msra.mxu0 0
  %52 = vmatprep.subr.bf16.mxu0 0
  %53 = vmatpush1.bf16.msra.mxu0 0
  %54 = vmatprep.subr.bf16.mxu0 0
  %55 = vmatpush1.bf16.msra.mxu0 0
  %56 = vmatprep.subr.bf16.mxu0 0
  %57 = vmatpush1.bf16.msra.mxu0 0
  %58 = vmatprep.subr.bf16.mxu0 0
  %59 = vmatpush1.bf16.msra.mxu0 0
  %60 = vmatprep.subr.bf16.mxu0 0
  %61 = vmatpush1.bf16.msra.mxu0 0
  %62 = vmatprep.subr.bf16.mxu0 0
  %63 = vmatpush1.bf16.msra.mxu0 0
  %64 = vmatprep.subr.bf16.mxu0 0
  %65 = vmatpush1.bf16.msra.mxu0 0
  %66 = vmatprep.subr.bf16.mxu0 0
  %67 = vmatpush1.bf16.msra.mxu0 0
  %68 = vmatprep.subr.bf16.mxu0 0
  %69 = vmatpush1.bf16.msra.mxu0 0
  %70 = vmatprep.subr.bf16.mxu0 0
  %71 = vmatpush1.bf16.msra.mxu0 0
  %72 = vmatprep.mubr.bf16.mxu0 0
  %73 = vmatmul.mubr.bf16.gmra.mrb[0].mxu0 %v34
  %v74 = vpop.f32.mrb[0].mxu0
  %v75 = vadd.f32 0.0, %v74
  %v76 = vpop.f32.mrb[0].mxu0
  %v77 = vpop.f32.mrb[0].mxu0
  %v78 = vpop.f32.mrb[0].mxu0
  %79 = vdwg.mxu0
  %v80 = vadd.f32 %v29, %v75
  %81 = vst [vmem:[%s6] sm:$0xf] %v80
  // Predicated region
  $region30: #{gcn_unet2_forward.25} parent=0 // pred_check
    %p82 = pneg %p24
  $region31: #{gcn_unet2_forward.25} parent=0 // pred_check_branch
    %84 = sbr.rel (%p82) target = $region33
  $region32: #{gcn_unet2_forward.25} parent=0 // pred_region
    %v85 = vld [vmem:[%s0] sm:$0xf]
    %v86 = vld [vmem:[%s6] sm:$0xf]
    %v87 = vmul.f32 %v85, 2.0
    %v88 = vld [vmem:[%s3] sm:$0xf]
    %90 = vset.pattern.permute.xlu0 0
    %91 = vperm.xlu0 %90, %v87
    %v92 = vpop.permute.xlu0 %91
    %v94 = vmul.f32 %v92, %v88
    %v95 = vadd.f32 %v86, %v94
    %97 = vset.pattern.permute.xlu0 0
    %98 = vperm.xlu0 %97, %v85
    %v99 = vpop.permute.xlu0 %98
    %v101 = vmul.f32 %v99, %v95
    %v102 = vld [vmem:[%s4] sm:$0xff]
    %v103 = vld [vmem:[%s4 + $0x8] sm:$0xff]
    %v104 = vld [vmem:[%s4 + $0x10] sm:$0xff]
    %v105 = vld [vmem:[%s4 + $0x18] sm:$0xff]
    %v106 = vld [vmem:[%s4 + $0x20] sm:$0xff]
    %v107 = vld [vmem:[%s4 + $0x28] sm:$0xff]
    %v108 = vld [vmem:[%s4 + $0x30] sm:$0xff]
    %v109 = vld [vmem:[%s4 + $0x38] sm:$0xff]
    %v110 = vld [vmem:[%s4 + $0x40] sm:$0xff]
    %v111 = vld [vmem:[%s4 + $0x48] sm:$0xff]
    %v112 = vld [vmem:[%s4 + $0x50] sm:$0xff]
    %v113 = vld [vmem:[%s4 + $0x58] sm:$0xff]
    %v114 = vld [vmem:[%s4 + $0x60] sm:$0xff]
    %v115 = vld [vmem:[%s4 + $0x68] sm:$0xff]
    %v116 = vld [vmem:[%s4 + $0x70] sm:$0xff]
    %v117 = vld [vmem:[%s4 + $0x78] sm:$0xff]
    %v118 = vld [vmem:[%s5] sm:$0x1]
    %v120 = vlaneseq
    %v121 = vshrl.u32 %v120, 7
    %v122 = vsub.s32 0, %v121
    %v123 = vrot.slane %v118, %v122
    %125 = vmatprep.subr.mxu0 0.0
    %126 = vmatpush1.msra.mxu0 %v102
    %127 = vmatprep.subr.mxu0 0.0
    %128 = vmatpush1.msra.mxu0 %v103
    %129 = vmatprep.subr.mxu0 0.0
    %130 = vmatpush1.msra.mxu0 %v104
    %131 = vmatprep.subr.mxu0 0.0
    %132 = vmatpush1.msra.mxu0 %v105
    %133 = vmatprep.subr.mxu0 0.0
    %134 = vmatpush1.msra.mxu0 %v106
    %135 = vmatprep.subr.mxu0 0.0
    %136 = vmatpush1.msra.mxu0 %v107
    %137 = vmatprep.subr.mxu0 0.0
    %138 = vmatpush1.msra.mxu0 %v108
    %139 = vmatprep.subr.mxu0 0.0
    %140 = vmatpush1.msra.mxu0 %v109
    %141 = vmatprep.subr.mxu0 0.0
    %142 = vmatpush1.msra.mxu0 %v110
    %143 = vmatprep.subr.mxu0 0.0
    %144 = vmatpush1.msra.mxu0 %v111
    %145 = vmatprep.subr.mxu0 0.0
    %146 = vmatpush1.msra.mxu0 %v112
    %147 = vmatprep.subr.mxu0 0.0
    %148 = vmatpush1.msra.mxu0 %v113
    %149 = vmatprep.subr.mxu0 0.0
    %150 = vmatpush1.msra.mxu0 %v114
    %151 = vmatprep.subr.mxu0 0.0
    %152 = vmatpush1.msra.mxu0 %v115
    %153 = vmatprep.subr.mxu0 0.0
    %154 = vmatpush1.msra.mxu0 %v116
    %155 = vmatprep.subr.mxu0 0.0
    %156 = vmatpush1.msra.mxu0 %v117
    %157 = vmatprep.subr.mxu0 0.0
    %158 = vmatpush1.msra.mxu0 0.0
    %159 = vmatprep.subr.mxu0 0.0
    %160 = vmatpush1.msra.mxu0 0.0
    %161 = vmatprep.subr.mxu0 0.0
    %162 = vmatpush1.msra.mxu0 0.0
    %163 = vmatprep.subr.mxu0 0.0
    %164 = vmatpush1.msra.mxu0 0.0
    %165 = vmatprep.subr.mxu0 0.0
    %166 = vmatpush1.msra.mxu0 0.0
    %167 = vmatprep.subr.mxu0 0.0
    %168 = vmatpush1.msra.mxu0 0.0
    %169 = vmatprep.subr.mxu0 0.0
    %170 = vmatpush1.msra.mxu0 0.0
    %171 = vmatprep.subr.mxu0 0.0
    %172 = vmatpush1.msra.mxu0 0.0
    %173 = vmatprep.subr.mxu0 0.0
    %174 = vmatpush1.msra.mxu0 0.0
    %175 = vmatprep.subr.mxu0 0.0
    %176 = vmatpush1.msra.mxu0 0.0
    %177 = vmatprep.subr.mxu0 0.0
    %178 = vmatpush1.msra.mxu0 0.0
    %179 = vmatprep.subr.mxu0 0.0
    %180 = vmatpush1.msra.mxu0 0.0
    %181 = vmatprep.subr.mxu0 0.0
    %182 = vmatpush1.msra.mxu0 0.0
    %183 = vmatprep.subr.mxu0 0.0
    %184 = vmatpush1.msra.mxu0 0.0
    %185 = vmatprep.subr.mxu0 0.0
    %186 = vmatpush1.msra.mxu0 0.0
    %187 = vmatprep.subr.mxu0 0.0
    %188 = vmatpush1.msra.mxu0 0.0
    %189 = vmatprep.mubr.f32.mxu0 0.0
    %190 = vmatmul.mubr.f32.gmra.mrb[0].mxu0 %v101
    %v191 = vpop.f32.mrb[0].mxu0
    %v192 = vadd.f32 %v123, %v191
    %v193 = vpop.f32.mrb[0].mxu0
    %194 = vdwg.mxu0
    %v195 = vmax.f32 %v192, 0.0
    %196 = vst [vmem:[%s6] sm:$0xf] %v195
  $region33: #{gcn_unet2_forward.25} parent=0 // pred_fallthru
    _
  // Predicated region
  $region34: #{gcn_unet2_forward.25} parent=0 // pred_check
    _
  $region35: #{gcn_unet2_forward.25} parent=0 // pred_check_branch
    %198 = sbr.rel (0) target = $region37
  $region36: #{gcn_unet2_forward.25} parent=0 // pred_region
    _
  $region37: #{gcn_unet2_forward.25} parent=0 // pred_fallthru
    _
  // Predicated region
  $region38: #{gcn_unet2_forward.25} parent=0 // pred_check
    _
  $region39: #{gcn_unet2_forward.25} parent=0 // pred_check_branch
    %200 = sbr.rel (0) target = $region41
  $region40: #{gcn_unet2_forward.25} parent=0 // pred_region
    _
  $region41: #{gcn_unet2_forward.25} parent=0 // pred_fallthru
    _

// kernel: gcn_unet2_forward.26
$region0: #{gcn_unet2_forward.26}
  #allocation0 [shape = 'u32[]', space=smem, size = 0x4, offset = 0x4, fixed_abs, tag = 'smem constant byte address 0x4 - core index']
  #allocation1 [shape = 'u32[144,128]{1,0:T(1,128)}', space=vmem, size = 0x12000, scoped, tag = 'internal scratch']
  %s0 = inlined_call_operand.vmem [shape: f32[8,1], index: 0, kind: input, shape index: {}]
  %s1 = inlined_call_operand.vmem [shape: bf16[8,8], index: 1, kind: input, shape index: {}]
  %s2 = inlined_call_operand.vmem [shape: bf16[8,128], index: 2, kind: input, shape index: {}]
  %s3 = inlined_call_operand.vmem [shape: f32[8,128], index: 3, kind: input, shape index: {}]
  %s4 = inlined_call_operand.vmem [shape: f32[128,128], index: 4, kind: input, shape index: {}]
  %s5 = inlined_call_operand.vmem [shape: f32[1,128], index: 5, kind: input, shape index: {}]
  %s6 = inlined_call_operand.vmem [shape: f32[8,128], index: 6, kind: output, shape index: {}]
  %s7 = sld [smem:[#allocation0]]
  $region42: #{gcn_unet2_forward.26} parent=0
    _
  %s9 = ssub.s32 1, %s7
  %s10 = scalar_select 0, %s9, %s7
  // Predicated region
  $region2: #{gcn_unet2_forward.26} parent=0 // pred_check
    _
  $region3: #{gcn_unet2_forward.26} parent=0 // pred_check_branch
    %12 = sbr.rel (0) target = $region5
  $region4: #{gcn_unet2_forward.26} parent=0 // pred_region
    _
  $region5: #{gcn_unet2_forward.26} parent=0 // pred_fallthru
    _
  // Predicated region
  $region6: #{gcn_unet2_forward.26} parent=0 // pred_check
    _
  $region7: #{gcn_unet2_forward.26} parent=0 // pred_check_branch
    %14 = sbr.rel (0) target = $region9
  $region8: #{gcn_unet2_forward.26} parent=0 // pred_region
    _
  $region9: #{gcn_unet2_forward.26} parent=0 // pred_fallthru
    _
  // Predicated region
  $region10: #{gcn_unet2_forward.26} parent=0 // pred_check
    _
  $region11: #{gcn_unet2_forward.26} parent=0 // pred_check_branch
    %16 = sbr.rel (0) target = $region13
  $region12: #{gcn_unet2_forward.26} parent=0 // pred_region
    _
  $region13: #{gcn_unet2_forward.26} parent=0 // pred_fallthru
    _
  // Predicated region
  $region14: #{gcn_unet2_forward.26} parent=0 // pred_check
    _
  $region15: #{gcn_unet2_forward.26} parent=0 // pred_check_branch
    %18 = sbr.rel (0) target = $region17
  $region16: #{gcn_unet2_forward.26} parent=0 // pred_region
    _
  $region17: #{gcn_unet2_forward.26} parent=0 // pred_fallthru
    _
  // Predicated region
  $region18: #{gcn_unet2_forward.26} parent=0 // pred_check
    _
  $region19: #{gcn_unet2_forward.26} parent=0 // pred_check_branch
    %20 = sbr.rel (0) target = $region21
  $region20: #{gcn_unet2_forward.26} parent=0 // pred_region
    _
  $region21: #{gcn_unet2_forward.26} parent=0 // pred_fallthru
    _
  // Predicated region
  $region22: #{gcn_unet2_forward.26} parent=0 // pred_check
    _
  $region23: #{gcn_unet2_forward.26} parent=0 // pred_check_branch
    %22 = sbr.rel (0) target = $region25
  $region24: #{gcn_unet2_forward.26} parent=0 // pred_region
    _
  $region25: #{gcn_unet2_forward.26} parent=0 // pred_fallthru
    _
  %p24 = scmp.eq.s32.totalorder 0, 0
  // Predicated region
  $region26: #{gcn_unet2_forward.26} parent=0 // pred_check
    %p25 = pneg %p24
  $region27: #{gcn_unet2_forward.26} parent=0 // pred_check_branch
    %27 = sbr.rel (%p25) target = $region29
  $region28: #{gcn_unet2_forward.26} parent=0 // pred_region
    %28 = vst [vmem:[%s6] sm:$0xff] 0.0
  $region29: #{gcn_unet2_forward.26} parent=0 // pred_fallthru
    _
  %v29 = vld [vmem:[%s6] sm:$0xff]
  %v30 = vld [vmem:[%s1] sm:$0xf]
  %v31 = vld [vmem:[%s2] sm:$0xf]
  %vm32 = vcmask 64512
  %v34 = vsel %vm32, %v30, 0
  %vm36 = vcmask 1043456
  %v38 = vsel %vm36, %v31, 0
  %40 = vmatprep.subr.bf16.mxu0 0
  %41 = vmatpush1.bf16.msra.mxu0 %v38
  %42 = vmatprep.subr.bf16.mxu0 0
  %43 = vmatpush1.bf16.msra.mxu0 0
  %44 = vmatprep.subr.bf16.mxu0 0
  %45 = vmatpush1.bf16.msra.mxu0 0
  %46 = vmatprep.subr.bf16.mxu0 0
  %47 = vmatpush1.bf16.msra.mxu0 0
  %48 = vmatprep.subr.bf16.mxu0 0
  %49 = vmatpush1.bf16.msra.mxu0 0
  %50 = vmatprep.subr.bf16.mxu0 0
  %51 = vmatpush1.bf16.msra.mxu0 0
  %52 = vmatprep.subr.bf16.mxu0 0
  %53 = vmatpush1.bf16.msra.mxu0 0
  %54 = vmatprep.subr.bf16.mxu0 0
  %55 = vmatpush1.bf16.msra.mxu0 0
  %56 = vmatprep.subr.bf16.mxu0 0
  %57 = vmatpush1.bf16.msra.mxu0 0
  %58 = vmatprep.subr.bf16.mxu0 0
  %59 = vmatpush1.bf16.msra.mxu0 0
  %60 = vmatprep.subr.bf16.mxu0 0
  %61 = vmatpush1.bf16.msra.mxu0 0
  %62 = vmatprep.subr.bf16.mxu0 0
  %63 = vmatpush1.bf16.msra.mxu0 0
  %64 = vmatprep.subr.bf16.mxu0 0
  %65 = vmatpush1.bf16.msra.mxu0 0
  %66 = vmatprep.subr.bf16.mxu0 0
  %67 = vmatpush1.bf16.msra.mxu0 0
  %68 = vmatprep.subr.bf16.mxu0 0
  %69 = vmatpush1.bf16.msra.mxu0 0
  %70 = vmatprep.subr.bf16.mxu0 0
  %71 = vmatpush1.bf16.msra.mxu0 0
  %72 = vmatprep.mubr.bf16.mxu0 0
  %73 = vmatmul.mubr.bf16.gmra.mrb[0].mxu0 %v34
  %v74 = vpop.f32.mrb[0].mxu0
  %v75 = vadd.f32 0.0, %v74
  %v76 = vpop.f32.mrb[0].mxu0
  %v77 = vpop.f32.mrb[0].mxu0
  %v78 = vpop.f32.mrb[0].mxu0
  %79 = vdwg.mxu0
  %v80 = vadd.f32 %v29, %v75
  %81 = vst [vmem:[%s6] sm:$0xff] %v80
  // Predicated region
  $region30: #{gcn_unet2_forward.26} parent=0 // pred_check
    %p82 = pneg %p24
  $region31: #{gcn_unet2_forward.26} parent=0 // pred_check_branch
    %84 = sbr.rel (%p82) target = $region33
  $region32: #{gcn_unet2_forward.26} parent=0 // pred_region
    %v85 = vld [vmem:[%s0] sm:$0xff]
    %v86 = vld [vmem:[%s6] sm:$0xff]
    %v87 = vmul.f32 %v85, 2.0
    %v88 = vld [vmem:[%s3] sm:$0xff]
    %90 = vset.pattern.permute.xlu0 0
    %91 = vperm.xlu0 %90, %v87
    %v92 = vpop.permute.xlu0 %91
    %v94 = vmul.f32 %v92, %v88
    %v95 = vadd.f32 %v86, %v94
    %97 = vset.pattern.permute.xlu0 0
    %98 = vperm.xlu0 %97, %v85
    %v99 = vpop.permute.xlu0 %98
    %v101 = vmul.f32 %v99, %v95
    %v102 = vld [vmem:[%s4] sm:$0xff]
    %v103 = vld [vmem:[%s4 + $0x8] sm:$0xff]
    %v104 = vld [vmem:[%s4 + $0x10] sm:$0xff]
    %v105 = vld [vmem:[%s4 + $0x18] sm:$0xff]
    %v106 = vld [vmem:[%s4 + $0x20] sm:$0xff]
    %v107 = vld [vmem:[%s4 + $0x28] sm:$0xff]
    %v108 = vld [vmem:[%s4 + $0x30] sm:$0xff]
    %v109 = vld [vmem:[%s4 + $0x38] sm:$0xff]
    %v110 = vld [vmem:[%s4 + $0x40] sm:$0xff]
    %v111 = vld [vmem:[%s4 + $0x48] sm:$0xff]
    %v112 = vld [vmem:[%s4 + $0x50] sm:$0xff]
    %v113 = vld [vmem:[%s4 + $0x58] sm:$0xff]
    %v114 = vld [vmem:[%s4 + $0x60] sm:$0xff]
    %v115 = vld [vmem:[%s4 + $0x68] sm:$0xff]
    %v116 = vld [vmem:[%s4 + $0x70] sm:$0xff]
    %v117 = vld [vmem:[%s4 + $0x78] sm:$0xff]
    %v118 = vld [vmem:[%s5] sm:$0x1]
    %v120 = vlaneseq
    %v121 = vshrl.u32 %v120, 7
    %v122 = vsub.s32 0, %v121
    %v123 = vrot.slane %v118, %v122
    %125 = vmatprep.subr.mxu0 0.0
    %126 = vmatpush1.msra.mxu0 %v102
    %127 = vmatprep.subr.mxu0 0.0
    %128 = vmatpush1.msra.mxu0 %v103
    %129 = vmatprep.subr.mxu0 0.0
    %130 = vmatpush1.msra.mxu0 %v104
    %131 = vmatprep.subr.mxu0 0.0
    %132 = vmatpush1.msra.mxu0 %v105
    %133 = vmatprep.subr.mxu0 0.0
    %134 = vmatpush1.msra.mxu0 %v106
    %135 = vmatprep.subr.mxu0 0.0
    %136 = vmatpush1.msra.mxu0 %v107
    %137 = vmatprep.subr.mxu0 0.0
    %138 = vmatpush1.msra.mxu0 %v108
    %139 = vmatprep.subr.mxu0 0.0
    %140 = vmatpush1.msra.mxu0 %v109
    %141 = vmatprep.subr.mxu0 0.0
    %142 = vmatpush1.msra.mxu0 %v110
    %143 = vmatprep.subr.mxu0 0.0
    %144 = vmatpush1.msra.mxu0 %v111
    %145 = vmatprep.subr.mxu0 0.0
    %146 = vmatpush1.msra.mxu0 %v112
    %147 = vmatprep.subr.mxu0 0.0
    %148 = vmatpush1.msra.mxu0 %v113
    %149 = vmatprep.subr.mxu0 0.0
    %150 = vmatpush1.msra.mxu0 %v114
    %151 = vmatprep.subr.mxu0 0.0
    %152 = vmatpush1.msra.mxu0 %v115
    %153 = vmatprep.subr.mxu0 0.0
    %154 = vmatpush1.msra.mxu0 %v116
    %155 = vmatprep.subr.mxu0 0.0
    %156 = vmatpush1.msra.mxu0 %v117
    %157 = vmatprep.subr.mxu0 0.0
    %158 = vmatpush1.msra.mxu0 0.0
    %159 = vmatprep.subr.mxu0 0.0
    %160 = vmatpush1.msra.mxu0 0.0
    %161 = vmatprep.subr.mxu0 0.0
    %162 = vmatpush1.msra.mxu0 0.0
    %163 = vmatprep.subr.mxu0 0.0
    %164 = vmatpush1.msra.mxu0 0.0
    %165 = vmatprep.subr.mxu0 0.0
    %166 = vmatpush1.msra.mxu0 0.0
    %167 = vmatprep.subr.mxu0 0.0
    %168 = vmatpush1.msra.mxu0 0.0
    %169 = vmatprep.subr.mxu0 0.0
    %170 = vmatpush1.msra.mxu0 0.0
    %171 = vmatprep.subr.mxu0 0.0
    %172 = vmatpush1.msra.mxu0 0.0
    %173 = vmatprep.subr.mxu0 0.0
    %174 = vmatpush1.msra.mxu0 0.0
    %175 = vmatprep.subr.mxu0 0.0
    %176 = vmatpush1.msra.mxu0 0.0
    %177 = vmatprep.subr.mxu0 0.0
    %178 = vmatpush1.msra.mxu0 0.0
    %179 = vmatprep.subr.mxu0 0.0
    %180 = vmatpush1.msra.mxu0 0.0
    %181 = vmatprep.subr.mxu0 0.0
    %182 = vmatpush1.msra.mxu0 0.0
    %183 = vmatprep.subr.mxu0 0.0
    %184 = vmatpush1.msra.mxu0 0.0
    %185 = vmatprep.subr.mxu0 0.0
    %186 = vmatpush1.msra.mxu0 0.0
    %187 = vmatprep.subr.mxu0 0.0
    %188 = vmatpush1.msra.mxu0 0.0
    %189 = vmatprep.mubr.f32.mxu0 0.0
    %190 = vmatmul.mubr.f32.gmra.mrb[0].mxu0 %v101
    %v191 = vpop.f32.mrb[0].mxu0
    %v192 = vadd.f32 %v123, %v191
    %v193 = vpop.f32.mrb[0].mxu0
    %194 = vdwg.mxu0
    %v195 = vmax.f32 %v192, 0.0
    %196 = vst [vmem:[%s6] sm:$0xff] %v195
  $region33: #{gcn_unet2_forward.26} parent=0 // pred_fallthru
    _
  // Predicated region
  $region34: #{gcn_unet2_forward.26} parent=0 // pred_check
    _
  $region35: #{gcn_unet2_forward.26} parent=0 // pred_check_branch
    %198 = sbr.rel (0) target = $region37
  $region36: #{gcn_unet2_forward.26} parent=0 // pred_region
    _
  $region37: #{gcn_unet2_forward.26} parent=0 // pred_fallthru
    _
  // Predicated region
  $region38: #{gcn_unet2_forward.26} parent=0 // pred_check
    _
  $region39: #{gcn_unet2_forward.26} parent=0 // pred_check_branch
    %200 = sbr.rel (0) target = $region41
  $region40: #{gcn_unet2_forward.26} parent=0 // pred_region
    _
  $region41: #{gcn_unet2_forward.26} parent=0 // pred_fallthru
    _

// kernel: gcn_unet2_forward.27
$region0: #{gcn_unet2_forward.27}
  #allocation0 [shape = 'u32[]', space=smem, size = 0x4, offset = 0x4, fixed_abs, tag = 'smem constant byte address 0x4 - core index']
  #allocation1 [shape = 'u32[144,128]{1,0:T(1,128)}', space=vmem, size = 0x12000, scoped, tag = 'internal scratch']
  %s0 = inlined_call_operand.vmem [shape: f32[16,1], index: 0, kind: input, shape index: {}]
  %s1 = inlined_call_operand.vmem [shape: bf16[16,16], index: 1, kind: input, shape index: {}]
  %s2 = inlined_call_operand.vmem [shape: bf16[16,128], index: 2, kind: input, shape index: {}]
  %s3 = inlined_call_operand.vmem [shape: f32[16,128], index: 3, kind: input, shape index: {}]
  %s4 = inlined_call_operand.vmem [shape: f32[128,128], index: 4, kind: input, shape index: {}]
  %s5 = inlined_call_operand.vmem [shape: f32[1,128], index: 5, kind: input, shape index: {}]
  %s6 = inlined_call_operand.vmem [shape: f32[16,128], index: 6, kind: output, shape index: {}]
  %s7 = sld [smem:[#allocation0]]
  $region42: #{gcn_unet2_forward.27} parent=0
    _
  %s9 = ssub.s32 1, %s7
  %s10 = scalar_select 0, %s9, %s7
  // Predicated region
  $region2: #{gcn_unet2_forward.27} parent=0 // pred_check
    _
  $region3: #{gcn_unet2_forward.27} parent=0 // pred_check_branch
    %12 = sbr.rel (0) target = $region5
  $region4: #{gcn_unet2_forward.27} parent=0 // pred_region
    _
  $region5: #{gcn_unet2_forward.27} parent=0 // pred_fallthru
    _
  // Predicated region
  $region6: #{gcn_unet2_forward.27} parent=0 // pred_check
    _
  $region7: #{gcn_unet2_forward.27} parent=0 // pred_check_branch
    %14 = sbr.rel (0) target = $region9
  $region8: #{gcn_unet2_forward.27} parent=0 // pred_region
    _
  $region9: #{gcn_unet2_forward.27} parent=0 // pred_fallthru
    _
  // Predicated region
  $region10: #{gcn_unet2_forward.27} parent=0 // pred_check
    _
  $region11: #{gcn_unet2_forward.27} parent=0 // pred_check_branch
    %16 = sbr.rel (0) target = $region13
  $region12: #{gcn_unet2_forward.27} parent=0 // pred_region
    _
  $region13: #{gcn_unet2_forward.27} parent=0 // pred_fallthru
    _
  // Predicated region
  $region14: #{gcn_unet2_forward.27} parent=0 // pred_check
    _
  $region15: #{gcn_unet2_forward.27} parent=0 // pred_check_branch
    %18 = sbr.rel (0) target = $region17
  $region16: #{gcn_unet2_forward.27} parent=0 // pred_region
    _
  $region17: #{gcn_unet2_forward.27} parent=0 // pred_fallthru
    _
  // Predicated region
  $region18: #{gcn_unet2_forward.27} parent=0 // pred_check
    _
  $region19: #{gcn_unet2_forward.27} parent=0 // pred_check_branch
    %20 = sbr.rel (0) target = $region21
  $region20: #{gcn_unet2_forward.27} parent=0 // pred_region
    _
  $region21: #{gcn_unet2_forward.27} parent=0 // pred_fallthru
    _
  // Predicated region
  $region22: #{gcn_unet2_forward.27} parent=0 // pred_check
    _
  $region23: #{gcn_unet2_forward.27} parent=0 // pred_check_branch
    %22 = sbr.rel (0) target = $region25
  $region24: #{gcn_unet2_forward.27} parent=0 // pred_region
    _
  $region25: #{gcn_unet2_forward.27} parent=0 // pred_fallthru
    _
  %p24 = scmp.eq.s32.totalorder 0, 0
  // Predicated region
  $region26: #{gcn_unet2_forward.27} parent=0 // pred_check
    %p25 = pneg %p24
  $region27: #{gcn_unet2_forward.27} parent=0 // pred_check_branch
    %27 = sbr.rel (%p25) target = $region29
  $region28: #{gcn_unet2_forward.27} parent=0 // pred_region
    %28 = vst [vmem:[%s6] sm:$0xff] 0.0
    %29 = vst [vmem:[%s6 + $0x8] sm:$0xff] 0.0
  $region29: #{gcn_unet2_forward.27} parent=0 // pred_fallthru
    _
  %v30 = vld [vmem:[%s6] sm:$0xff]
  %v31 = vld [vmem:[%s6 + $0x8] sm:$0xff]
  %v32 = vld [vmem:[%s1] sm:$0xf]
  %v33 = vld [vmem:[%s1 + $0x4] sm:$0xf]
  %v34 = vld [vmem:[%s2] sm:$0xf]
  %v35 = vld [vmem:[%s2 + $0x4] sm:$0xf]
  %v38 = vunpack.c.l.b16 %v32
  %v39 = vunpack.c.l.b16 %v33
  %v40 = vpack.c.b16 %v39, %v38
  %v43 = vunpack.c.l.b16 %v34
  %v44 = vunpack.c.l.b16 %v35
  %v45 = vpack.c.b16 %v44, %v43
  %vm47 = vcmask 130048
  %v49 = vsel %vm47, %v40, 0
  %51 = vmatprep.subr.bf16.mxu0 0
  %52 = vmatpush1.bf16.msra.mxu0 %v45
  %53 = vmatprep.subr.bf16.mxu0 0
  %54 = vmatpush1.bf16.msra.mxu0 0
  %55 = vmatprep.subr.bf16.mxu0 0
  %56 = vmatpush1.bf16.msra.mxu0 0
  %57 = vmatprep.subr.bf16.mxu0 0
  %58 = vmatpush1.bf16.msra.mxu0 0
  %59 = vmatprep.subr.bf16.mxu0 0
  %60 = vmatpush1.bf16.msra.mxu0 0
  %61 = vmatprep.subr.bf16.mxu0 0
  %62 = vmatpush1.bf16.msra.mxu0 0
  %63 = vmatprep.subr.bf16.mxu0 0
  %64 = vmatpush1.bf16.msra.mxu0 0
  %65 = vmatprep.subr.bf16.mxu0 0
  %66 = vmatpush1.bf16.msra.mxu0 0
  %67 = vmatprep.subr.bf16.mxu0 0
  %68 = vmatpush1.bf16.msra.mxu0 0
  %69 = vmatprep.subr.bf16.mxu0 0
  %70 = vmatpush1.bf16.msra.mxu0 0
  %71 = vmatprep.subr.bf16.mxu0 0
  %72 = vmatpush1.bf16.msra.mxu0 0
  %73 = vmatprep.subr.bf16.mxu0 0
  %74 = vmatpush1.bf16.msra.mxu0 0
  %75 = vmatprep.subr.bf16.mxu0 0
  %76 = vmatpush1.bf16.msra.mxu0 0
  %77 = vmatprep.subr.bf16.mxu0 0
  %78 = vmatpush1.bf16.msra.mxu0 0
  %79 = vmatprep.subr.bf16.mxu0 0
  %80 = vmatpush1.bf16.msra.mxu0 0
  %81 = vmatprep.subr.bf16.mxu0 0
  %82 = vmatpush1.bf16.msra.mxu0 0
  %83 = vmatprep.mubr.bf16.mxu0 0
  %84 = vmatmul.mubr.bf16.gmra.mrb[0].mxu0 %v49
  %v85 = vpop.f32.mrb[0].mxu0
  %v86 = vadd.f32 0.0, %v85
  %v87 = vpop.f32.mrb[0].mxu0
  %v88 = vpop.f32.mrb[0].mxu0
  %v89 = vadd.f32 0.0, %v88
  %v90 = vpop.f32.mrb[0].mxu0
  %91 = vdwg.mxu0
  %v92 = vadd.f32 %v30, %v86
  %v93 = vadd.f32 %v31, %v89
  %94 = vst [vmem:[%s6] sm:$0xff] %v92
  %95 = vst [vmem:[%s6 + $0x8] sm:$0xff] %v93
  // Predicated region
  $region30: #{gcn_unet2_forward.27} parent=0 // pred_check
    %p96 = pneg %p24
  $region31: #{gcn_unet2_forward.27} parent=0 // pred_check_branch
    %98 = sbr.rel (%p96) target = $region33
  $region32: #{gcn_unet2_forward.27} parent=0 // pred_region
    %v99 = vld [vmem:[%s0] sm:$0xff]
    %v100 = vld [vmem:[%s0 + $0x8] sm:$0xff]
    %v101 = vld [vmem:[%s6] sm:$0xff]
    %v102 = vld [vmem:[%s6 + $0x8] sm:$0xff]
    %v103 = vmul.f32 %v99, 2.0
    %v104 = vmul.f32 %v100, 2.0
    %v105 = vld [vmem:[%s3] sm:$0xff]
    %v106 = vld [vmem:[%s3 + $0x8] sm:$0xff]
    %108 = vset.pattern.permute.xlu0 0
    %109 = vperm.xlu0 %108, %v103
    %v110 = vpop.permute.xlu0 %109
    %113 = vset.pattern.permute.xlu0 0
    %114 = vperm.xlu0 %113, %v104
    %v115 = vpop.permute.xlu0 %114
    %v117 = vmul.f32 %v110, %v105
    %v118 = vmul.f32 %v115, %v106
    %v119 = vadd.f32 %v101, %v117
    %v120 = vadd.f32 %v102, %v118
    %122 = vset.pattern.permute.xlu0 0
    %123 = vperm.xlu0 %122, %v99
    %v124 = vpop.permute.xlu0 %123
    %127 = vset.pattern.permute.xlu0 0
    %128 = vperm.xlu0 %127, %v100
    %v129 = vpop.permute.xlu0 %128
    %v131 = vmul.f32 %v124, %v119
    %v132 = vmul.f32 %v129, %v120
    %v133 = vld [vmem:[%s4] sm:$0xff]
    %v134 = vld [vmem:[%s4 + $0x8] sm:$0xff]
    %v135 = vld [vmem:[%s4 + $0x10] sm:$0xff]
    %v136 = vld [vmem:[%s4 + $0x18] sm:$0xff]
    %v137 = vld [vmem:[%s4 + $0x20] sm:$0xff]
    %v138 = vld [vmem:[%s4 + $0x28] sm:$0xff]
    %v139 = vld [vmem:[%s4 + $0x30] sm:$0xff]
    %v140 = vld [vmem:[%s4 + $0x38] sm:$0xff]
    %v141 = vld [vmem:[%s4 + $0x40] sm:$0xff]
    %v142 = vld [vmem:[%s4 + $0x48] sm:$0xff]
    %v143 = vld [vmem:[%s4 + $0x50] sm:$0xff]
    %v144 = vld [vmem:[%s4 + $0x58] sm:$0xff]
    %v145 = vld [vmem:[%s4 + $0x60] sm:$0xff]
    %v146 = vld [vmem:[%s4 + $0x68] sm:$0xff]
    %v147 = vld [vmem:[%s4 + $0x70] sm:$0xff]
    %v148 = vld [vmem:[%s4 + $0x78] sm:$0xff]
    %v149 = vld [vmem:[%s5] sm:$0x1]
    %v151 = vlaneseq
    %v152 = vshrl.u32 %v151, 7
    %v153 = vsub.s32 0, %v152
    %v154 = vrot.slane %v149, %v153
    %156 = vmatprep.subr.mxu0 0.0
    %157 = vmatpush1.msra.mxu0 %v133
    %158 = vmatprep.subr.mxu0 0.0
    %159 = vmatpush1.msra.mxu0 %v134
    %160 = vmatprep.subr.mxu0 0.0
    %161 = vmatpush1.msra.mxu0 %v135
    %162 = vmatprep.subr.mxu0 0.0
    %163 = vmatpush1.msra.mxu0 %v136
    %164 = vmatprep.subr.mxu0 0.0
    %165 = vmatpush1.msra.mxu0 %v137
    %166 = vmatprep.subr.mxu0 0.0
    %167 = vmatpush1.msra.mxu0 %v138
    %168 = vmatprep.subr.mxu0 0.0
    %169 = vmatpush1.msra.mxu0 %v139
    %170 = vmatprep.subr.mxu0 0.0
    %171 = vmatpush1.msra.mxu0 %v140
    %172 = vmatprep.subr.mxu0 0.0
    %173 = vmatpush1.msra.mxu0 %v141
    %174 = vmatprep.subr.mxu0 0.0
    %175 = vmatpush1.msra.mxu0 %v142
    %176 = vmatprep.subr.mxu0 0.0
    %177 = vmatpush1.msra.mxu0 %v143
    %178 = vmatprep.subr.mxu0 0.0
    %179 = vmatpush1.msra.mxu0 %v144
    %180 = vmatprep.subr.mxu0 0.0
    %181 = vmatpush1.msra.mxu0 %v145
    %182 = vmatprep.subr.mxu0 0.0
    %183 = vmatpush1.msra.mxu0 %v146
    %184 = vmatprep.subr.mxu0 0.0
    %185 = vmatpush1.msra.mxu0 %v147
    %186 = vmatprep.subr.mxu0 0.0
    %187 = vmatpush1.msra.mxu0 %v148
    %188 = vmatprep.subr.mxu0 0.0
    %189 = vmatpush1.msra.mxu0 0.0
    %190 = vmatprep.subr.mxu0 0.0
    %191 = vmatpush1.msra.mxu0 0.0
    %192 = vmatprep.subr.mxu0 0.0
    %193 = vmatpush1.msra.mxu0 0.0
    %194 = vmatprep.subr.mxu0 0.0
    %195 = vmatpush1.msra.mxu0 0.0
    %196 = vmatprep.subr.mxu0 0.0
    %197 = vmatpush1.msra.mxu0 0.0
    %198 = vmatprep.subr.mxu0 0.0
    %199 = vmatpush1.msra.mxu0 0.0
    %200 = vmatprep.subr.mxu0 0.0
    %201 = vmatpush1.msra.mxu0 0.0
    %202 = vmatprep.subr.mxu0 0.0
    %203 = vmatpush1.msra.mxu0 0.0
    %204 = vmatprep.subr.mxu0 0.0
    %205 = vmatpush1.msra.mxu0 0.0
    %206 = vmatprep.subr.mxu0 0.0
    %207 = vmatpush1.msra.mxu0 0.0
    %208 = vmatprep.subr.mxu0 0.0
    %209 = vmatpush1.msra.mxu0 0.0
    %210 = vmatprep.subr.mxu0 0.0
    %211 = vmatpush1.msra.mxu0 0.0
    %212 = vmatprep.subr.mxu0 0.0
    %213 = vmatpush1.msra.mxu0 0.0
    %214 = vmatprep.subr.mxu0 0.0
    %215 = vmatpush1.msra.mxu0 0.0
    %216 = vmatprep.subr.mxu0 0.0
    %217 = vmatpush1.msra.mxu0 0.0
    %218 = vmatprep.subr.mxu0 0.0
    %219 = vmatpush1.msra.mxu0 0.0
    %220 = vmatprep.mubr.f32.mxu0 0.0
    %221 = vmatmul.mubr.f32.gmra.mrb[0].mxu0 %v131
    %v222 = vpop.f32.mrb[0].mxu0
    %v223 = vadd.f32 %v154, %v222
    %v224 = vpop.f32.mrb[0].mxu0
    %225 = vmatprep.mubr.f32.mxu0 0.0
    %226 = vmatmul.mubr.f32.gmra.mrb[0].mxu0 %v132
    %v227 = vpop.f32.mrb[0].mxu0
    %v228 = vadd.f32 %v154, %v227
    %v229 = vpop.f32.mrb[0].mxu0
    %230 = vdwg.mxu0
    %231 = vst [vmem:[%s6] sm:$0xff] %v223
    %232 = vst [vmem:[%s6 + $0x8] sm:$0xff] %v228
  $region33: #{gcn_unet2_forward.27} parent=0 // pred_fallthru
    _
  // Predicated region
  $region34: #{gcn_unet2_forward.27} parent=0 // pred_check
    _
  $region35: #{gcn_unet2_forward.27} parent=0 // pred_check_branch
    %234 = sbr.rel (0) target = $region37
  $region36: #{gcn_unet2_forward.27} parent=0 // pred_region
    _
  $region37: #{gcn_unet2_forward.27} parent=0 // pred_fallthru
    _
  // Predicated region
  $region38: #{gcn_unet2_forward.27} parent=0 // pred_check
    _
  $region39: #{gcn_unet2_forward.27} parent=0 // pred_check_branch
    %236 = sbr.rel (0) target = $region41
  $region40: #{gcn_unet2_forward.27} parent=0 // pred_region
    _
  $region41: #{gcn_unet2_forward.27} parent=0 // pred_fallthru
    _

</llo_original>
